<compile_context>
chip_gen: v6e
topology: v6e:2x2x1
jax: 0.10.0
libtpu: 0.0.40
codegen_flags: <defaults>
</compile_context>

<pallas_src>
import jax
import jax.numpy as jnp
from jax import lax
from jax.experimental import pallas as pl
from jax.experimental.pallas import tpu as pltpu

NEG_SLOPE = 0.01   # nn.LeakyReLU default
BN_EPS = 1e-5      # nn.BatchNorm2d default


def _leaky_relu(v):
    return jnp.where(v > 0, v, NEG_SLOPE * v)


# --------------------------------------------------------------------------- #
# Host-side helpers (run under jit in the wrapper, outside the kernels)
# --------------------------------------------------------------------------- #
def _tap_masks(H, W, dil):
    """(9, H*W) f32 0/1 masks.  mask[k, h*W+w] == 1 iff the source pixel of
    3x3 tap k, (kh, kw) = divmod(k, 3), at dilation `dil` lies inside the
    image (i.e. the zero-padding region contributes nothing)."""
    hh = jnp.arange(H, dtype=jnp.int32)[:, None]
    ww = jnp.arange(W, dtype=jnp.int32)[None, :]
    rows = []
    for k in range(9):
        kh, kw = divmod(k, 3)
        dh, dw = dil * (kh - 1), dil * (kw - 1)
        m = ((hh + dh >= 0) & (hh + dh < H) & (ww + dw >= 0) & (ww + dw < W))
        rows.append(m.reshape(1, H * W))
    return jnp.concatenate(rows, axis=0).astype(jnp.float32)


def _lane_tile(N, max_tile=16384):
    """Largest multiple-of-128 tile that divides N (capped); N itself when N
    is not a multiple of 128 (block then spans the full lane extent)."""
    if N % 128 != 0:
        return N
    t = max(128, min(max_tile, (N // 2 // 128) * 128))
    while t >= 128:
        if N % t == 0:
            return t
        t -= 128
    return N


def _vmem_limit_bytes():
    cap = 128 * 1024 * 1024
    try:
        cap = int(getattr(pltpu.get_tpu_info(), "vmem_capacity_bytes", cap))
    except Exception:
        pass
    return min((cap * 3) // 4, 100 * 1024 * 1024)


# --------------------------------------------------------------------------- #
# In-kernel building blocks
# --------------------------------------------------------------------------- #
def _conv3x3_taps(x, w_ref, b_ref, mask_ref, out_shape, W, dil):
    """3x3 conv (padding = dil, dilation = dil) on a flattened (C, N) image as
    9 accumulating bf16 MXU matmuls over roll+mask shifted views."""
    N = x.shape[1]
    acc = jnp.zeros(out_shape, jnp.float32)
    for k in range(9):                                   # static unroll, 9 taps
        kh, kw = divmod(k, 3)
        d = dil * ((kh - 1) * W + (kw - 1))              # flat source offset
        # shifted[:, n] == x[:, n + d]  (circular; wraps are masked to zero)
        xs = x if d == 0 else pltpu.roll(x, shift=(-d) % N, axis=1)
        tap = (xs * mask_ref[k:k + 1, :]).astype(jnp.bfloat16)
        acc = acc + jnp.dot(w_ref[k, :, :], tap,
                            preferred_element_type=jnp.float32)
    return acc + b_ref[...]


def _bn_partials(y):
    """Per-channel (sum, sum_sq) in a single (C, 2) store.
    Note: variance is later formed as E[x^2]-E[x]^2; fine at these sizes, a
    Welford-style merge would be safer at very large B*H*W."""
    return jnp.concatenate([jnp.sum(y, axis=1, keepdims=True),
                            jnp.sum(y * y, axis=1, keepdims=True)], axis=1)


# --------------------------------------------------------------------------- #
# Pass 1: conv1 (1x1) + conv2 (3x3 pad=1) + bn1 partial statistics
# --------------------------------------------------------------------------- #
def _make_conv12_kernel(W):
    def kernel(x_ref, w1_ref, b1_ref, w2_ref, b2_ref, m1_ref,
               sc_ref, resA_ref, stats_ref):
        # conv1 (1x1) == channel matmul; spatial N stays on the lane axis.
        sc = jnp.dot(w1_ref[...], x_ref[...].astype(jnp.bfloat16),
                     preferred_element_type=jnp.float32) + b1_ref[...]
        sc = _leaky_relu(sc)                              # (Cout, N) f32
        sc_ref[...] = sc                                  # lane-dense store

        # conv2 (3x3, pad=1): roll+mask taps, no im2col / pad scratch.
        rA = _leaky_relu(
            _conv3x3_taps(sc, w2_ref, b2_ref, m1_ref, resA_ref.shape, W, 1))
        resA_ref[...] = rA
        stats_ref[...] = _bn_partials(rA)                 # one store
    return kernel


# --------------------------------------------------------------------------- #
# Pass 2: bn1 (folded affine) + conv3 (3x3, dil=2, pad=2) + bn2 partial stats
# --------------------------------------------------------------------------- #
def _make_conv3_kernel(W):
    def kernel(rA_ref, scale_ref, shift_ref, w3_ref, b3_ref, m2_ref,
               resB_ref, stats_ref):
        # bn1 as a per-channel affine precomputed between pallas_calls.
        a1 = rA_ref[...] * scale_ref[...] + shift_ref[...]
        rB = _leaky_relu(
            _conv3x3_taps(a1, w3_ref, b3_ref, m2_ref, resB_ref.shape, W, 2))
        resB_ref[...] = rB
        stats_ref[...] = _bn_partials(rB)
    return kernel


# --------------------------------------------------------------------------- #
# Pass 3: bn2 (folded affine) + residual add (lane-tiled, aliased output)
# --------------------------------------------------------------------------- #
def _bn2_residual_kernel(sc_ref, rB_ref, scale_ref, shift_ref, out_ref):
    out_ref[...] = sc_ref[...] + rB_ref[...] * scale_ref[...] + shift_ref[...]


# --------------------------------------------------------------------------- #
# Wrapper
# --------------------------------------------------------------------------- #
def res_context_block(x_nchw, p):
    """x_nchw: (B, Cin, H, W) float32 -> (B, Cout, H, W) float32 (NCHW in/out)."""
    B, Cin, H, W = x_nchw.shape
    Cout = p["w1"].shape[0]
    N = H * W
    f32, bf16 = jnp.float32, jnp.bfloat16

    # Lane-dense layout: spatial flattened onto the 128-lane axis (free reshape).
    x = x_nchw.astype(f32).reshape(B, Cin, N)

    # Per-tap conv weights (9, Cout, Cin); bf16 MXU operands.
    w1 = p["w1"][:, :, 0, 0].astype(bf16)                                   # (Cout, Cin)
    w2 = jnp.transpose(p["w2"], (2, 3, 0, 1)).reshape(9, Cout, Cout).astype(bf16)
    w3 = jnp.transpose(p["w3"], (2, 3, 0, 1)).reshape(9, Cout, Cout).astype(bf16)
    b1 = p["b1"].reshape(Cout, 1).astype(f32)
    b2 = p["b2"].reshape(Cout, 1).astype(f32)
    b3 = p["b3"].reshape(Cout, 1).astype(f32)
    m1 = _tap_masks(H, W, 1)                                                # (9, N)
    m2 = _tap_masks(H, W, 2)                                                # (9, N)

    vlim = _vmem_limit_bytes()
    cp_b = pltpu.CompilerParams(dimension_semantics=("parallel",),
                                vmem_limit_bytes=vlim)
    cp_bt = pltpu.CompilerParams(dimension_semantics=("parallel", "parallel"),
                                 vmem_limit_bytes=vlim)

    def img_spec(C):                      # one image, full lane extent
        return pl.BlockSpec((None, C, N), lambda b: (b, 0, 0))

    def const_spec(shape):                # weights / biases / masks (untiled)
        nd = len(shape)
        return pl.BlockSpec(shape, lambda b: (0,) * nd)

    stats_spec = pl.BlockSpec((None, Cout, 2), lambda b: (b, 0, 0))
    act_shape = jax.ShapeDtypeStruct((B, Cout, N), f32)
    stats_shape = jax.ShapeDtypeStruct((B, Cout, 2), f32)

    # ---- pass 1: conv1 + conv2 + bn1 partial stats --------------------------
    shortcut, resA, stats1 = pl.pallas_call(
        _make_conv12_kernel(W),
        grid=(B,),
        in_specs=[img_spec(Cin), const_spec((Cout, Cin)), const_spec((Cout, 1)),
                  const_spec((9, Cout, Cout)), const_spec((Cout, 1)),
                  const_spec((9, N))],
        out_specs=(img_spec(Cout), img_spec(Cout), stats_spec),
        out_shape=(act_shape, act_shape, stats_shape),
        compiler_params=cp_b,
    )(x, w1, b1, w2, b2, m1)

    # bn1: reduce per-image partials, fold into a per-channel affine (tiny XLA).
    n_total = B * N
    mean1 = jnp.sum(stats1[:, :, 0], axis=0) / n_total
    var1 = jnp.sum(stats1[:, :, 1], axis=0) / n_total - mean1 * mean1
    inv1 = lax.rsqrt(var1 + BN_EPS)
    scale1 = (p["g1"] * inv1).reshape(Cout, 1).astype(f32)
    shift1 = (p["be1"] - mean1 * p["g1"] * inv1).reshape(Cout, 1).astype(f32)

    # ---- pass 2: bn1 affine + conv3 + bn2 partial stats ----------------------
    resB, stats2 = pl.pallas_call(
        _make_conv3_kernel(W),
        grid=(B,),
        in_specs=[img_spec(Cout), const_spec((Cout, 1)), const_spec((Cout, 1)),
                  const_spec((9, Cout, Cout)), const_spec((Cout, 1)),
                  const_spec((9, N))],
        out_specs=(img_spec(Cout), stats_spec),
        out_shape=(act_shape, stats_shape),
        compiler_params=cp_b,
    )(resA, scale1, shift1, w3, b3, m2)

    mean2 = jnp.sum(stats2[:, :, 0], axis=0) / n_total
    var2 = jnp.sum(stats2[:, :, 1], axis=0) / n_total - mean2 * mean2
    inv2 = lax.rsqrt(var2 + BN_EPS)
    scale2 = (p["g2"] * inv2).reshape(Cout, 1).astype(f32)
    shift2 = (p["be2"] - mean2 * p["g2"] * inv2).reshape(Cout, 1).astype(f32)

    # ---- pass 3: bn2 affine + residual (lane-tiled, shortcut aliased to out) -
    TN = _lane_tile(N)
    nt = N // TN
    tile_spec = pl.BlockSpec((None, Cout, TN), lambda b, t: (b, 0, t))
    chan_spec = pl.BlockSpec((Cout, 1), lambda b, t: (0, 0))
    out = pl.pallas_call(
        _bn2_residual_kernel,
        grid=(B, nt),
        in_specs=[tile_spec, tile_spec, chan_spec, chan_spec],
        out_specs=tile_spec,
        out_shape=act_shape,
        input_output_aliases={0: 0},          # shortcut buffer reused for out
        compiler_params=cp_bt,
    )(shortcut, resB, scale2, shift2)

    return out.reshape(B, Cout, H, W)


# --------------------------------------------------------------------------- #
# Pure-JAX reference (NCHW), mirrors the PyTorch forward in training mode.
# --------------------------------------------------------------------------- #
def ref_forward(x, p):
    dn = ("NCHW", "OIHW", "NCHW")

    def conv(v, w, b, padding, dil):
        y = lax.conv_general_dilated(v, w, (1, 1), padding, rhs_dilation=dil,
                                     dimension_numbers=dn)
        return y + b[None, :, None, None]

    def bn(v, g, beta):
        mu = v.mean(axis=(0, 2, 3), keepdims=True)
        var = ((v - mu) ** 2).mean(axis=(0, 2, 3), keepdims=True)
        return (v - mu) / jnp.sqrt(var + BN_EPS) * g[None, :, None, None] \
            + beta[None, :, None, None]

    lr = _leaky_relu
    sc = lr(conv(x, p["w1"], p["b1"], [(0, 0), (0, 0)], (1, 1)))
    r = lr(conv(sc, p["w2"], p["b2"], [(1, 1), (1, 1)], (1, 1)))
    r1 = bn(r, p["g1"], p["be1"])
    r = lr(conv(r1, p["w3"], p["b3"], [(2, 2), (2, 2)], (2, 2)))
    r2 = bn(r, p["g2"], p["be2"])
    return sc + r2


def make_params(key, in_filters, out_filters):
    ks = jax.random.split(key, 12)

    def u(k, shape, scale):
        return jax.random.uniform(k, shape, jnp.float32, -scale, scale)

    return {
        "w1": u(ks[0], (out_filters, in_filters, 1, 1), 1.0 / (in_filters ** 0.5)),
        "b1": u(ks[1], (out_filters,), 1.0 / (in_filters ** 0.5)),
        "w2": u(ks[2], (out_filters, out_filters, 3, 3), 1.0 / ((9 * out_filters) ** 0.5)),
        "b2": u(ks[3], (out_filters,), 1.0 / ((9 * out_filters) ** 0.5)),
        "w3": u(ks[4], (out_filters, out_filters, 3, 3), 1.0 / ((9 * out_filters) ** 0.5)),
        "b3": u(ks[5], (out_filters,), 1.0 / ((9 * out_filters) ** 0.5)),
        "g1": 1.0 + 0.1 * jax.random.normal(ks[6], (out_filters,), jnp.float32),
        "be1": 0.1 * jax.random.normal(ks[7], (out_filters,), jnp.float32),
        "g2": 1.0 + 0.1 * jax.random.normal(ks[8], (out_filters,), jnp.float32),
        "be2": 0.1 * jax.random.normal(ks[9], (out_filters,), jnp.float32),
    }


if __name__ == "__main__":
    B, IN_F, OUT_F, H, W = 2, 4, 8, 16, 16
    key = jax.random.PRNGKey(0)
    kx, kp = jax.random.split(key)
    x = jax.random.normal(kx, (B, IN_F, H, W), jnp.float32)   # NCHW like PyTorch
    params = make_params(kp, IN_F, OUT_F)

    out = jax.jit(res_context_block)(x, params)
    out = jax.block_until_ready(out)

    ref = ref_forward(x, params)
    assert out.shape == (B, OUT_F, H, W)
    # Tolerance accommodates bf16 MXU operands (matches default-precision dot).
    err = float(jnp.max(jnp.abs(out - ref)))
    assert jnp.allclose(out, ref, rtol=5e-2, atol=5e-2), err

    print("KERNEL_OK")
</pallas_src>

<mosaic_0001>
module attributes {stable_mosaic.version = 11 : i64} {
  func.func @kernel(%arg0: i32, %arg1: memref<1x4x256xf32, #tpu.memory_space<vmem>>, %arg2: memref<8x4xbf16, #tpu.memory_space<vmem>>, %arg3: memref<8x1xf32, #tpu.memory_space<vmem>>, %arg4: memref<9x8x8xbf16, #tpu.memory_space<vmem>>, %arg5: memref<8x1xf32, #tpu.memory_space<vmem>>, %arg6: memref<9x256xf32, #tpu.memory_space<vmem>>, %arg7: memref<1x8x256xf32, #tpu.memory_space<vmem>>, %arg8: memref<1x8x256xf32, #tpu.memory_space<vmem>>, %arg9: memref<1x8x2xf32, #tpu.memory_space<vmem>>) attributes {dimension_semantics = [#tpu.dimension_semantics<parallel>], iteration_bounds = array<i64: 2>, scalar_prefetch = 0 : i64, scratch_operands = 0 : i64, tpu.core_type = #tpu.core_type<tc>, window_params = [{transform_indices = @transform_0, window_bounds = array<i64: 1, 4, 256>}, {pipeline_mode = #tpu.pipeline_mode<synchronous>, transform_indices = @transform_1, window_bounds = array<i64: 8, 4>}, {pipeline_mode = #tpu.pipeline_mode<synchronous>, transform_indices = @transform_2, window_bounds = array<i64: 8, 1>}, {pipeline_mode = #tpu.pipeline_mode<synchronous>, transform_indices = @transform_3, window_bounds = array<i64: 9, 8, 8>}, {pipeline_mode = #tpu.pipeline_mode<synchronous>, transform_indices = @transform_4, window_bounds = array<i64: 8, 1>}, {pipeline_mode = #tpu.pipeline_mode<synchronous>, transform_indices = @transform_5, window_bounds = array<i64: 9, 256>}, {transform_indices = @transform_6, window_bounds = array<i64: 1, 8, 256>}, {transform_indices = @transform_7, window_bounds = array<i64: 1, 8, 256>}, {transform_indices = @transform_8, window_bounds = array<i64: 1, 8, 2>}]} {
    %c0 = arith.constant 0 : index
    %c0_0 = arith.constant 0 : index
    %0 = vector.load %arg2[%c0, %c0_0] : memref<8x4xbf16, #tpu.memory_space<vmem>>, vector<8x4xbf16>
    %c0_1 = arith.constant 0 : index
    %c0_2 = arith.constant 0 : index
    %c0_3 = arith.constant 0 : index
    %1 = vector.load %arg1[%c0_1, %c0_2, %c0_3] : memref<1x4x256xf32, #tpu.memory_space<vmem>>, vector<1x4x256xf32>
    %2 = vector.shape_cast %1 : vector<1x4x256xf32> to vector<4x256xf32>
    %3 = arith.truncf %2 : vector<4x256xf32> to vector<4x256xbf16>
    %cst = arith.constant dense<0.000000e+00> : vector<8x256xf32>
    %4 = tpu.matmul %0, %3, %cst {dimension_numbers = #tpu.dot_dimension_numbers<[1], [0], [0], [1], [0, 0, 1, 1], [], []>} : vector<8x4xbf16>, vector<4x256xbf16>, vector<8x256xf32> -> vector<8x256xf32>
    %c0_4 = arith.constant 0 : index
    %c0_5 = arith.constant 0 : index
    %5 = vector.load %arg3[%c0_4, %c0_5] : memref<8x1xf32, #tpu.memory_space<vmem>>, vector<8x1xf32>
    %6 = vector.broadcast %5 : vector<8x1xf32> to vector<8x256xf32>
    %7 = arith.addf %4, %6 : vector<8x256xf32>
    %cst_6 = arith.constant 0.000000e+00 : f32
    %8 = vector.broadcast %cst_6 : f32 to vector<8x256xf32>
    %9 = arith.cmpf ogt, %7, %8 : vector<8x256xf32>
    %cst_7 = arith.constant 0.00999999977 : f32
    %10 = vector.broadcast %cst_7 : f32 to vector<8x256xf32>
    %11 = arith.mulf %10, %7 : vector<8x256xf32>
    %12 = arith.select %9, %7, %11 : vector<8x256xi1>, vector<8x256xf32>
    %c0_8 = arith.constant 0 : index
    %c0_9 = arith.constant 0 : index
    %c0_10 = arith.constant 0 : index
    %13 = vector.load %arg7[%c0_8, %c0_9, %c0_10] : memref<1x8x256xf32, #tpu.memory_space<vmem>>, vector<1x8x256xf32>
    %14 = vector.shape_cast %13 : vector<1x8x256xf32> to vector<8x256xf32>
    %15 = vector.shape_cast %12 : vector<8x256xf32> to vector<1x8x256xf32>
    tpu.vector_store %arg7[%c0_8, %c0_9, %c0_10], %15 {strides = array<i32>} : memref<1x8x256xf32, #tpu.memory_space<vmem>>, vector<1x8x256xf32>,
    %cst_11 = arith.constant 0.000000e+00 : f32
    %16 = vector.broadcast %cst_11 : f32 to vector<8x256xf32>
    %c17_i32 = arith.constant 17 : i32
    %17 = tpu.dynamic_rotate %12 by %c17_i32 dim 1 : vector<8x256xf32>, i32 -> vector<8x256xf32>
    %c0_12 = arith.constant 0 : index
    %c0_13 = arith.constant 0 : index
    %18 = vector.load %arg6[%c0_12, %c0_13] : memref<9x256xf32, #tpu.memory_space<vmem>>, vector<1x256xf32>
    %19 = vector.broadcast %18 : vector<1x256xf32> to vector<8x256xf32>
    %20 = arith.mulf %17, %19 : vector<8x256xf32>
    %21 = arith.truncf %20 : vector<8x256xf32> to vector<8x256xbf16>
    %c0_14 = arith.constant 0 : index
    %c0_15 = arith.constant 0 : index
    %c0_16 = arith.constant 0 : index
    %22 = vector.load %arg4[%c0_14, %c0_15, %c0_16] : memref<9x8x8xbf16, #tpu.memory_space<vmem>>, vector<1x8x8xbf16>
    %23 = vector.shape_cast %22 : vector<1x8x8xbf16> to vector<8x8xbf16>
    %cst_17 = arith.constant dense<0.000000e+00> : vector<8x256xf32>
    %24 = tpu.matmul %23, %21, %cst_17 {dimension_numbers = #tpu.dot_dimension_numbers<[1], [0], [0], [1], [0, 0, 1, 1], [], []>} : vector<8x8xbf16>, vector<8x256xbf16>, vector<8x256xf32> -> vector<8x256xf32>
    %25 = arith.addf %16, %24 : vector<8x256xf32>
    %c16_i32 = arith.constant 16 : i32
    %26 = tpu.dynamic_rotate %12 by %c16_i32 dim 1 : vector<8x256xf32>, i32 -> vector<8x256xf32>
    %c1 = arith.constant 1 : index
    %c0_18 = arith.constant 0 : index
    %27 = vector.load %arg6[%c1, %c0_18] : memref<9x256xf32, #tpu.memory_space<vmem>>, vector<1x256xf32>
    %28 = vector.broadcast %27 : vector<1x256xf32> to vector<8x256xf32>
    %29 = arith.mulf %26, %28 : vector<8x256xf32>
    %30 = arith.truncf %29 : vector<8x256xf32> to vector<8x256xbf16>
    %c1_19 = arith.constant 1 : index
    %c0_20 = arith.constant 0 : index
    %c0_21 = arith.constant 0 : index
    %31 = vector.load %arg4[%c1_19, %c0_20, %c0_21] : memref<9x8x8xbf16, #tpu.memory_space<vmem>>, vector<1x8x8xbf16>
    %32 = vector.shape_cast %31 : vector<1x8x8xbf16> to vector<8x8xbf16>
    %cst_22 = arith.constant dense<0.000000e+00> : vector<8x256xf32>
    %33 = tpu.matmul %32, %30, %cst_22 {dimension_numbers = #tpu.dot_dimension_numbers<[1], [0], [0], [1], [0, 0, 1, 1], [], []>} : vector<8x8xbf16>, vector<8x256xbf16>, vector<8x256xf32> -> vector<8x256xf32>
    %34 = arith.addf %25, %33 : vector<8x256xf32>
    %c15_i32 = arith.constant 15 : i32
    %35 = tpu.dynamic_rotate %12 by %c15_i32 dim 1 : vector<8x256xf32>, i32 -> vector<8x256xf32>
    %c2 = arith.constant 2 : index
    %c0_23 = arith.constant 0 : index
    %36 = vector.load %arg6[%c2, %c0_23] : memref<9x256xf32, #tpu.memory_space<vmem>>, vector<1x256xf32>
    %37 = vector.broadcast %36 : vector<1x256xf32> to vector<8x256xf32>
    %38 = arith.mulf %35, %37 : vector<8x256xf32>
    %39 = arith.truncf %38 : vector<8x256xf32> to vector<8x256xbf16>
    %c2_24 = arith.constant 2 : index
    %c0_25 = arith.constant 0 : index
    %c0_26 = arith.constant 0 : index
    %40 = vector.load %arg4[%c2_24, %c0_25, %c0_26] : memref<9x8x8xbf16, #tpu.memory_space<vmem>>, vector<1x8x8xbf16>
    %41 = vector.shape_cast %40 : vector<1x8x8xbf16> to vector<8x8xbf16>
    %cst_27 = arith.constant dense<0.000000e+00> : vector<8x256xf32>
    %42 = tpu.matmul %41, %39, %cst_27 {dimension_numbers = #tpu.dot_dimension_numbers<[1], [0], [0], [1], [0, 0, 1, 1], [], []>} : vector<8x8xbf16>, vector<8x256xbf16>, vector<8x256xf32> -> vector<8x256xf32>
    %43 = arith.addf %34, %42 : vector<8x256xf32>
    %c1_i32 = arith.constant 1 : i32
    %44 = tpu.dynamic_rotate %12 by %c1_i32 dim 1 : vector<8x256xf32>, i32 -> vector<8x256xf32>
    %c3 = arith.constant 3 : index
    %c0_28 = arith.constant 0 : index
    %45 = vector.load %arg6[%c3, %c0_28] : memref<9x256xf32, #tpu.memory_space<vmem>>, vector<1x256xf32>
    %46 = vector.broadcast %45 : vector<1x256xf32> to vector<8x256xf32>
    %47 = arith.mulf %44, %46 : vector<8x256xf32>
    %48 = arith.truncf %47 : vector<8x256xf32> to vector<8x256xbf16>
    %c3_29 = arith.constant 3 : index
    %c0_30 = arith.constant 0 : index
    %c0_31 = arith.constant 0 : index
    %49 = vector.load %arg4[%c3_29, %c0_30, %c0_31] : memref<9x8x8xbf16, #tpu.memory_space<vmem>>, vector<1x8x8xbf16>
    %50 = vector.shape_cast %49 : vector<1x8x8xbf16> to vector<8x8xbf16>
    %cst_32 = arith.constant dense<0.000000e+00> : vector<8x256xf32>
    %51 = tpu.matmul %50, %48, %cst_32 {dimension_numbers = #tpu.dot_dimension_numbers<[1], [0], [0], [1], [0, 0, 1, 1], [], []>} : vector<8x8xbf16>, vector<8x256xbf16>, vector<8x256xf32> -> vector<8x256xf32>
    %52 = arith.addf %43, %51 : vector<8x256xf32>
    %c4 = arith.constant 4 : index
    %c0_33 = arith.constant 0 : index
    %53 = vector.load %arg6[%c4, %c0_33] : memref<9x256xf32, #tpu.memory_space<vmem>>, vector<1x256xf32>
    %54 = vector.broadcast %53 : vector<1x256xf32> to vector<8x256xf32>
    %55 = arith.mulf %12, %54 : vector<8x256xf32>
    %56 = arith.truncf %55 : vector<8x256xf32> to vector<8x256xbf16>
    %c4_34 = arith.constant 4 : index
    %c0_35 = arith.constant 0 : index
    %c0_36 = arith.constant 0 : index
    %57 = vector.load %arg4[%c4_34, %c0_35, %c0_36] : memref<9x8x8xbf16, #tpu.memory_space<vmem>>, vector<1x8x8xbf16>
    %58 = vector.shape_cast %57 : vector<1x8x8xbf16> to vector<8x8xbf16>
    %cst_37 = arith.constant dense<0.000000e+00> : vector<8x256xf32>
    %59 = tpu.matmul %58, %56, %cst_37 {dimension_numbers = #tpu.dot_dimension_numbers<[1], [0], [0], [1], [0, 0, 1, 1], [], []>} : vector<8x8xbf16>, vector<8x256xbf16>, vector<8x256xf32> -> vector<8x256xf32>
    %60 = arith.addf %52, %59 : vector<8x256xf32>
    %c255_i32 = arith.constant 255 : i32
    %61 = tpu.dynamic_rotate %12 by %c255_i32 dim 1 : vector<8x256xf32>, i32 -> vector<8x256xf32>
    %c5 = arith.constant 5 : index
    %c0_38 = arith.constant 0 : index
    %62 = vector.load %arg6[%c5, %c0_38] : memref<9x256xf32, #tpu.memory_space<vmem>>, vector<1x256xf32>
    %63 = vector.broadcast %62 : vector<1x256xf32> to vector<8x256xf32>
    %64 = arith.mulf %61, %63 : vector<8x256xf32>
    %65 = arith.truncf %64 : vector<8x256xf32> to vector<8x256xbf16>
    %c5_39 = arith.constant 5 : index
    %c0_40 = arith.constant 0 : index
    %c0_41 = arith.constant 0 : index
    %66 = vector.load %arg4[%c5_39, %c0_40, %c0_41] : memref<9x8x8xbf16, #tpu.memory_space<vmem>>, vector<1x8x8xbf16>
    %67 = vector.shape_cast %66 : vector<1x8x8xbf16> to vector<8x8xbf16>
    %cst_42 = arith.constant dense<0.000000e+00> : vector<8x256xf32>
    %68 = tpu.matmul %67, %65, %cst_42 {dimension_numbers = #tpu.dot_dimension_numbers<[1], [0], [0], [1], [0, 0, 1, 1], [], []>} : vector<8x8xbf16>, vector<8x256xbf16>, vector<8x256xf32> -> vector<8x256xf32>
    %69 = arith.addf %60, %68 : vector<8x256xf32>
    %c241_i32 = arith.constant 241 : i32
    %70 = tpu.dynamic_rotate %12 by %c241_i32 dim 1 : vector<8x256xf32>, i32 -> vector<8x256xf32>
    %c6 = arith.constant 6 : index
    %c0_43 = arith.constant 0 : index
    %71 = vector.load %arg6[%c6, %c0_43] : memref<9x256xf32, #tpu.memory_space<vmem>>, vector<1x256xf32>
    %72 = vector.broadcast %71 : vector<1x256xf32> to vector<8x256xf32>
    %73 = arith.mulf %70, %72 : vector<8x256xf32>
    %74 = arith.truncf %73 : vector<8x256xf32> to vector<8x256xbf16>
    %c6_44 = arith.constant 6 : index
    %c0_45 = arith.constant 0 : index
    %c0_46 = arith.constant 0 : index
    %75 = vector.load %arg4[%c6_44, %c0_45, %c0_46] : memref<9x8x8xbf16, #tpu.memory_space<vmem>>, vector<1x8x8xbf16>
    %76 = vector.shape_cast %75 : vector<1x8x8xbf16> to vector<8x8xbf16>
    %cst_47 = arith.constant dense<0.000000e+00> : vector<8x256xf32>
    %77 = tpu.matmul %76, %74, %cst_47 {dimension_numbers = #tpu.dot_dimension_numbers<[1], [0], [0], [1], [0, 0, 1, 1], [], []>} : vector<8x8xbf16>, vector<8x256xbf16>, vector<8x256xf32> -> vector<8x256xf32>
    %78 = arith.addf %69, %77 : vector<8x256xf32>
    %c240_i32 = arith.constant 240 : i32
    %79 = tpu.dynamic_rotate %12 by %c240_i32 dim 1 : vector<8x256xf32>, i32 -> vector<8x256xf32>
    %c7 = arith.constant 7 : index
    %c0_48 = arith.constant 0 : index
    %80 = vector.load %arg6[%c7, %c0_48] : memref<9x256xf32, #tpu.memory_space<vmem>>, vector<1x256xf32>
    %81 = vector.broadcast %80 : vector<1x256xf32> to vector<8x256xf32>
    %82 = arith.mulf %79, %81 : vector<8x256xf32>
    %83 = arith.truncf %82 : vector<8x256xf32> to vector<8x256xbf16>
    %c7_49 = arith.constant 7 : index
    %c0_50 = arith.constant 0 : index
    %c0_51 = arith.constant 0 : index
    %84 = vector.load %arg4[%c7_49, %c0_50, %c0_51] : memref<9x8x8xbf16, #tpu.memory_space<vmem>>, vector<1x8x8xbf16>
    %85 = vector.shape_cast %84 : vector<1x8x8xbf16> to vector<8x8xbf16>
    %cst_52 = arith.constant dense<0.000000e+00> : vector<8x256xf32>
    %86 = tpu.matmul %85, %83, %cst_52 {dimension_numbers = #tpu.dot_dimension_numbers<[1], [0], [0], [1], [0, 0, 1, 1], [], []>} : vector<8x8xbf16>, vector<8x256xbf16>, vector<8x256xf32> -> vector<8x256xf32>
    %87 = arith.addf %78, %86 : vector<8x256xf32>
    %c239_i32 = arith.constant 239 : i32
    %88 = tpu.dynamic_rotate %12 by %c239_i32 dim 1 : vector<8x256xf32>, i32 -> vector<8x256xf32>
    %c8 = arith.constant 8 : index
    %c0_53 = arith.constant 0 : index
    %89 = vector.load %arg6[%c8, %c0_53] : memref<9x256xf32, #tpu.memory_space<vmem>>, vector<1x256xf32>
    %90 = vector.broadcast %89 : vector<1x256xf32> to vector<8x256xf32>
    %91 = arith.mulf %88, %90 : vector<8x256xf32>
    %92 = arith.truncf %91 : vector<8x256xf32> to vector<8x256xbf16>
    %c8_54 = arith.constant 8 : index
    %c0_55 = arith.constant 0 : index
    %c0_56 = arith.constant 0 : index
    %93 = vector.load %arg4[%c8_54, %c0_55, %c0_56] : memref<9x8x8xbf16, #tpu.memory_space<vmem>>, vector<1x8x8xbf16>
    %94 = vector.shape_cast %93 : vector<1x8x8xbf16> to vector<8x8xbf16>
    %cst_57 = arith.constant dense<0.000000e+00> : vector<8x256xf32>
    %95 = tpu.matmul %94, %92, %cst_57 {dimension_numbers = #tpu.dot_dimension_numbers<[1], [0], [0], [1], [0, 0, 1, 1], [], []>} : vector<8x8xbf16>, vector<8x256xbf16>, vector<8x256xf32> -> vector<8x256xf32>
    %96 = arith.addf %87, %95 : vector<8x256xf32>
    %c0_58 = arith.constant 0 : index
    %c0_59 = arith.constant 0 : index
    %97 = vector.load %arg5[%c0_58, %c0_59] : memref<8x1xf32, #tpu.memory_space<vmem>>, vector<8x1xf32>
    %98 = vector.broadcast %97 : vector<8x1xf32> to vector<8x256xf32>
    %99 = arith.addf %96, %98 : vector<8x256xf32>
    %cst_60 = arith.constant 0.000000e+00 : f32
    %100 = vector.broadcast %cst_60 : f32 to vector<8x256xf32>
    %101 = arith.cmpf ogt, %99, %100 : vector<8x256xf32>
    %cst_61 = arith.constant 0.00999999977 : f32
    %102 = vector.broadcast %cst_61 : f32 to vector<8x256xf32>
    %103 = arith.mulf %102, %99 : vector<8x256xf32>
    %104 = arith.select %101, %99, %103 : vector<8x256xi1>, vector<8x256xf32>
    %c0_62 = arith.constant 0 : index
    %c0_63 = arith.constant 0 : index
    %c0_64 = arith.constant 0 : index
    %105 = vector.load %arg8[%c0_62, %c0_63, %c0_64] : memref<1x8x256xf32, #tpu.memory_space<vmem>>, vector<1x8x256xf32>
    %106 = vector.shape_cast %105 : vector<1x8x256xf32> to vector<8x256xf32>
    %107 = vector.shape_cast %104 : vector<8x256xf32> to vector<1x8x256xf32>
    tpu.vector_store %arg8[%c0_62, %c0_63, %c0_64], %107 {strides = array<i32>} : memref<1x8x256xf32, #tpu.memory_space<vmem>>, vector<1x8x256xf32>,
    %cst_65 = arith.constant dense<0.000000e+00> : vector<8xf32>
    %108 = vector.multi_reduction <add>, %104, %cst_65 [1] : vector<8x256xf32> to vector<8xf32>
    %109 = vector.shape_cast %108 : vector<8xf32> to vector<8x1xf32>
    %110 = arith.mulf %104, %104 : vector<8x256xf32>
    %cst_66 = arith.constant dense<0.000000e+00> : vector<8xf32>
    %111 = vector.multi_reduction <add>, %110, %cst_66 [1] : vector<8x256xf32> to vector<8xf32>
    %112 = vector.shape_cast %111 : vector<8xf32> to vector<8x1xf32>
    %113 = tpu.concatenate %109, %112 in 1 : vector<8x1xf32>, vector<8x1xf32> -> vector<8x2xf32>
    %c0_67 = arith.constant 0 : index
    %c0_68 = arith.constant 0 : index
    %c0_69 = arith.constant 0 : index
    %114 = vector.load %arg9[%c0_67, %c0_68, %c0_69] : memref<1x8x2xf32, #tpu.memory_space<vmem>>, vector<1x8x2xf32>
    %115 = vector.shape_cast %114 : vector<1x8x2xf32> to vector<8x2xf32>
    %116 = vector.shape_cast %113 : vector<8x2xf32> to vector<1x8x2xf32>
    tpu.vector_store %arg9[%c0_67, %c0_68, %c0_69], %116 {strides = array<i32>} : memref<1x8x2xf32, #tpu.memory_space<vmem>>, vector<1x8x2xf32>,
    return
  }
  func.func @transform_0(%arg0: i32) -> (i32, i32, i32) {
    %c0_i32 = arith.constant 0 : i32
    %c0_i32_0 = arith.constant 0 : i32
    %c0_i32_1 = arith.constant 0 : i32
    return %arg0, %c0_i32, %c0_i32_0 : i32, i32, i32
  }
  func.func @transform_1(%arg0: i32) -> (i32, i32) {
    %c0_i32 = arith.constant 0 : i32
    %c0_i32_0 = arith.constant 0 : i32
    %c0_i32_1 = arith.constant 0 : i32
    return %c0_i32, %c0_i32_0 : i32, i32
  }
  func.func @transform_2(%arg0: i32) -> (i32, i32) {
    %c0_i32 = arith.constant 0 : i32
    %c0_i32_0 = arith.constant 0 : i32
    %c0_i32_1 = arith.constant 0 : i32
    return %c0_i32, %c0_i32_0 : i32, i32
  }
  func.func @transform_3(%arg0: i32) -> (i32, i32, i32) {
    %c0_i32 = arith.constant 0 : i32
    %c0_i32_0 = arith.constant 0 : i32
    %c0_i32_1 = arith.constant 0 : i32
    %c0_i32_2 = arith.constant 0 : i32
    return %c0_i32, %c0_i32_0, %c0_i32_1 : i32, i32, i32
  }
  func.func @transform_4(%arg0: i32) -> (i32, i32) {
    %c0_i32 = arith.constant 0 : i32
    %c0_i32_0 = arith.constant 0 : i32
    %c0_i32_1 = arith.constant 0 : i32
    return %c0_i32, %c0_i32_0 : i32, i32
  }
  func.func @transform_5(%arg0: i32) -> (i32, i32) {
    %c0_i32 = arith.constant 0 : i32
    %c0_i32_0 = arith.constant 0 : i32
    %c0_i32_1 = arith.constant 0 : i32
    return %c0_i32, %c0_i32_0 : i32, i32
  }
  func.func @transform_6(%arg0: i32) -> (i32, i32, i32) {
    %c0_i32 = arith.constant 0 : i32
    %c0_i32_0 = arith.constant 0 : i32
    %c0_i32_1 = arith.constant 0 : i32
    return %arg0, %c0_i32, %c0_i32_0 : i32, i32, i32
  }
  func.func @transform_7(%arg0: i32) -> (i32, i32, i32) {
    %c0_i32 = arith.constant 0 : i32
    %c0_i32_0 = arith.constant 0 : i32
    %c0_i32_1 = arith.constant 0 : i32
    return %arg0, %c0_i32, %c0_i32_0 : i32, i32, i32
  }
  func.func @transform_8(%arg0: i32) -> (i32, i32, i32) {
    %c0_i32 = arith.constant 0 : i32
    %c0_i32_0 = arith.constant 0 : i32
    %c0_i32_1 = arith.constant 0 : i32
    return %arg0, %c0_i32, %c0_i32_0 : i32, i32, i32
  }
}

module attributes {stable_mosaic.version = 11 : i64} {
  func.func @kernel(%arg0: i32, %arg1: memref<1x8x256xf32, #tpu.memory_space<vmem>>, %arg2: memref<8x1xf32, #tpu.memory_space<vmem>>, %arg3: memref<8x1xf32, #tpu.memory_space<vmem>>, %arg4: memref<9x8x8xbf16, #tpu.memory_space<vmem>>, %arg5: memref<8x1xf32, #tpu.memory_space<vmem>>, %arg6: memref<9x256xf32, #tpu.memory_space<vmem>>, %arg7: memref<1x8x256xf32, #tpu.memory_space<vmem>>, %arg8: memref<1x8x2xf32, #tpu.memory_space<vmem>>) attributes {dimension_semantics = [#tpu.dimension_semantics<parallel>], iteration_bounds = array<i64: 2>, scalar_prefetch = 0 : i64, scratch_operands = 0 : i64, tpu.core_type = #tpu.core_type<tc>, window_params = [{transform_indices = @transform_0, window_bounds = array<i64: 1, 8, 256>}, {pipeline_mode = #tpu.pipeline_mode<synchronous>, transform_indices = @transform_1, window_bounds = array<i64: 8, 1>}, {pipeline_mode = #tpu.pipeline_mode<synchronous>, transform_indices = @transform_2, window_bounds = array<i64: 8, 1>}, {pipeline_mode = #tpu.pipeline_mode<synchronous>, transform_indices = @transform_3, window_bounds = array<i64: 9, 8, 8>}, {pipeline_mode = #tpu.pipeline_mode<synchronous>, transform_indices = @transform_4, window_bounds = array<i64: 8, 1>}, {pipeline_mode = #tpu.pipeline_mode<synchronous>, transform_indices = @transform_5, window_bounds = array<i64: 9, 256>}, {transform_indices = @transform_6, window_bounds = array<i64: 1, 8, 256>}, {transform_indices = @transform_7, window_bounds = array<i64: 1, 8, 2>}]} {
    %c0 = arith.constant 0 : index
    %c0_0 = arith.constant 0 : index
    %c0_1 = arith.constant 0 : index
    %0 = vector.load %arg1[%c0, %c0_0, %c0_1] : memref<1x8x256xf32, #tpu.memory_space<vmem>>, vector<1x8x256xf32>
    %1 = vector.shape_cast %0 : vector<1x8x256xf32> to vector<8x256xf32>
    %c0_2 = arith.constant 0 : index
    %c0_3 = arith.constant 0 : index
    %2 = vector.load %arg2[%c0_2, %c0_3] : memref<8x1xf32, #tpu.memory_space<vmem>>, vector<8x1xf32>
    %3 = vector.broadcast %2 : vector<8x1xf32> to vector<8x256xf32>
    %4 = arith.mulf %1, %3 : vector<8x256xf32>
    %c0_4 = arith.constant 0 : index
    %c0_5 = arith.constant 0 : index
    %5 = vector.load %arg3[%c0_4, %c0_5] : memref<8x1xf32, #tpu.memory_space<vmem>>, vector<8x1xf32>
    %6 = vector.broadcast %5 : vector<8x1xf32> to vector<8x256xf32>
    %7 = arith.addf %4, %6 : vector<8x256xf32>
    %cst = arith.constant 0.000000e+00 : f32
    %8 = vector.broadcast %cst : f32 to vector<8x256xf32>
    %c34_i32 = arith.constant 34 : i32
    %9 = tpu.dynamic_rotate %7 by %c34_i32 dim 1 : vector<8x256xf32>, i32 -> vector<8x256xf32>
    %c0_6 = arith.constant 0 : index
    %c0_7 = arith.constant 0 : index
    %10 = vector.load %arg6[%c0_6, %c0_7] : memref<9x256xf32, #tpu.memory_space<vmem>>, vector<1x256xf32>
    %11 = vector.broadcast %10 : vector<1x256xf32> to vector<8x256xf32>
    %12 = arith.mulf %9, %11 : vector<8x256xf32>
    %13 = arith.truncf %12 : vector<8x256xf32> to vector<8x256xbf16>
    %c0_8 = arith.constant 0 : index
    %c0_9 = arith.constant 0 : index
    %c0_10 = arith.constant 0 : index
    %14 = vector.load %arg4[%c0_8, %c0_9, %c0_10] : memref<9x8x8xbf16, #tpu.memory_space<vmem>>, vector<1x8x8xbf16>
    %15 = vector.shape_cast %14 : vector<1x8x8xbf16> to vector<8x8xbf16>
    %cst_11 = arith.constant dense<0.000000e+00> : vector<8x256xf32>
    %16 = tpu.matmul %15, %13, %cst_11 {dimension_numbers = #tpu.dot_dimension_numbers<[1], [0], [0], [1], [0, 0, 1, 1], [], []>} : vector<8x8xbf16>, vector<8x256xbf16>, vector<8x256xf32> -> vector<8x256xf32>
    %17 = arith.addf %8, %16 : vector<8x256xf32>
    %c32_i32 = arith.constant 32 : i32
    %18 = tpu.dynamic_rotate %7 by %c32_i32 dim 1 : vector<8x256xf32>, i32 -> vector<8x256xf32>
    %c1 = arith.constant 1 : index
    %c0_12 = arith.constant 0 : index
    %19 = vector.load %arg6[%c1, %c0_12] : memref<9x256xf32, #tpu.memory_space<vmem>>, vector<1x256xf32>
    %20 = vector.broadcast %19 : vector<1x256xf32> to vector<8x256xf32>
    %21 = arith.mulf %18, %20 : vector<8x256xf32>
    %22 = arith.truncf %21 : vector<8x256xf32> to vector<8x256xbf16>
    %c1_13 = arith.constant 1 : index
    %c0_14 = arith.constant 0 : index
    %c0_15 = arith.constant 0 : index
    %23 = vector.load %arg4[%c1_13, %c0_14, %c0_15] : memref<9x8x8xbf16, #tpu.memory_space<vmem>>, vector<1x8x8xbf16>
    %24 = vector.shape_cast %23 : vector<1x8x8xbf16> to vector<8x8xbf16>
    %cst_16 = arith.constant dense<0.000000e+00> : vector<8x256xf32>
    %25 = tpu.matmul %24, %22, %cst_16 {dimension_numbers = #tpu.dot_dimension_numbers<[1], [0], [0], [1], [0, 0, 1, 1], [], []>} : vector<8x8xbf16>, vector<8x256xbf16>, vector<8x256xf32> -> vector<8x256xf32>
    %26 = arith.addf %17, %25 : vector<8x256xf32>
    %c30_i32 = arith.constant 30 : i32
    %27 = tpu.dynamic_rotate %7 by %c30_i32 dim 1 : vector<8x256xf32>, i32 -> vector<8x256xf32>
    %c2 = arith.constant 2 : index
    %c0_17 = arith.constant 0 : index
    %28 = vector.load %arg6[%c2, %c0_17] : memref<9x256xf32, #tpu.memory_space<vmem>>, vector<1x256xf32>
    %29 = vector.broadcast %28 : vector<1x256xf32> to vector<8x256xf32>
    %30 = arith.mulf %27, %29 : vector<8x256xf32>
    %31 = arith.truncf %30 : vector<8x256xf32> to vector<8x256xbf16>
    %c2_18 = arith.constant 2 : index
    %c0_19 = arith.constant 0 : index
    %c0_20 = arith.constant 0 : index
    %32 = vector.load %arg4[%c2_18, %c0_19, %c0_20] : memref<9x8x8xbf16, #tpu.memory_space<vmem>>, vector<1x8x8xbf16>
    %33 = vector.shape_cast %32 : vector<1x8x8xbf16> to vector<8x8xbf16>
    %cst_21 = arith.constant dense<0.000000e+00> : vector<8x256xf32>
    %34 = tpu.matmul %33, %31, %cst_21 {dimension_numbers = #tpu.dot_dimension_numbers<[1], [0], [0], [1], [0, 0, 1, 1], [], []>} : vector<8x8xbf16>, vector<8x256xbf16>, vector<8x256xf32> -> vector<8x256xf32>
    %35 = arith.addf %26, %34 : vector<8x256xf32>
    %c2_i32 = arith.constant 2 : i32
    %36 = tpu.dynamic_rotate %7 by %c2_i32 dim 1 : vector<8x256xf32>, i32 -> vector<8x256xf32>
    %c3 = arith.constant 3 : index
    %c0_22 = arith.constant 0 : index
    %37 = vector.load %arg6[%c3, %c0_22] : memref<9x256xf32, #tpu.memory_space<vmem>>, vector<1x256xf32>
    %38 = vector.broadcast %37 : vector<1x256xf32> to vector<8x256xf32>
    %39 = arith.mulf %36, %38 : vector<8x256xf32>
    %40 = arith.truncf %39 : vector<8x256xf32> to vector<8x256xbf16>
    %c3_23 = arith.constant 3 : index
    %c0_24 = arith.constant 0 : index
    %c0_25 = arith.constant 0 : index
    %41 = vector.load %arg4[%c3_23, %c0_24, %c0_25] : memref<9x8x8xbf16, #tpu.memory_space<vmem>>, vector<1x8x8xbf16>
    %42 = vector.shape_cast %41 : vector<1x8x8xbf16> to vector<8x8xbf16>
    %cst_26 = arith.constant dense<0.000000e+00> : vector<8x256xf32>
    %43 = tpu.matmul %42, %40, %cst_26 {dimension_numbers = #tpu.dot_dimension_numbers<[1], [0], [0], [1], [0, 0, 1, 1], [], []>} : vector<8x8xbf16>, vector<8x256xbf16>, vector<8x256xf32> -> vector<8x256xf32>
    %44 = arith.addf %35, %43 : vector<8x256xf32>
    %c4 = arith.constant 4 : index
    %c0_27 = arith.constant 0 : index
    %45 = vector.load %arg6[%c4, %c0_27] : memref<9x256xf32, #tpu.memory_space<vmem>>, vector<1x256xf32>
    %46 = vector.broadcast %45 : vector<1x256xf32> to vector<8x256xf32>
    %47 = arith.mulf %7, %46 : vector<8x256xf32>
    %48 = arith.truncf %47 : vector<8x256xf32> to vector<8x256xbf16>
    %c4_28 = arith.constant 4 : index
    %c0_29 = arith.constant 0 : index
    %c0_30 = arith.constant 0 : index
    %49 = vector.load %arg4[%c4_28, %c0_29, %c0_30] : memref<9x8x8xbf16, #tpu.memory_space<vmem>>, vector<1x8x8xbf16>
    %50 = vector.shape_cast %49 : vector<1x8x8xbf16> to vector<8x8xbf16>
    %cst_31 = arith.constant dense<0.000000e+00> : vector<8x256xf32>
    %51 = tpu.matmul %50, %48, %cst_31 {dimension_numbers = #tpu.dot_dimension_numbers<[1], [0], [0], [1], [0, 0, 1, 1], [], []>} : vector<8x8xbf16>, vector<8x256xbf16>, vector<8x256xf32> -> vector<8x256xf32>
    %52 = arith.addf %44, %51 : vector<8x256xf32>
    %c254_i32 = arith.constant 254 : i32
    %53 = tpu.dynamic_rotate %7 by %c254_i32 dim 1 : vector<8x256xf32>, i32 -> vector<8x256xf32>
    %c5 = arith.constant 5 : index
    %c0_32 = arith.constant 0 : index
    %54 = vector.load %arg6[%c5, %c0_32] : memref<9x256xf32, #tpu.memory_space<vmem>>, vector<1x256xf32>
    %55 = vector.broadcast %54 : vector<1x256xf32> to vector<8x256xf32>
    %56 = arith.mulf %53, %55 : vector<8x256xf32>
    %57 = arith.truncf %56 : vector<8x256xf32> to vector<8x256xbf16>
    %c5_33 = arith.constant 5 : index
    %c0_34 = arith.constant 0 : index
    %c0_35 = arith.constant 0 : index
    %58 = vector.load %arg4[%c5_33, %c0_34, %c0_35] : memref<9x8x8xbf16, #tpu.memory_space<vmem>>, vector<1x8x8xbf16>
    %59 = vector.shape_cast %58 : vector<1x8x8xbf16> to vector<8x8xbf16>
    %cst_36 = arith.constant dense<0.000000e+00> : vector<8x256xf32>
    %60 = tpu.matmul %59, %57, %cst_36 {dimension_numbers = #tpu.dot_dimension_numbers<[1], [0], [0], [1], [0, 0, 1, 1], [], []>} : vector<8x8xbf16>, vector<8x256xbf16>, vector<8x256xf32> -> vector<8x256xf32>
    %61 = arith.addf %52, %60 : vector<8x256xf32>
    %c226_i32 = arith.constant 226 : i32
    %62 = tpu.dynamic_rotate %7 by %c226_i32 dim 1 : vector<8x256xf32>, i32 -> vector<8x256xf32>
    %c6 = arith.constant 6 : index
    %c0_37 = arith.constant 0 : index
    %63 = vector.load %arg6[%c6, %c0_37] : memref<9x256xf32, #tpu.memory_space<vmem>>, vector<1x256xf32>
    %64 = vector.broadcast %63 : vector<1x256xf32> to vector<8x256xf32>
    %65 = arith.mulf %62, %64 : vector<8x256xf32>
    %66 = arith.truncf %65 : vector<8x256xf32> to vector<8x256xbf16>
    %c6_38 = arith.constant 6 : index
    %c0_39 = arith.constant 0 : index
    %c0_40 = arith.constant 0 : index
    %67 = vector.load %arg4[%c6_38, %c0_39, %c0_40] : memref<9x8x8xbf16, #tpu.memory_space<vmem>>, vector<1x8x8xbf16>
    %68 = vector.shape_cast %67 : vector<1x8x8xbf16> to vector<8x8xbf16>
    %cst_41 = arith.constant dense<0.000000e+00> : vector<8x256xf32>
    %69 = tpu.matmul %68, %66, %cst_41 {dimension_numbers = #tpu.dot_dimension_numbers<[1], [0], [0], [1], [0, 0, 1, 1], [], []>} : vector<8x8xbf16>, vector<8x256xbf16>, vector<8x256xf32> -> vector<8x256xf32>
    %70 = arith.addf %61, %69 : vector<8x256xf32>
    %c224_i32 = arith.constant 224 : i32
    %71 = tpu.dynamic_rotate %7 by %c224_i32 dim 1 : vector<8x256xf32>, i32 -> vector<8x256xf32>
    %c7 = arith.constant 7 : index
    %c0_42 = arith.constant 0 : index
    %72 = vector.load %arg6[%c7, %c0_42] : memref<9x256xf32, #tpu.memory_space<vmem>>, vector<1x256xf32>
    %73 = vector.broadcast %72 : vector<1x256xf32> to vector<8x256xf32>
    %74 = arith.mulf %71, %73 : vector<8x256xf32>
    %75 = arith.truncf %74 : vector<8x256xf32> to vector<8x256xbf16>
    %c7_43 = arith.constant 7 : index
    %c0_44 = arith.constant 0 : index
    %c0_45 = arith.constant 0 : index
    %76 = vector.load %arg4[%c7_43, %c0_44, %c0_45] : memref<9x8x8xbf16, #tpu.memory_space<vmem>>, vector<1x8x8xbf16>
    %77 = vector.shape_cast %76 : vector<1x8x8xbf16> to vector<8x8xbf16>
    %cst_46 = arith.constant dense<0.000000e+00> : vector<8x256xf32>
    %78 = tpu.matmul %77, %75, %cst_46 {dimension_numbers = #tpu.dot_dimension_numbers<[1], [0], [0], [1], [0, 0, 1, 1], [], []>} : vector<8x8xbf16>, vector<8x256xbf16>, vector<8x256xf32> -> vector<8x256xf32>
    %79 = arith.addf %70, %78 : vector<8x256xf32>
    %c222_i32 = arith.constant 222 : i32
    %80 = tpu.dynamic_rotate %7 by %c222_i32 dim 1 : vector<8x256xf32>, i32 -> vector<8x256xf32>
    %c8 = arith.constant 8 : index
    %c0_47 = arith.constant 0 : index
    %81 = vector.load %arg6[%c8, %c0_47] : memref<9x256xf32, #tpu.memory_space<vmem>>, vector<1x256xf32>
    %82 = vector.broadcast %81 : vector<1x256xf32> to vector<8x256xf32>
    %83 = arith.mulf %80, %82 : vector<8x256xf32>
    %84 = arith.truncf %83 : vector<8x256xf32> to vector<8x256xbf16>
    %c8_48 = arith.constant 8 : index
    %c0_49 = arith.constant 0 : index
    %c0_50 = arith.constant 0 : index
    %85 = vector.load %arg4[%c8_48, %c0_49, %c0_50] : memref<9x8x8xbf16, #tpu.memory_space<vmem>>, vector<1x8x8xbf16>
    %86 = vector.shape_cast %85 : vector<1x8x8xbf16> to vector<8x8xbf16>
    %cst_51 = arith.constant dense<0.000000e+00> : vector<8x256xf32>
    %87 = tpu.matmul %86, %84, %cst_51 {dimension_numbers = #tpu.dot_dimension_numbers<[1], [0], [0], [1], [0, 0, 1, 1], [], []>} : vector<8x8xbf16>, vector<8x256xbf16>, vector<8x256xf32> -> vector<8x256xf32>
    %88 = arith.addf %79, %87 : vector<8x256xf32>
    %c0_52 = arith.constant 0 : index
    %c0_53 = arith.constant 0 : index
    %89 = vector.load %arg5[%c0_52, %c0_53] : memref<8x1xf32, #tpu.memory_space<vmem>>, vector<8x1xf32>
    %90 = vector.broadcast %89 : vector<8x1xf32> to vector<8x256xf32>
    %91 = arith.addf %88, %90 : vector<8x256xf32>
    %cst_54 = arith.constant 0.000000e+00 : f32
    %92 = vector.broadcast %cst_54 : f32 to vector<8x256xf32>
    %93 = arith.cmpf ogt, %91, %92 : vector<8x256xf32>
    %cst_55 = arith.constant 0.00999999977 : f32
    %94 = vector.broadcast %cst_55 : f32 to vector<8x256xf32>
    %95 = arith.mulf %94, %91 : vector<8x256xf32>
    %96 = arith.select %93, %91, %95 : vector<8x256xi1>, vector<8x256xf32>
    %c0_56 = arith.constant 0 : index
    %c0_57 = arith.constant 0 : index
    %c0_58 = arith.constant 0 : index
    %97 = vector.load %arg7[%c0_56, %c0_57, %c0_58] : memref<1x8x256xf32, #tpu.memory_space<vmem>>, vector<1x8x256xf32>
    %98 = vector.shape_cast %97 : vector<1x8x256xf32> to vector<8x256xf32>
    %99 = vector.shape_cast %96 : vector<8x256xf32> to vector<1x8x256xf32>
    tpu.vector_store %arg7[%c0_56, %c0_57, %c0_58], %99 {strides = array<i32>} : memref<1x8x256xf32, #tpu.memory_space<vmem>>, vector<1x8x256xf32>,
    %cst_59 = arith.constant dense<0.000000e+00> : vector<8xf32>
    %100 = vector.multi_reduction <add>, %96, %cst_59 [1] : vector<8x256xf32> to vector<8xf32>
    %101 = vector.shape_cast %100 : vector<8xf32> to vector<8x1xf32>
    %102 = arith.mulf %96, %96 : vector<8x256xf32>
    %cst_60 = arith.constant dense<0.000000e+00> : vector<8xf32>
    %103 = vector.multi_reduction <add>, %102, %cst_60 [1] : vector<8x256xf32> to vector<8xf32>
    %104 = vector.shape_cast %103 : vector<8xf32> to vector<8x1xf32>
    %105 = tpu.concatenate %101, %104 in 1 : vector<8x1xf32>, vector<8x1xf32> -> vector<8x2xf32>
    %c0_61 = arith.constant 0 : index
    %c0_62 = arith.constant 0 : index
    %c0_63 = arith.constant 0 : index
    %106 = vector.load %arg8[%c0_61, %c0_62, %c0_63] : memref<1x8x2xf32, #tpu.memory_space<vmem>>, vector<1x8x2xf32>
    %107 = vector.shape_cast %106 : vector<1x8x2xf32> to vector<8x2xf32>
    %108 = vector.shape_cast %105 : vector<8x2xf32> to vector<1x8x2xf32>
    tpu.vector_store %arg8[%c0_61, %c0_62, %c0_63], %108 {strides = array<i32>} : memref<1x8x2xf32, #tpu.memory_space<vmem>>, vector<1x8x2xf32>,
    return
  }
  func.func @transform_0(%arg0: i32) -> (i32, i32, i32) {
    %c0_i32 = arith.constant 0 : i32
    %c0_i32_0 = arith.constant 0 : i32
    %c0_i32_1 = arith.constant 0 : i32
    return %arg0, %c0_i32, %c0_i32_0 : i32, i32, i32
  }
  func.func @transform_1(%arg0: i32) -> (i32, i32) {
    %c0_i32 = arith.constant 0 : i32
    %c0_i32_0 = arith.constant 0 : i32
    %c0_i32_1 = arith.constant 0 : i32
    return %c0_i32, %c0_i32_0 : i32, i32
  }
  func.func @transform_2(%arg0: i32) -> (i32, i32) {
    %c0_i32 = arith.constant 0 : i32
    %c0_i32_0 = arith.constant 0 : i32
    %c0_i32_1 = arith.constant 0 : i32
    return %c0_i32, %c0_i32_0 : i32, i32
  }
  func.func @transform_3(%arg0: i32) -> (i32, i32, i32) {
    %c0_i32 = arith.constant 0 : i32
    %c0_i32_0 = arith.constant 0 : i32
    %c0_i32_1 = arith.constant 0 : i32
    %c0_i32_2 = arith.constant 0 : i32
    return %c0_i32, %c0_i32_0, %c0_i32_1 : i32, i32, i32
  }
  func.func @transform_4(%arg0: i32) -> (i32, i32) {
    %c0_i32 = arith.constant 0 : i32
    %c0_i32_0 = arith.constant 0 : i32
    %c0_i32_1 = arith.constant 0 : i32
    return %c0_i32, %c0_i32_0 : i32, i32
  }
  func.func @transform_5(%arg0: i32) -> (i32, i32) {
    %c0_i32 = arith.constant 0 : i32
    %c0_i32_0 = arith.constant 0 : i32
    %c0_i32_1 = arith.constant 0 : i32
    return %c0_i32, %c0_i32_0 : i32, i32
  }
  func.func @transform_6(%arg0: i32) -> (i32, i32, i32) {
    %c0_i32 = arith.constant 0 : i32
    %c0_i32_0 = arith.constant 0 : i32
    %c0_i32_1 = arith.constant 0 : i32
    return %arg0, %c0_i32, %c0_i32_0 : i32, i32, i32
  }
  func.func @transform_7(%arg0: i32) -> (i32, i32, i32) {
    %c0_i32 = arith.constant 0 : i32
    %c0_i32_0 = arith.constant 0 : i32
    %c0_i32_1 = arith.constant 0 : i32
    return %arg0, %c0_i32, %c0_i32_0 : i32, i32, i32
  }
}

module attributes {stable_mosaic.version = 11 : i64} {
  func.func @_bn2_residual_kernel(%arg0: i32, %arg1: i32, %arg2: memref<1x8x128xf32, #tpu.memory_space<vmem>>, %arg3: memref<1x8x128xf32, #tpu.memory_space<vmem>>, %arg4: memref<8x1xf32, #tpu.memory_space<vmem>>, %arg5: memref<8x1xf32, #tpu.memory_space<vmem>>, %arg6: memref<1x8x128xf32, #tpu.memory_space<vmem>>) attributes {dimension_semantics = [#tpu.dimension_semantics<parallel>, #tpu.dimension_semantics<parallel>], iteration_bounds = array<i64: 2, 2>, scalar_prefetch = 0 : i64, scratch_operands = 0 : i64, tpu.core_type = #tpu.core_type<tc>, window_params = [{transform_indices = @transform_0, window_bounds = array<i64: 1, 8, 128>}, {transform_indices = @transform_1, window_bounds = array<i64: 1, 8, 128>}, {pipeline_mode = #tpu.pipeline_mode<synchronous>, transform_indices = @transform_2, window_bounds = array<i64: 8, 1>}, {pipeline_mode = #tpu.pipeline_mode<synchronous>, transform_indices = @transform_3, window_bounds = array<i64: 8, 1>}, {transform_indices = @transform_4, window_bounds = array<i64: 1, 8, 128>}]} {
    %c0 = arith.constant 0 : index
    %c0_0 = arith.constant 0 : index
    %c0_1 = arith.constant 0 : index
    %0 = vector.load %arg2[%c0, %c0_0, %c0_1] : memref<1x8x128xf32, #tpu.memory_space<vmem>>, vector<1x8x128xf32>
    %1 = vector.shape_cast %0 : vector<1x8x128xf32> to vector<8x128xf32>
    %c0_2 = arith.constant 0 : index
    %c0_3 = arith.constant 0 : index
    %c0_4 = arith.constant 0 : index
    %2 = vector.load %arg3[%c0_2, %c0_3, %c0_4] : memref<1x8x128xf32, #tpu.memory_space<vmem>>, vector<1x8x128xf32>
    %3 = vector.shape_cast %2 : vector<1x8x128xf32> to vector<8x128xf32>
    %c0_5 = arith.constant 0 : index
    %c0_6 = arith.constant 0 : index
    %4 = vector.load %arg4[%c0_5, %c0_6] : memref<8x1xf32, #tpu.memory_space<vmem>>, vector<8x1xf32>
    %5 = vector.broadcast %4 : vector<8x1xf32> to vector<8x128xf32>
    %6 = arith.mulf %3, %5 : vector<8x128xf32>
    %7 = arith.addf %1, %6 : vector<8x128xf32>
    %c0_7 = arith.constant 0 : index
    %c0_8 = arith.constant 0 : index
    %8 = vector.load %arg5[%c0_7, %c0_8] : memref<8x1xf32, #tpu.memory_space<vmem>>, vector<8x1xf32>
    %9 = vector.broadcast %8 : vector<8x1xf32> to vector<8x128xf32>
    %10 = arith.addf %7, %9 : vector<8x128xf32>
    %c0_9 = arith.constant 0 : index
    %c0_10 = arith.constant 0 : index
    %c0_11 = arith.constant 0 : index
    %11 = vector.load %arg6[%c0_9, %c0_10, %c0_11] : memref<1x8x128xf32, #tpu.memory_space<vmem>>, vector<1x8x128xf32>
    %12 = vector.shape_cast %11 : vector<1x8x128xf32> to vector<8x128xf32>
    %13 = vector.shape_cast %10 : vector<8x128xf32> to vector<1x8x128xf32>
    tpu.vector_store %arg6[%c0_9, %c0_10, %c0_11], %13 {strides = array<i32>} : memref<1x8x128xf32, #tpu.memory_space<vmem>>, vector<1x8x128xf32>,
    return
  }
  func.func @transform_0(%arg0: i32, %arg1: i32) -> (i32, i32, i32) {
    %c0_i32 = arith.constant 0 : i32
    %c0_i32_0 = arith.constant 0 : i32
    return %arg0, %c0_i32, %arg1 : i32, i32, i32
  }
  func.func @transform_1(%arg0: i32, %arg1: i32) -> (i32, i32, i32) {
    %c0_i32 = arith.constant 0 : i32
    %c0_i32_0 = arith.constant 0 : i32
    return %arg0, %c0_i32, %arg1 : i32, i32, i32
  }
  func.func @transform_2(%arg0: i32, %arg1: i32) -> (i32, i32) {
    %c0_i32 = arith.constant 0 : i32
    %c0_i32_0 = arith.constant 0 : i32
    %c0_i32_1 = arith.constant 0 : i32
    return %c0_i32, %c0_i32_0 : i32, i32
  }
  func.func @transform_3(%arg0: i32, %arg1: i32) -> (i32, i32) {
    %c0_i32 = arith.constant 0 : i32
    %c0_i32_0 = arith.constant 0 : i32
    %c0_i32_1 = arith.constant 0 : i32
    return %c0_i32, %c0_i32_0 : i32, i32
  }
  func.func @transform_4(%arg0: i32, %arg1: i32) -> (i32, i32, i32) {
    %c0_i32 = arith.constant 0 : i32
    %c0_i32_0 = arith.constant 0 : i32
    return %arg0, %c0_i32, %arg1 : i32, i32, i32
  }
}

</mosaic_0001>

<llo_original>
// kernel: res_context_block.5
$region0: #{res_context_block.5}
  #allocation0 [shape = 'u32[]', space=smem, size = 0x4, offset = 0x4, fixed_abs, tag = 'smem constant byte address 0x4 - core index']
  #allocation1 [shape = 'u32[144,128]{1,0:T(1,128)}', space=vmem, size = 0x12000, scoped, tag = 'internal scratch']
  %s0 = inlined_call_operand.vmem [shape: f32[2,8,256], index: 0, kind: input, shape index: {}, may-alias: {0,4}]
  %s1 = inlined_call_operand.vmem [shape: f32[2,8,256], index: 1, kind: input, shape index: {}]
  %s2 = inlined_call_operand.vmem [shape: f32[8,1], index: 2, kind: input, shape index: {}]
  %s3 = inlined_call_operand.vmem [shape: f32[8,1], index: 3, kind: input, shape index: {}]
  %s4 = inlined_call_operand.vmem [shape: f32[2,8,256], index: 4, kind: output, shape index: {}, may-alias: {0,4}]
  %s5 = sld [smem:[#allocation0]]
  $region49: #{res_context_block.5} parent=0
    _
  %s7 = ssub.s32 1, %s5
  %s8 = scalar_select 0, %s7, %s5
  loop: start=0, step=1, limit=6
  $region2: #{res_context_block.5} parent=0 // loop_pre_header
    _
  $region3: #{res_context_block.5} parent=0 // loop_header
    %s10 = sphi 0, %s14
    %p11 = scmp.ge.s32.totalorder %s10, 6
    %s17 = sphi 0, %s29
    %s18 = sphi 0, %s25
    %s19 = sphi 0, %s17
    %s20 = sphi 0, %s18
    %s21 = sphi 0, %s19
    %s22 = sphi 0, %s20
    %s34 = sphi 0, %s36
    %s37 = sphi 0, %s34
    %s38 = sphi 0, %s37
    %s54 = sphi 0, %s38
    %s62 = sphi 0, %s64
    %s65 = sphi 0, %s62
    %s66 = sphi 0, %s65
    %s82 = sphi 0, %s66
    %s86 = sphi 0, %s86
    %s88 = sphi 0, %s86
    %s89 = sphi 0, %s88
    %s103 = sphi 0, %s89
    %s107 = sphi 0, %s107
    %s109 = sphi 0, %s107
    %s110 = sphi 0, %s109
    %s124 = sphi 0, %s110
    %s132 = sphi 0, %s134
    %s135 = sphi 0, %s132
    %s136 = sphi 0, %s135
    %s152 = sphi 0, %s136
  $region4: #{res_context_block.5} parent=0 // loop_header_branch
    %13 = sbr.rel (%p11) target = $region8
  $region5: #{res_context_block.5} parent=0 // loop_body
    %s15 = ssub.s32 %s10, 1
    %s16 = ssub.s32 %s10, 2
    %s23 = sadd.s32 1, %s18
    %p24 = scmp.ge.s32.totalorder %s23, 2
    %s25 = scalar_select %p24, 0, %s23
    %s26 = sadd.s32 1, %s17
    %s27 = scalar_select %p24, %s26, %s17
    %p28 = scmp.ge.s32.totalorder %s27, 2
    %s29 = scalar_select %p28, 0, %s27
    %s30 = ssub.s32 %s17, %s29
    %s31 = ssub.s32 %s18, %s25
    %s32 = sor.u32 %s30, %s31
    %p33 = scmp.eq.s32.totalorder %s32, 0
    %s35 = sadd.s32 %s34, 1
    %s36 = scalar_select %p33, %s34, %s35
    %p39 = pneg %p33
    %p40 = scmp.eq.s32.totalorder %s10, 3
    %p41 = por %p39, %p40
    %p42 = scmp.ne.s32.totalorder %s34, %s37
    %p43 = scmp.eq.s32.totalorder %s10, 0
    %p44 = por %p42, %p43
    %p45 = scmp.ne.s32.totalorder %s34, %s37
    %p46 = scmp.eq.s32.totalorder %s15, 3
    %p47 = por %p45, %p46
    %p48 = scmp.ne.s32.totalorder %s37, %s38
    %p49 = scmp.eq.s32.totalorder %s15, 0
    %p50 = por %p48, %p49
    %p51 = scmp.ne.s32.totalorder %s37, %s38
    %p52 = scmp.eq.s32.totalorder %s16, 3
    %p53 = por %p51, %p52
    %p55 = scmp.ne.s32.totalorder %s38, %s54
    %p56 = scmp.eq.s32.totalorder %s16, 0
    %p57 = por %p55, %p56
    %s58 = ssub.s32 %s17, %s29
    %s59 = ssub.s32 %s18, %s25
    %s60 = sor.u32 %s58, %s59
    %p61 = scmp.eq.s32.totalorder %s60, 0
    %s63 = sadd.s32 %s62, 1
    %s64 = scalar_select %p61, %s62, %s63
    %p67 = pneg %p61
    %p68 = scmp.eq.s32.totalorder %s10, 3
    %p69 = por %p67, %p68
    %p70 = scmp.ne.s32.totalorder %s62, %s65
    %p71 = scmp.eq.s32.totalorder %s10, 0
    %p72 = por %p70, %p71
    %p73 = scmp.ne.s32.totalorder %s62, %s65
    %p74 = scmp.eq.s32.totalorder %s15, 3
    %p75 = por %p73, %p74
    %p76 = scmp.ne.s32.totalorder %s65, %s66
    %p77 = scmp.eq.s32.totalorder %s15, 0
    %p78 = por %p76, %p77
    %p79 = scmp.ne.s32.totalorder %s65, %s66
    %p80 = scmp.eq.s32.totalorder %s16, 3
    %p81 = por %p79, %p80
    %p83 = scmp.ne.s32.totalorder %s66, %s82
    %p84 = scmp.eq.s32.totalorder %s16, 0
    %p85 = por %p83, %p84
    %s87 = sadd.s32 %s86, 1
    %p90 = scmp.eq.s32.totalorder %s10, 3
    %p91 = scmp.ne.s32.totalorder %s86, %s88
    %p92 = scmp.eq.s32.totalorder %s10, 0
    %p93 = por %p91, %p92
    %p94 = scmp.ne.s32.totalorder %s86, %s88
    %p95 = scmp.eq.s32.totalorder %s15, 3
    %p96 = por %p94, %p95
    %p97 = scmp.ne.s32.totalorder %s88, %s89
    %p98 = scmp.eq.s32.totalorder %s15, 0
    %p99 = por %p97, %p98
    %p100 = scmp.ne.s32.totalorder %s88, %s89
    %p101 = scmp.eq.s32.totalorder %s16, 3
    %p102 = por %p100, %p101
    %p104 = scmp.ne.s32.totalorder %s89, %s103
    %p105 = scmp.eq.s32.totalorder %s16, 0
    %p106 = por %p104, %p105
    %s108 = sadd.s32 %s107, 1
    %p111 = scmp.eq.s32.totalorder %s10, 3
    %p112 = scmp.ne.s32.totalorder %s107, %s109
    %p113 = scmp.eq.s32.totalorder %s10, 0
    %p114 = por %p112, %p113
    %p115 = scmp.ne.s32.totalorder %s107, %s109
    %p116 = scmp.eq.s32.totalorder %s15, 3
    %p117 = por %p115, %p116
    %p118 = scmp.ne.s32.totalorder %s109, %s110
    %p119 = scmp.eq.s32.totalorder %s15, 0
    %p120 = por %p118, %p119
    %p121 = scmp.ne.s32.totalorder %s109, %s110
    %p122 = scmp.eq.s32.totalorder %s16, 3
    %p123 = por %p121, %p122
    %p125 = scmp.ne.s32.totalorder %s110, %s124
    %p126 = scmp.eq.s32.totalorder %s16, 0
    %p127 = por %p125, %p126
    %s128 = ssub.s32 %s17, %s29
    %s129 = ssub.s32 %s18, %s25
    %s130 = sor.u32 %s128, %s129
    %p131 = scmp.eq.s32.totalorder %s130, 0
    %s133 = sadd.s32 %s132, 1
    %s134 = scalar_select %p131, %s132, %s133
    %p137 = pneg %p131
    %p138 = scmp.eq.s32.totalorder %s10, 3
    %p139 = por %p137, %p138
    %p140 = scmp.ne.s32.totalorder %s132, %s135
    %p141 = scmp.eq.s32.totalorder %s10, 0
    %p142 = por %p140, %p141
    %p143 = scmp.ne.s32.totalorder %s132, %s135
    %p144 = scmp.eq.s32.totalorder %s15, 3
    %p145 = por %p143, %p144
    %p146 = scmp.ne.s32.totalorder %s135, %s136
    %p147 = scmp.eq.s32.totalorder %s15, 0
    %p148 = por %p146, %p147
    %p149 = scmp.ne.s32.totalorder %s135, %s136
    %p150 = scmp.eq.s32.totalorder %s16, 3
    %p151 = por %p149, %p150
    %p153 = scmp.ne.s32.totalorder %s136, %s152
    %p154 = scmp.eq.s32.totalorder %s16, 0
    %p155 = por %p153, %p154
    %p156 = scmp.le.s32.totalorder 1, %s10
    %p157 = scmp.lt.s32.totalorder %s10, 5
    %p158 = pnand %p156, %p157
    %p159 = pneg %p158
    // Predicated region
    $region9: #{res_context_block.5} parent=5 // pred_check
      _
    $region10: #{res_context_block.5} parent=5 // pred_check_branch
      %161 = sbr.rel (%p158) target = $region12
    $region11: #{res_context_block.5} parent=5 // pred_region
      %s162 = ssub.s32 %s10, 1
      // Predicated region
      $region13: #{res_context_block.5} parent=11 // pred_check
        %p163 = pneg %p99
      $region14: #{res_context_block.5} parent=11 // pred_check_branch
        %165 = sbr.rel (%p163) target = $region16
      $region15: #{res_context_block.5} parent=11 // pred_region
        _
      $region16: #{res_context_block.5} parent=11 // pred_fallthru
        _
      // Predicated region
      $region17: #{res_context_block.5} parent=11 // pred_check
        %p166 = pneg %p120
      $region18: #{res_context_block.5} parent=11 // pred_check_branch
        %168 = sbr.rel (%p166) target = $region20
      $region19: #{res_context_block.5} parent=11 // pred_region
        _
      $region20: #{res_context_block.5} parent=11 // pred_fallthru
        _
    $region12: #{res_context_block.5} parent=5 // pred_fallthru
      _
    %p169 = scmp.lt.s32.totalorder %s10, 4
    // Predicated region
    $region21: #{res_context_block.5} parent=5 // pred_check
      %p170 = pneg %p169
    $region22: #{res_context_block.5} parent=5 // pred_check_branch
      %172 = sbr.rel (%p170) target = $region24
    $region23: #{res_context_block.5} parent=5 // pred_region
      // Predicated region
      $region25: #{res_context_block.5} parent=23 // pred_check
        %p173 = pneg %p44
      $region26: #{res_context_block.5} parent=23 // pred_check_branch
        %175 = sbr.rel (%p173) target = $region28
      $region27: #{res_context_block.5} parent=23 // pred_region
        %p176 = scmp.lt.s32.totalorder %s17, 1
        %s177 = scalar_select %p176, %s17, 1
        %p178 = scmp.lt.s32.totalorder %s18, 1
        %s179 = scalar_select %p178, %s18, 1
        %s180 = smul.addr %s177, 2
        %s181 = sadd.s32 %s179, %s180
        %s182 = smul.addr %s181, 8
        %s183 = scalar_lea.vmem %s0, %s182
      $region28: #{res_context_block.5} parent=23 // pred_fallthru
        _
      // Predicated region
      $region29: #{res_context_block.5} parent=23 // pred_check
        %p184 = pneg %p72
      $region30: #{res_context_block.5} parent=23 // pred_check_branch
        %186 = sbr.rel (%p184) target = $region32
      $region31: #{res_context_block.5} parent=23 // pred_region
        %p187 = scmp.lt.s32.totalorder %s17, 1
        %s188 = scalar_select %p187, %s17, 1
        %p189 = scmp.lt.s32.totalorder %s18, 1
        %s190 = scalar_select %p189, %s18, 1
        %s191 = smul.addr %s188, 2
        %s192 = sadd.s32 %s190, %s191
        %s193 = smul.addr %s192, 8
        %s194 = scalar_lea.vmem %s1, %s193
      $region32: #{res_context_block.5} parent=23 // pred_fallthru
        _
    $region24: #{res_context_block.5} parent=5 // pred_fallthru
      _
    %p195 = scmp.le.s32.totalorder 1, %s10
    %p196 = scmp.lt.s32.totalorder %s10, 5
    %p197 = pnand %p195, %p196
    %p198 = pneg %p197
    // Predicated region
    $region33: #{res_context_block.5} parent=5 // pred_check
      _
    $region34: #{res_context_block.5} parent=5 // pred_check_branch
      %200 = sbr.rel (%p197) target = $region36
    $region35: #{res_context_block.5} parent=5 // pred_region
      %s201 = ssub.s32 %s10, 1
      %p202 = scmp.lt.s32.totalorder %s19, 1
      %s203 = scalar_select %p202, %s19, 1
      %p204 = scmp.lt.s32.totalorder %s20, 1
      %s205 = scalar_select %p204, %s20, 1
      %s206 = smul.addr %s203, 2
      %s207 = sadd.s32 %s205, %s206
      %s208 = smul.addr %s207, 8
      %s209 = scalar_lea.vmem %s0, %s208
      %p210 = pneg %p50
      %p211 = pneg %p47
      %p212 = scmp.lt.s32.totalorder %s19, 1
      %s213 = scalar_select %p212, %s19, 1
      %p214 = scmp.lt.s32.totalorder %s20, 1
      %s215 = scalar_select %p214, %s20, 1
      %s216 = smul.addr %s213, 2
      %s217 = sadd.s32 %s215, %s216
      %s218 = smul.addr %s217, 8
      %s219 = scalar_lea.vmem %s1, %s218
      %p220 = pneg %p78
      %p221 = pneg %p75
      %p222 = pneg %p99
      %p223 = pneg %p96
      %p224 = pneg %p120
      %p225 = pneg %p117
      %p226 = pneg %p148
      %p227 = pneg %p145
      %p228 = scmp.lt.s32.totalorder %s19, 1
      %s229 = scalar_select %p228, %s19, 1
      %p230 = scmp.lt.s32.totalorder %s20, 1
      %s231 = scalar_select %p230, %s20, 1
      %s232 = smul.addr %s229, 2
      %s233 = sadd.s32 %s231, %s232
      %s234 = smul.addr %s233, 8
      %s235 = scalar_lea.vmem %s4, %s234
      %p236 = scmp.lt.s32.totalorder %s19, 1
      %s237 = scalar_select %p236, %s19, 1
      %p238 = scmp.lt.s32.totalorder %s20, 1
      %s239 = scalar_select %p238, %s20, 1
      %s240 = smul.addr %s237, 2
      %s241 = sadd.s32 %s239, %s240
      %s242 = smul.addr %s241, 8
      %s243 = scalar_lea.vmem %s0, %s242
      %p244 = scmp.lt.s32.totalorder %s19, 1
      %s245 = scalar_select %p244, %s19, 1
      %p246 = scmp.lt.s32.totalorder %s20, 1
      %s247 = scalar_select %p246, %s20, 1
      %s248 = smul.addr %s245, 2
      %s249 = sadd.s32 %s247, %s248
      %s250 = smul.addr %s249, 8
      %s251 = scalar_lea.vmem %s1, %s250
      %p252 = scmp.lt.s32.totalorder %s19, 1
      %s253 = scalar_select %p252, %s19, 1
      %p254 = scmp.lt.s32.totalorder %s20, 1
      %s255 = scalar_select %p254, %s20, 1
      %s256 = smul.addr %s253, 2
      %s257 = sadd.s32 %s255, %s256
      %s258 = smul.addr %s257, 8
      %s259 = scalar_lea.vmem %s4, %s258
      %v260 = vld [vmem:[%s243] sm:$0xff]
      %v261 = vld [vmem:[%s251] sm:$0xff]
      %v262 = vld [vmem:[%s2] sm:$0xff]
      %264 = vset.pattern.permute.xlu0 0
      %265 = vperm.xlu0 %264, %v262
      %v266 = vpop.permute.xlu0 %265
      %v268 = vmul.f32 %v261, %v266
      %v269 = vadd.f32 %v260, %v268
      %v270 = vld [vmem:[%s3] sm:$0xff]
      %272 = vset.pattern.permute.xlu0 0
      %273 = vperm.xlu0 %272, %v270
      %v274 = vpop.permute.xlu0 %273
      %v276 = vadd.f32 %v269, %v274
      %277 = vst [vmem:[%s259] sm:$0xff] %v276
      %p278 = scmp.lt.s32.totalorder %s19, 1
      %s279 = scalar_select %p278, %s19, 1
      %p280 = scmp.lt.s32.totalorder %s20, 1
      %s281 = scalar_select %p280, %s20, 1
      %s282 = smul.addr %s279, 2
      %s283 = sadd.s32 %s281, %s282
      %s284 = smul.addr %s283, 8
      %s285 = scalar_lea.vmem %s4, %s284
      // Predicated region
      $region37: #{res_context_block.5} parent=35 // pred_check
        %p286 = pneg %p145
      $region38: #{res_context_block.5} parent=35 // pred_check_branch
        %288 = sbr.rel (%p286) target = $region40
      $region39: #{res_context_block.5} parent=35 // pred_region
        _
      $region40: #{res_context_block.5} parent=35 // pred_fallthru
        _
    $region36: #{res_context_block.5} parent=5 // pred_fallthru
      _
    %p289 = scmp.le.s32.totalorder 2, %s10
    // Predicated region
    $region41: #{res_context_block.5} parent=5 // pred_check
      %p290 = pneg %p289
    $region42: #{res_context_block.5} parent=5 // pred_check_branch
      %292 = sbr.rel (%p290) target = $region44
    $region43: #{res_context_block.5} parent=5 // pred_region
      %s293 = ssub.s32 %s10, 2
      // Predicated region
      $region45: #{res_context_block.5} parent=43 // pred_check
        %p294 = pneg %p151
      $region46: #{res_context_block.5} parent=43 // pred_check_branch
        %296 = sbr.rel (%p294) target = $region48
      $region47: #{res_context_block.5} parent=43 // pred_region
        %p297 = scmp.lt.s32.totalorder %s21, 1
        %s298 = scalar_select %p297, %s21, 1
        %p299 = scmp.lt.s32.totalorder %s22, 1
        %s300 = scalar_select %p299, %s22, 1
        %s301 = smul.addr %s298, 2
        %s302 = sadd.s32 %s300, %s301
        %s303 = smul.addr %s302, 8
        %s304 = scalar_lea.vmem %s4, %s303
      $region48: #{res_context_block.5} parent=43 // pred_fallthru
        _
    $region44: #{res_context_block.5} parent=5 // pred_fallthru
      _
  $region6: #{res_context_block.5} parent=0 // loop_footer
    %s14 = sadd.s32 1, %s10
  $region7: #{res_context_block.5} parent=0 // loop_footer_branch
    %9 = sbr.rel target = $region3
  $region8: #{res_context_block.5} parent=0 // loop_exit
    _

// kernel: res_context_block.4
$region0: #{res_context_block.4}
  #allocation0 [shape = 'u32[]', space=smem, size = 0x4, offset = 0x4, fixed_abs, tag = 'smem constant byte address 0x4 - core index']
  #allocation1 [shape = 'u32[144,128]{1,0:T(1,128)}', space=vmem, size = 0x12000, scoped, tag = 'internal scratch']
  %s0 = inlined_call_operand.vmem [shape: f32[2,8,256], index: 0, kind: input, shape index: {}]
  %s1 = inlined_call_operand.vmem [shape: f32[8,1], index: 1, kind: input, shape index: {}]
  %s2 = inlined_call_operand.vmem [shape: f32[8,1], index: 2, kind: input, shape index: {}]
  %s3 = inlined_call_operand.vmem [shape: bf16[9,8,8], index: 3, kind: input, shape index: {}]
  %s4 = inlined_call_operand.vmem [shape: f32[8,1], index: 4, kind: input, shape index: {}]
  %s5 = inlined_call_operand.vmem [shape: f32[9,256], index: 5, kind: input, shape index: {}]
  %s6 = inlined_call_operand.vmem [shape: f32[2,8,256], index: 6, kind: output, shape index: {0}]
  %s7 = inlined_call_operand.vmem [shape: f32[2,8,2], index: 7, kind: output, shape index: {1}]
  %8 = xla_tuple %s6, %s7
  %s9 = sld [smem:[#allocation0]]
  $region65: #{res_context_block.4} parent=0
    _
  %s11 = ssub.s32 1, %s9
  %s12 = scalar_select 0, %s11, %s9
  loop: start=0, step=1, limit=4
  $region2: #{res_context_block.4} parent=0 // loop_pre_header
    _
  $region3: #{res_context_block.4} parent=0 // loop_header
    %s14 = sphi 0, %s18
    %p15 = scmp.ge.s32.totalorder %s14, 4
    %s24 = sphi 0, %s26
    %s27 = sphi 0, %s24
    %s28 = sphi 0, %s27
    %s44 = sphi 0, %s28
    %s48 = sphi 0, %s48
    %s50 = sphi 0, %s48
    %s51 = sphi 0, %s50
    %s65 = sphi 0, %s51
    %s69 = sphi 0, %s69
    %s71 = sphi 0, %s69
    %s72 = sphi 0, %s71
    %s86 = sphi 0, %s72
    %s90 = sphi 0, %s90
    %s92 = sphi 0, %s90
    %s93 = sphi 0, %s92
    %s107 = sphi 0, %s93
    %s111 = sphi 0, %s111
    %s113 = sphi 0, %s111
    %s114 = sphi 0, %s113
    %s128 = sphi 0, %s114
    %s132 = sphi 0, %s132
    %s134 = sphi 0, %s132
    %s135 = sphi 0, %s134
    %s149 = sphi 0, %s135
    %s155 = sphi 0, %s157
    %s158 = sphi 0, %s155
    %s159 = sphi 0, %s158
    %s175 = sphi 0, %s159
    %s181 = sphi 0, %s183
    %s184 = sphi 0, %s181
    %s185 = sphi 0, %s184
    %s201 = sphi 0, %s185
  $region4: #{res_context_block.4} parent=0 // loop_header_branch
    %17 = sbr.rel (%p15) target = $region8
  $region5: #{res_context_block.4} parent=0 // loop_body
    %s19 = ssub.s32 %s14, 1
    %s20 = ssub.s32 %s14, 2
    %s21 = sadd.s32 %s14, 1
    %s22 = ssub.s32 %s14, %s21
    %p23 = scmp.eq.s32.totalorder %s22, 0
    %s25 = sadd.s32 %s24, 1
    %s26 = scalar_select %p23, %s24, %s25
    %p29 = pneg %p23
    %p30 = scmp.eq.s32.totalorder %s14, 1
    %p31 = por %p29, %p30
    %p32 = scmp.ne.s32.totalorder %s24, %s27
    %p33 = scmp.eq.s32.totalorder %s14, 0
    %p34 = por %p32, %p33
    %p35 = scmp.ne.s32.totalorder %s24, %s27
    %p36 = scmp.eq.s32.totalorder %s19, 1
    %p37 = por %p35, %p36
    %p38 = scmp.ne.s32.totalorder %s27, %s28
    %p39 = scmp.eq.s32.totalorder %s19, 0
    %p40 = por %p38, %p39
    %p41 = scmp.ne.s32.totalorder %s27, %s28
    %p42 = scmp.eq.s32.totalorder %s20, 1
    %p43 = por %p41, %p42
    %p45 = scmp.ne.s32.totalorder %s28, %s44
    %p46 = scmp.eq.s32.totalorder %s20, 0
    %p47 = por %p45, %p46
    %s49 = sadd.s32 %s48, 1
    %p52 = scmp.eq.s32.totalorder %s14, 1
    %p53 = scmp.ne.s32.totalorder %s48, %s50
    %p54 = scmp.eq.s32.totalorder %s14, 0
    %p55 = por %p53, %p54
    %p56 = scmp.ne.s32.totalorder %s48, %s50
    %p57 = scmp.eq.s32.totalorder %s19, 1
    %p58 = por %p56, %p57
    %p59 = scmp.ne.s32.totalorder %s50, %s51
    %p60 = scmp.eq.s32.totalorder %s19, 0
    %p61 = por %p59, %p60
    %p62 = scmp.ne.s32.totalorder %s50, %s51
    %p63 = scmp.eq.s32.totalorder %s20, 1
    %p64 = por %p62, %p63
    %p66 = scmp.ne.s32.totalorder %s51, %s65
    %p67 = scmp.eq.s32.totalorder %s20, 0
    %p68 = por %p66, %p67
    %s70 = sadd.s32 %s69, 1
    %p73 = scmp.eq.s32.totalorder %s14, 1
    %p74 = scmp.ne.s32.totalorder %s69, %s71
    %p75 = scmp.eq.s32.totalorder %s14, 0
    %p76 = por %p74, %p75
    %p77 = scmp.ne.s32.totalorder %s69, %s71
    %p78 = scmp.eq.s32.totalorder %s19, 1
    %p79 = por %p77, %p78
    %p80 = scmp.ne.s32.totalorder %s71, %s72
    %p81 = scmp.eq.s32.totalorder %s19, 0
    %p82 = por %p80, %p81
    %p83 = scmp.ne.s32.totalorder %s71, %s72
    %p84 = scmp.eq.s32.totalorder %s20, 1
    %p85 = por %p83, %p84
    %p87 = scmp.ne.s32.totalorder %s72, %s86
    %p88 = scmp.eq.s32.totalorder %s20, 0
    %p89 = por %p87, %p88
    %s91 = sadd.s32 %s90, 1
    %p94 = scmp.eq.s32.totalorder %s14, 1
    %p95 = scmp.ne.s32.totalorder %s90, %s92
    %p96 = scmp.eq.s32.totalorder %s14, 0
    %p97 = por %p95, %p96
    %p98 = scmp.ne.s32.totalorder %s90, %s92
    %p99 = scmp.eq.s32.totalorder %s19, 1
    %p100 = por %p98, %p99
    %p101 = scmp.ne.s32.totalorder %s92, %s93
    %p102 = scmp.eq.s32.totalorder %s19, 0
    %p103 = por %p101, %p102
    %p104 = scmp.ne.s32.totalorder %s92, %s93
    %p105 = scmp.eq.s32.totalorder %s20, 1
    %p106 = por %p104, %p105
    %p108 = scmp.ne.s32.totalorder %s93, %s107
    %p109 = scmp.eq.s32.totalorder %s20, 0
    %p110 = por %p108, %p109
    %s112 = sadd.s32 %s111, 1
    %p115 = scmp.eq.s32.totalorder %s14, 1
    %p116 = scmp.ne.s32.totalorder %s111, %s113
    %p117 = scmp.eq.s32.totalorder %s14, 0
    %p118 = por %p116, %p117
    %p119 = scmp.ne.s32.totalorder %s111, %s113
    %p120 = scmp.eq.s32.totalorder %s19, 1
    %p121 = por %p119, %p120
    %p122 = scmp.ne.s32.totalorder %s113, %s114
    %p123 = scmp.eq.s32.totalorder %s19, 0
    %p124 = por %p122, %p123
    %p125 = scmp.ne.s32.totalorder %s113, %s114
    %p126 = scmp.eq.s32.totalorder %s20, 1
    %p127 = por %p125, %p126
    %p129 = scmp.ne.s32.totalorder %s114, %s128
    %p130 = scmp.eq.s32.totalorder %s20, 0
    %p131 = por %p129, %p130
    %s133 = sadd.s32 %s132, 1
    %p136 = scmp.eq.s32.totalorder %s14, 1
    %p137 = scmp.ne.s32.totalorder %s132, %s134
    %p138 = scmp.eq.s32.totalorder %s14, 0
    %p139 = por %p137, %p138
    %p140 = scmp.ne.s32.totalorder %s132, %s134
    %p141 = scmp.eq.s32.totalorder %s19, 1
    %p142 = por %p140, %p141
    %p143 = scmp.ne.s32.totalorder %s134, %s135
    %p144 = scmp.eq.s32.totalorder %s19, 0
    %p145 = por %p143, %p144
    %p146 = scmp.ne.s32.totalorder %s134, %s135
    %p147 = scmp.eq.s32.totalorder %s20, 1
    %p148 = por %p146, %p147
    %p150 = scmp.ne.s32.totalorder %s135, %s149
    %p151 = scmp.eq.s32.totalorder %s20, 0
    %p152 = por %p150, %p151
    %s153 = ssub.s32 %s14, %s21
    %p154 = scmp.eq.s32.totalorder %s153, 0
    %s156 = sadd.s32 %s155, 1
    %s157 = scalar_select %p154, %s155, %s156
    %p160 = pneg %p154
    %p161 = scmp.eq.s32.totalorder %s14, 1
    %p162 = por %p160, %p161
    %p163 = scmp.ne.s32.totalorder %s155, %s158
    %p164 = scmp.eq.s32.totalorder %s14, 0
    %p165 = por %p163, %p164
    %p166 = scmp.ne.s32.totalorder %s155, %s158
    %p167 = scmp.eq.s32.totalorder %s19, 1
    %p168 = por %p166, %p167
    %p169 = scmp.ne.s32.totalorder %s158, %s159
    %p170 = scmp.eq.s32.totalorder %s19, 0
    %p171 = por %p169, %p170
    %p172 = scmp.ne.s32.totalorder %s158, %s159
    %p173 = scmp.eq.s32.totalorder %s20, 1
    %p174 = por %p172, %p173
    %p176 = scmp.ne.s32.totalorder %s159, %s175
    %p177 = scmp.eq.s32.totalorder %s20, 0
    %p178 = por %p176, %p177
    %s179 = ssub.s32 %s14, %s21
    %p180 = scmp.eq.s32.totalorder %s179, 0
    %s182 = sadd.s32 %s181, 1
    %s183 = scalar_select %p180, %s181, %s182
    %p186 = pneg %p180
    %p187 = scmp.eq.s32.totalorder %s14, 1
    %p188 = por %p186, %p187
    %p189 = scmp.ne.s32.totalorder %s181, %s184
    %p190 = scmp.eq.s32.totalorder %s14, 0
    %p191 = por %p189, %p190
    %p192 = scmp.ne.s32.totalorder %s181, %s184
    %p193 = scmp.eq.s32.totalorder %s19, 1
    %p194 = por %p192, %p193
    %p195 = scmp.ne.s32.totalorder %s184, %s185
    %p196 = scmp.eq.s32.totalorder %s19, 0
    %p197 = por %p195, %p196
    %p198 = scmp.ne.s32.totalorder %s184, %s185
    %p199 = scmp.eq.s32.totalorder %s20, 1
    %p200 = por %p198, %p199
    %p202 = scmp.ne.s32.totalorder %s185, %s201
    %p203 = scmp.eq.s32.totalorder %s20, 0
    %p204 = por %p202, %p203
    %p205 = scmp.le.s32.totalorder 1, %s14
    %p206 = scmp.lt.s32.totalorder %s14, 3
    %p207 = pnand %p205, %p206
    %p208 = pneg %p207
    // Predicated region
    $region9: #{res_context_block.4} parent=5 // pred_check
      _
    $region10: #{res_context_block.4} parent=5 // pred_check_branch
      %210 = sbr.rel (%p207) target = $region12
    $region11: #{res_context_block.4} parent=5 // pred_region
      %s211 = ssub.s32 %s14, 1
      // Predicated region
      $region13: #{res_context_block.4} parent=11 // pred_check
        %p212 = pneg %p61
      $region14: #{res_context_block.4} parent=11 // pred_check_branch
        %214 = sbr.rel (%p212) target = $region16
      $region15: #{res_context_block.4} parent=11 // pred_region
        _
      $region16: #{res_context_block.4} parent=11 // pred_fallthru
        _
      // Predicated region
      $region17: #{res_context_block.4} parent=11 // pred_check
        %p215 = pneg %p82
      $region18: #{res_context_block.4} parent=11 // pred_check_branch
        %217 = sbr.rel (%p215) target = $region20
      $region19: #{res_context_block.4} parent=11 // pred_region
        _
      $region20: #{res_context_block.4} parent=11 // pred_fallthru
        _
      // Predicated region
      $region21: #{res_context_block.4} parent=11 // pred_check
        %p218 = pneg %p103
      $region22: #{res_context_block.4} parent=11 // pred_check_branch
        %220 = sbr.rel (%p218) target = $region24
      $region23: #{res_context_block.4} parent=11 // pred_region
        _
      $region24: #{res_context_block.4} parent=11 // pred_fallthru
        _
      // Predicated region
      $region25: #{res_context_block.4} parent=11 // pred_check
        %p221 = pneg %p124
      $region26: #{res_context_block.4} parent=11 // pred_check_branch
        %223 = sbr.rel (%p221) target = $region28
      $region27: #{res_context_block.4} parent=11 // pred_region
        _
      $region28: #{res_context_block.4} parent=11 // pred_fallthru
        _
      // Predicated region
      $region29: #{res_context_block.4} parent=11 // pred_check
        %p224 = pneg %p145
      $region30: #{res_context_block.4} parent=11 // pred_check_branch
        %226 = sbr.rel (%p224) target = $region32
      $region31: #{res_context_block.4} parent=11 // pred_region
        _
      $region32: #{res_context_block.4} parent=11 // pred_fallthru
        _
    $region12: #{res_context_block.4} parent=5 // pred_fallthru
      _
    %p227 = scmp.lt.s32.totalorder %s14, 2
    // Predicated region
    $region33: #{res_context_block.4} parent=5 // pred_check
      %p228 = pneg %p227
    $region34: #{res_context_block.4} parent=5 // pred_check_branch
      %230 = sbr.rel (%p228) target = $region36
    $region35: #{res_context_block.4} parent=5 // pred_region
      // Predicated region
      $region37: #{res_context_block.4} parent=35 // pred_check
        %p231 = pneg %p34
      $region38: #{res_context_block.4} parent=35 // pred_check_branch
        %233 = sbr.rel (%p231) target = $region40
      $region39: #{res_context_block.4} parent=35 // pred_region
        %p234 = scmp.lt.s32.totalorder %s14, 1
        %s235 = scalar_select %p234, %s14, 1
        %s236 = smul.addr %s235, 2
        %s237 = smul.addr %s236, 8
        %s238 = scalar_lea.vmem %s0, %s237
      $region40: #{res_context_block.4} parent=35 // pred_fallthru
        _
    $region36: #{res_context_block.4} parent=5 // pred_fallthru
      _
    %p239 = scmp.le.s32.totalorder 1, %s14
    %p240 = scmp.lt.s32.totalorder %s14, 3
    %p241 = pnand %p239, %p240
    %p242 = pneg %p241
    // Predicated region
    $region41: #{res_context_block.4} parent=5 // pred_check
      _
    $region42: #{res_context_block.4} parent=5 // pred_check_branch
      %244 = sbr.rel (%p241) target = $region44
    $region43: #{res_context_block.4} parent=5 // pred_region
      %s245 = ssub.s32 %s14, 1
      %p246 = scmp.lt.s32.totalorder %s19, 1
      %s247 = scalar_select %p246, %s19, 1
      %s248 = smul.addr %s247, 2
      %s249 = smul.addr %s248, 8
      %s250 = scalar_lea.vmem %s0, %s249
      %p251 = pneg %p40
      %p252 = pneg %p37
      %p253 = pneg %p61
      %p254 = pneg %p58
      %p255 = pneg %p82
      %p256 = pneg %p79
      %p257 = pneg %p103
      %p258 = pneg %p100
      %p259 = pneg %p124
      %p260 = pneg %p121
      %p261 = pneg %p145
      %p262 = pneg %p142
      %p263 = pneg %p171
      %p264 = pneg %p168
      %p265 = scmp.lt.s32.totalorder %s19, 1
      %s266 = scalar_select %p265, %s19, 1
      %s267 = smul.addr %s266, 2
      %s268 = smul.addr %s267, 8
      %s269 = scalar_lea.vmem %s6, %s268
      %p270 = pneg %p197
      %p271 = pneg %p194
      %p272 = scmp.lt.s32.totalorder %s19, 1
      %s273 = scalar_select %p272, %s19, 1
      %s274 = smul.addr %s273, 8
      %s275 = scalar_lea.vmem %s7, %s274
      %p276 = scmp.lt.s32.totalorder %s19, 1
      %s277 = scalar_select %p276, %s19, 1
      %s278 = smul.addr %s277, 2
      %s279 = smul.addr %s278, 8
      %s280 = scalar_lea.vmem %s0, %s279
      %p281 = scmp.lt.s32.totalorder %s19, 1
      %s282 = scalar_select %p281, %s19, 1
      %s283 = smul.addr %s282, 2
      %s284 = smul.addr %s283, 8
      %s285 = scalar_lea.vmem %s6, %s284
      %p286 = scmp.lt.s32.totalorder %s19, 1
      %s287 = scalar_select %p286, %s19, 1
      %s288 = smul.addr %s287, 8
      %s289 = scalar_lea.vmem %s7, %s288
      %v291 = vld [vmem:[%s280] sm:$0xff]
      %v292 = vld [vmem:[%s280 + $0x8] sm:$0xff]
      %v293 = vld [vmem:[%s1] sm:$0xff]
      %295 = vset.pattern.permute.xlu0 0
      %296 = vperm.xlu0 %295, %v293
      %v297 = vpop.permute.xlu0 %296
      %v299 = vmul.f32 %v291, %v297
      %v300 = vmul.f32 %v292, %v297
      %v301 = vld [vmem:[%s2] sm:$0xff]
      %303 = vset.pattern.permute.xlu0 0
      %304 = vperm.xlu0 %303, %v301
      %v305 = vpop.permute.xlu0 %304
      %v307 = vadd.f32 %v299, %v305
      %v308 = vadd.f32 %v300, %v305
      %309 = vrot.lane.b32.xlu0 %v307, 34
      %v310 = vpop.permute.xlu0 %309
      %311 = vrot.lane.b32.xlu0 %v308, 34
      %v312 = vpop.permute.xlu0 %311
      %v313 = vlaneseq
      %v314 = vand.u32 %v313, 127
      %vm315 = vcmp.lt.s32.totalorder %v314, 34
      %v316 = vsel %vm315, %v310, %v312
      %v317 = vsel %vm315, %v312, %v310
      %v318 = vld [vmem:[%s5] ss:$8 sm:$0x3]
      %v320 = vlaneseq
      %v321 = vshrl.u32 %v320, 7
      %v322 = vsub.s32 0, %v321
      %v323 = vrot.slane %v318, %v322
      %v324 = vlaneseq
      %v325 = vshrl.u32 %v324, 7
      %v326 = vsub.s32 1, %v325
      %v327 = vrot.slane %v318, %v326
      %v330 = vmul.f32 %v317, %v323
      %v331 = vmul.f32 %v316, %v327
      %v332 = vpack.c.bf16 %v330, %v330
      %v333 = vpack.c.bf16 %v331, %v331
      %v334 = vld [vmem:[%s3] sm:$0xf]
      %335 = vrot.lane.b32.xlu0 %v307, 32
      %v336 = vpop.permute.xlu0 %335
      %337 = vrot.lane.b32.xlu0 %v308, 32
      %v338 = vpop.permute.xlu0 %337
      %vm339 = vcmp.lt.s32.totalorder %v314, 32
      %v340 = vsel %vm339, %v336, %v338
      %v341 = vsel %vm339, %v338, %v336
      %s342 = scalar_lea.vmem %s5, 1
      %v343 = vld [vmem:[%s342] ss:$8 sm:$0x3]
      %v345 = vlaneseq
      %v346 = vshrl.u32 %v345, 7
      %v347 = vsub.s32 0, %v346
      %v348 = vrot.slane %v343, %v347
      %v349 = vlaneseq
      %v350 = vshrl.u32 %v349, 7
      %v351 = vsub.s32 1, %v350
      %v352 = vrot.slane %v343, %v351
      %v355 = vmul.f32 %v341, %v348
      %v356 = vmul.f32 %v340, %v352
      %v357 = vpack.c.bf16 %v355, %v355
      %v358 = vpack.c.bf16 %v356, %v356
      %s359 = scalar_lea.vmem %s3, 4
      %v360 = vld [vmem:[%s359] sm:$0xf]
      %vm361 = vcmask 64512
      %v363 = vsel %vm361, %v360, 0
      %vm365 = vcmask 1043456
      %v367 = vsel %vm365, %v357, 0
      %v370 = vsel %vm365, %v358, 0
      %372 = vmatprep.subr.bf16.mxu0 0
      %373 = vmatpush1.bf16.msra.mxu0 0
      %374 = vmatprep.subr.bf16.mxu0 0
      %375 = vmatpush1.bf16.msra.mxu0 0
      %376 = vmatprep.subr.bf16.mxu0 0
      %377 = vmatpush1.bf16.msra.mxu0 0
      %378 = vmatprep.subr.bf16.mxu0 0
      %379 = vmatpush1.bf16.msra.mxu0 0
      %380 = vmatprep.subr.bf16.mxu0 0
      %381 = vmatpush1.bf16.msra.mxu0 0
      %382 = vmatprep.subr.bf16.mxu0 0
      %383 = vmatpush1.bf16.msra.mxu0 0
      %384 = vmatprep.subr.bf16.mxu0 0
      %385 = vmatpush1.bf16.msra.mxu0 0
      %386 = vmatprep.subr.bf16.mxu0 %v370
      %387 = vmatpush1.bf16.msra.mxu0 %v367
      %388 = vmatprep.subr.bf16.mxu0 0
      %389 = vmatpush2.bf16.msra.mxu0 0
      %390 = vmatprep.subr.bf16.mxu0 0
      %391 = vmatpush2.bf16.msra.mxu0 0
      %392 = vmatprep.subr.bf16.mxu0 0
      %393 = vmatpush2.bf16.msra.mxu0 0
      %394 = vmatprep.subr.bf16.mxu0 0
      %395 = vmatpush2.bf16.msra.mxu0 0
      %396 = vmatprep.subr.bf16.mxu0 0
      %397 = vmatpush2.bf16.msra.mxu0 0
      %398 = vmatprep.subr.bf16.mxu0 0
      %399 = vmatpush2.bf16.msra.mxu0 0
      %400 = vmatprep.subr.bf16.mxu0 0
      %401 = vmatpush2.bf16.msra.mxu0 0
      %402 = vmatprep.subr.bf16.mxu0 0
      %403 = vmatpush2.bf16.msra.mxu0 0
      %404 = vmatprep.mubr.bf16.mxu0 0
      %405 = vmatmul.mubr.bf16.gmra.mxu0 %v363
      %v406 = vpop.f32.mrf.mxu0
      %v407 = vadd.f32 0.0, %v406
      %v408 = vpop.f32.mrf.mxu0
      %v409 = vadd.f32 0.0, %v408
      %v410 = vpop.f32.mrf.mxu0
      %v411 = vpop.f32.mrf.mxu0
      %412 = vdwg.mxu0
      %v414 = vsel %vm361, %v334, 0
      %v417 = vsel %vm365, %v332, 0
      %v420 = vsel %vm365, %v333, 0
      %422 = vmatprep.subr.bf16.mxu0 0
      %423 = vmatpush1.bf16.msra.mxu0 0
      %424 = vmatprep.subr.bf16.mxu0 0
      %425 = vmatpush1.bf16.msra.mxu0 0
      %426 = vmatprep.subr.bf16.mxu0 0
      %427 = vmatpush1.bf16.msra.mxu0 0
      %428 = vmatprep.subr.bf16.mxu0 0
      %429 = vmatpush1.bf16.msra.mxu0 0
      %430 = vmatprep.subr.bf16.mxu0 0
      %431 = vmatpush1.bf16.msra.mxu0 0
      %432 = vmatprep.subr.bf16.mxu0 0
      %433 = vmatpush1.bf16.msra.mxu0 0
      %434 = vmatprep.subr.bf16.mxu0 0
      %435 = vmatpush1.bf16.msra.mxu0 0
      %436 = vmatprep.subr.bf16.mxu0 %v420
      %437 = vmatpush1.bf16.msra.mxu0 %v417
      %438 = vmatprep.subr.bf16.mxu0 0
      %439 = vmatpush2.bf16.msra.mxu0 0
      %440 = vmatprep.subr.bf16.mxu0 0
      %441 = vmatpush2.bf16.msra.mxu0 0
      %442 = vmatprep.subr.bf16.mxu0 0
      %443 = vmatpush2.bf16.msra.mxu0 0
      %444 = vmatprep.subr.bf16.mxu0 0
      %445 = vmatpush2.bf16.msra.mxu0 0
      %446 = vmatprep.subr.bf16.mxu0 0
      %447 = vmatpush2.bf16.msra.mxu0 0
      %448 = vmatprep.subr.bf16.mxu0 0
      %449 = vmatpush2.bf16.msra.mxu0 0
      %450 = vmatprep.subr.bf16.mxu0 0
      %451 = vmatpush2.bf16.msra.mxu0 0
      %452 = vmatprep.subr.bf16.mxu0 0
      %453 = vmatpush2.bf16.msra.mxu0 0
      %454 = vmatprep.mubr.bf16.mxu0 0
      %455 = vmatmul.mubr.bf16.gmra.mxu0 %v414
      %v456 = vpop.f32.mrf.mxu0
      %v457 = vadd.f32 %v407, %v456
      %v458 = vpop.f32.mrf.mxu0
      %v459 = vadd.f32 %v409, %v458
      %v460 = vpop.f32.mrf.mxu0
      %v461 = vpop.f32.mrf.mxu0
      %462 = vdwg.mxu0
      %463 = vrot.lane.b32.xlu0 %v307, 30
      %v464 = vpop.permute.xlu0 %463
      %465 = vrot.lane.b32.xlu0 %v308, 30
      %v466 = vpop.permute.xlu0 %465
      %vm467 = vcmp.lt.s32.totalorder %v314, 30
      %v468 = vsel %vm467, %v464, %v466
      %v469 = vsel %vm467, %v466, %v464
      %s470 = scalar_lea.vmem %s5, 2
      %v471 = vld [vmem:[%s470] ss:$8 sm:$0x3]
      %v473 = vlaneseq
      %v474 = vshrl.u32 %v473, 7
      %v475 = vsub.s32 0, %v474
      %v476 = vrot.slane %v471, %v475
      %v477 = vlaneseq
      %v478 = vshrl.u32 %v477, 7
      %v479 = vsub.s32 1, %v478
      %v480 = vrot.slane %v471, %v479
      %v483 = vmul.f32 %v469, %v476
      %v484 = vmul.f32 %v468, %v480
      %v485 = vpack.c.bf16 %v483, %v483
      %v486 = vpack.c.bf16 %v484, %v484
      %s487 = scalar_lea.vmem %s3, 8
      %v488 = vld [vmem:[%s487] sm:$0xf]
      %v490 = vsel %vm361, %v488, 0
      %v493 = vsel %vm365, %v485, 0
      %v496 = vsel %vm365, %v486, 0
      %498 = vmatprep.subr.bf16.mxu0 0
      %499 = vmatpush1.bf16.msra.mxu0 0
      %500 = vmatprep.subr.bf16.mxu0 0
      %501 = vmatpush1.bf16.msra.mxu0 0
      %502 = vmatprep.subr.bf16.mxu0 0
      %503 = vmatpush1.bf16.msra.mxu0 0
      %504 = vmatprep.subr.bf16.mxu0 0
      %505 = vmatpush1.bf16.msra.mxu0 0
      %506 = vmatprep.subr.bf16.mxu0 0
      %507 = vmatpush1.bf16.msra.mxu0 0
      %508 = vmatprep.subr.bf16.mxu0 0
      %509 = vmatpush1.bf16.msra.mxu0 0
      %510 = vmatprep.subr.bf16.mxu0 0
      %511 = vmatpush1.bf16.msra.mxu0 0
      %512 = vmatprep.subr.bf16.mxu0 %v496
      %513 = vmatpush1.bf16.msra.mxu0 %v493
      %514 = vmatprep.subr.bf16.mxu0 0
      %515 = vmatpush2.bf16.msra.mxu0 0
      %516 = vmatprep.subr.bf16.mxu0 0
      %517 = vmatpush2.bf16.msra.mxu0 0
      %518 = vmatprep.subr.bf16.mxu0 0
      %519 = vmatpush2.bf16.msra.mxu0 0
      %520 = vmatprep.subr.bf16.mxu0 0
      %521 = vmatpush2.bf16.msra.mxu0 0
      %522 = vmatprep.subr.bf16.mxu0 0
      %523 = vmatpush2.bf16.msra.mxu0 0
      %524 = vmatprep.subr.bf16.mxu0 0
      %525 = vmatpush2.bf16.msra.mxu0 0
      %526 = vmatprep.subr.bf16.mxu0 0
      %527 = vmatpush2.bf16.msra.mxu0 0
      %528 = vmatprep.subr.bf16.mxu0 0
      %529 = vmatpush2.bf16.msra.mxu0 0
      %530 = vmatprep.mubr.bf16.mxu0 0
      %531 = vmatmul.mubr.bf16.gmra.mxu0 %v490
      %v532 = vpop.f32.mrf.mxu0
      %v533 = vadd.f32 0.0, %v532
      %v534 = vpop.f32.mrf.mxu0
      %v535 = vadd.f32 0.0, %v534
      %v536 = vpop.f32.mrf.mxu0
      %v537 = vpop.f32.mrf.mxu0
      %538 = vdwg.mxu0
      %v539 = vadd.f32 %v457, %v533
      %v540 = vadd.f32 %v459, %v535
      %541 = vrot.lane.b32.xlu0 %v307, 2
      %v542 = vpop.permute.xlu0 %541
      %543 = vrot.lane.b32.xlu0 %v308, 2
      %v544 = vpop.permute.xlu0 %543
      %vm545 = vcmp.lt.s32.totalorder %v314, 2
      %v546 = vsel %vm545, %v542, %v544
      %v547 = vsel %vm545, %v544, %v542
      %s548 = scalar_lea.vmem %s5, 3
      %v549 = vld [vmem:[%s548] ss:$8 sm:$0x3]
      %v551 = vlaneseq
      %v552 = vshrl.u32 %v551, 7
      %v553 = vsub.s32 0, %v552
      %v554 = vrot.slane %v549, %v553
      %v555 = vlaneseq
      %v556 = vshrl.u32 %v555, 7
      %v557 = vsub.s32 1, %v556
      %v558 = vrot.slane %v549, %v557
      %v561 = vmul.f32 %v547, %v554
      %v562 = vmul.f32 %v546, %v558
      %v563 = vpack.c.bf16 %v561, %v561
      %v564 = vpack.c.bf16 %v562, %v562
      %s565 = scalar_lea.vmem %s3, 12
      %v566 = vld [vmem:[%s565] sm:$0xf]
      %v568 = vsel %vm361, %v566, 0
      %v571 = vsel %vm365, %v563, 0
      %v574 = vsel %vm365, %v564, 0
      %576 = vmatprep.subr.bf16.mxu0 0
      %577 = vmatpush1.bf16.msra.mxu0 0
      %578 = vmatprep.subr.bf16.mxu0 0
      %579 = vmatpush1.bf16.msra.mxu0 0
      %580 = vmatprep.subr.bf16.mxu0 0
      %581 = vmatpush1.bf16.msra.mxu0 0
      %582 = vmatprep.subr.bf16.mxu0 0
      %583 = vmatpush1.bf16.msra.mxu0 0
      %584 = vmatprep.subr.bf16.mxu0 0
      %585 = vmatpush1.bf16.msra.mxu0 0
      %586 = vmatprep.subr.bf16.mxu0 0
      %587 = vmatpush1.bf16.msra.mxu0 0
      %588 = vmatprep.subr.bf16.mxu0 0
      %589 = vmatpush1.bf16.msra.mxu0 0
      %590 = vmatprep.subr.bf16.mxu0 %v574
      %591 = vmatpush1.bf16.msra.mxu0 %v571
      %592 = vmatprep.subr.bf16.mxu0 0
      %593 = vmatpush2.bf16.msra.mxu0 0
      %594 = vmatprep.subr.bf16.mxu0 0
      %595 = vmatpush2.bf16.msra.mxu0 0
      %596 = vmatprep.subr.bf16.mxu0 0
      %597 = vmatpush2.bf16.msra.mxu0 0
      %598 = vmatprep.subr.bf16.mxu0 0
      %599 = vmatpush2.bf16.msra.mxu0 0
      %600 = vmatprep.subr.bf16.mxu0 0
      %601 = vmatpush2.bf16.msra.mxu0 0
      %602 = vmatprep.subr.bf16.mxu0 0
      %603 = vmatpush2.bf16.msra.mxu0 0
      %604 = vmatprep.subr.bf16.mxu0 0
      %605 = vmatpush2.bf16.msra.mxu0 0
      %606 = vmatprep.subr.bf16.mxu0 0
      %607 = vmatpush2.bf16.msra.mxu0 0
      %608 = vmatprep.mubr.bf16.mxu0 0
      %609 = vmatmul.mubr.bf16.gmra.mxu0 %v568
      %v610 = vpop.f32.mrf.mxu0
      %v611 = vadd.f32 0.0, %v610
      %v612 = vpop.f32.mrf.mxu0
      %v613 = vadd.f32 0.0, %v612
      %v614 = vpop.f32.mrf.mxu0
      %v615 = vpop.f32.mrf.mxu0
      %616 = vdwg.mxu0
      %v617 = vadd.f32 %v539, %v611
      %v618 = vadd.f32 %v540, %v613
      %s619 = scalar_lea.vmem %s5, 4
      %v620 = vld [vmem:[%s619] ss:$8 sm:$0x3]
      %v622 = vlaneseq
      %v623 = vshrl.u32 %v622, 7
      %v624 = vsub.s32 0, %v623
      %v625 = vrot.slane %v620, %v624
      %v626 = vlaneseq
      %v627 = vshrl.u32 %v626, 7
      %v628 = vsub.s32 1, %v627
      %v629 = vrot.slane %v620, %v628
      %v632 = vmul.f32 %v307, %v625
      %v633 = vmul.f32 %v308, %v629
      %v634 = vpack.c.bf16 %v632, %v632
      %v635 = vpack.c.bf16 %v633, %v633
      %s636 = scalar_lea.vmem %s3, 16
      %v637 = vld [vmem:[%s636] sm:$0xf]
      %v639 = vsel %vm361, %v637, 0
      %v642 = vsel %vm365, %v634, 0
      %v645 = vsel %vm365, %v635, 0
      %647 = vmatprep.subr.bf16.mxu0 0
      %648 = vmatpush1.bf16.msra.mxu0 0
      %649 = vmatprep.subr.bf16.mxu0 0
      %650 = vmatpush1.bf16.msra.mxu0 0
      %651 = vmatprep.subr.bf16.mxu0 0
      %652 = vmatpush1.bf16.msra.mxu0 0
      %653 = vmatprep.subr.bf16.mxu0 0
      %654 = vmatpush1.bf16.msra.mxu0 0
      %655 = vmatprep.subr.bf16.mxu0 0
      %656 = vmatpush1.bf16.msra.mxu0 0
      %657 = vmatprep.subr.bf16.mxu0 0
      %658 = vmatpush1.bf16.msra.mxu0 0
      %659 = vmatprep.subr.bf16.mxu0 0
      %660 = vmatpush1.bf16.msra.mxu0 0
      %661 = vmatprep.subr.bf16.mxu0 %v645
      %662 = vmatpush1.bf16.msra.mxu0 %v642
      %663 = vmatprep.subr.bf16.mxu0 0
      %664 = vmatpush2.bf16.msra.mxu0 0
      %665 = vmatprep.subr.bf16.mxu0 0
      %666 = vmatpush2.bf16.msra.mxu0 0
      %667 = vmatprep.subr.bf16.mxu0 0
      %668 = vmatpush2.bf16.msra.mxu0 0
      %669 = vmatprep.subr.bf16.mxu0 0
      %670 = vmatpush2.bf16.msra.mxu0 0
      %671 = vmatprep.subr.bf16.mxu0 0
      %672 = vmatpush2.bf16.msra.mxu0 0
      %673 = vmatprep.subr.bf16.mxu0 0
      %674 = vmatpush2.bf16.msra.mxu0 0
      %675 = vmatprep.subr.bf16.mxu0 0
      %676 = vmatpush2.bf16.msra.mxu0 0
      %677 = vmatprep.subr.bf16.mxu0 0
      %678 = vmatpush2.bf16.msra.mxu0 0
      %679 = vmatprep.mubr.bf16.mxu0 0
      %680 = vmatmul.mubr.bf16.gmra.mxu0 %v639
      %v681 = vpop.f32.mrf.mxu0
      %v682 = vadd.f32 0.0, %v681
      %v683 = vpop.f32.mrf.mxu0
      %v684 = vadd.f32 0.0, %v683
      %v685 = vpop.f32.mrf.mxu0
      %v686 = vpop.f32.mrf.mxu0
      %687 = vdwg.mxu0
      %v688 = vadd.f32 %v617, %v682
      %v689 = vadd.f32 %v618, %v684
      %690 = vrot.lane.b32.xlu0 %v307, 126
      %v691 = vpop.permute.xlu0 %690
      %692 = vrot.lane.b32.xlu0 %v308, 126
      %v693 = vpop.permute.xlu0 %692
      %vm694 = vcmp.lt.s32.totalorder %v314, 126
      %v695 = vsel %vm694, %v691, %v693
      %v696 = vsel %vm694, %v693, %v691
      %s697 = scalar_lea.vmem %s5, 5
      %v698 = vld [vmem:[%s697] ss:$8 sm:$0x3]
      %v700 = vlaneseq
      %v701 = vshrl.u32 %v700, 7
      %v702 = vsub.s32 0, %v701
      %v703 = vrot.slane %v698, %v702
      %v704 = vlaneseq
      %v705 = vshrl.u32 %v704, 7
      %v706 = vsub.s32 1, %v705
      %v707 = vrot.slane %v698, %v706
      %v710 = vmul.f32 %v695, %v703
      %v711 = vmul.f32 %v696, %v707
      %v712 = vpack.c.bf16 %v710, %v710
      %v713 = vpack.c.bf16 %v711, %v711
      %s714 = scalar_lea.vmem %s3, 20
      %v715 = vld [vmem:[%s714] sm:$0xf]
      %v717 = vsel %vm361, %v715, 0
      %v720 = vsel %vm365, %v712, 0
      %v723 = vsel %vm365, %v713, 0
      %725 = vmatprep.subr.bf16.mxu0 0
      %726 = vmatpush1.bf16.msra.mxu0 0
      %727 = vmatprep.subr.bf16.mxu0 0
      %728 = vmatpush1.bf16.msra.mxu0 0
      %729 = vmatprep.subr.bf16.mxu0 0
      %730 = vmatpush1.bf16.msra.mxu0 0
      %731 = vmatprep.subr.bf16.mxu0 0
      %732 = vmatpush1.bf16.msra.mxu0 0
      %733 = vmatprep.subr.bf16.mxu0 0
      %734 = vmatpush1.bf16.msra.mxu0 0
      %735 = vmatprep.subr.bf16.mxu0 0
      %736 = vmatpush1.bf16.msra.mxu0 0
      %737 = vmatprep.subr.bf16.mxu0 0
      %738 = vmatpush1.bf16.msra.mxu0 0
      %739 = vmatprep.subr.bf16.mxu0 %v723
      %740 = vmatpush1.bf16.msra.mxu0 %v720
      %741 = vmatprep.subr.bf16.mxu0 0
      %742 = vmatpush2.bf16.msra.mxu0 0
      %743 = vmatprep.subr.bf16.mxu0 0
      %744 = vmatpush2.bf16.msra.mxu0 0
      %745 = vmatprep.subr.bf16.mxu0 0
      %746 = vmatpush2.bf16.msra.mxu0 0
      %747 = vmatprep.subr.bf16.mxu0 0
      %748 = vmatpush2.bf16.msra.mxu0 0
      %749 = vmatprep.subr.bf16.mxu0 0
      %750 = vmatpush2.bf16.msra.mxu0 0
      %751 = vmatprep.subr.bf16.mxu0 0
      %752 = vmatpush2.bf16.msra.mxu0 0
      %753 = vmatprep.subr.bf16.mxu0 0
      %754 = vmatpush2.bf16.msra.mxu0 0
      %755 = vmatprep.subr.bf16.mxu0 0
      %756 = vmatpush2.bf16.msra.mxu0 0
      %757 = vmatprep.mubr.bf16.mxu0 0
      %758 = vmatmul.mubr.bf16.gmra.mxu0 %v717
      %v759 = vpop.f32.mrf.mxu0
      %v760 = vadd.f32 0.0, %v759
      %v761 = vpop.f32.mrf.mxu0
      %v762 = vadd.f32 0.0, %v761
      %v763 = vpop.f32.mrf.mxu0
      %v764 = vpop.f32.mrf.mxu0
      %765 = vdwg.mxu0
      %v766 = vadd.f32 %v688, %v760
      %v767 = vadd.f32 %v689, %v762
      %768 = vrot.lane.b32.xlu0 %v307, 98
      %v769 = vpop.permute.xlu0 %768
      %770 = vrot.lane.b32.xlu0 %v308, 98
      %v771 = vpop.permute.xlu0 %770
      %vm772 = vcmp.lt.s32.totalorder %v314, 98
      %v773 = vsel %vm772, %v769, %v771
      %v774 = vsel %vm772, %v771, %v769
      %s775 = scalar_lea.vmem %s5, 6
      %v776 = vld [vmem:[%s775] ss:$8 sm:$0x3]
      %v778 = vlaneseq
      %v779 = vshrl.u32 %v778, 7
      %v780 = vsub.s32 0, %v779
      %v781 = vrot.slane %v776, %v780
      %v782 = vlaneseq
      %v783 = vshrl.u32 %v782, 7
      %v784 = vsub.s32 1, %v783
      %v785 = vrot.slane %v776, %v784
      %v788 = vmul.f32 %v773, %v781
      %v789 = vmul.f32 %v774, %v785
      %v790 = vpack.c.bf16 %v788, %v788
      %v791 = vpack.c.bf16 %v789, %v789
      %s792 = scalar_lea.vmem %s3, 24
      %v793 = vld [vmem:[%s792] sm:$0xf]
      %v795 = vsel %vm361, %v793, 0
      %v798 = vsel %vm365, %v790, 0
      %v801 = vsel %vm365, %v791, 0
      %803 = vmatprep.subr.bf16.mxu0 0
      %804 = vmatpush1.bf16.msra.mxu0 0
      %805 = vmatprep.subr.bf16.mxu0 0
      %806 = vmatpush1.bf16.msra.mxu0 0
      %807 = vmatprep.subr.bf16.mxu0 0
      %808 = vmatpush1.bf16.msra.mxu0 0
      %809 = vmatprep.subr.bf16.mxu0 0
      %810 = vmatpush1.bf16.msra.mxu0 0
      %811 = vmatprep.subr.bf16.mxu0 0
      %812 = vmatpush1.bf16.msra.mxu0 0
      %813 = vmatprep.subr.bf16.mxu0 0
      %814 = vmatpush1.bf16.msra.mxu0 0
      %815 = vmatprep.subr.bf16.mxu0 0
      %816 = vmatpush1.bf16.msra.mxu0 0
      %817 = vmatprep.subr.bf16.mxu0 %v801
      %818 = vmatpush1.bf16.msra.mxu0 %v798
      %819 = vmatprep.subr.bf16.mxu0 0
      %820 = vmatpush2.bf16.msra.mxu0 0
      %821 = vmatprep.subr.bf16.mxu0 0
      %822 = vmatpush2.bf16.msra.mxu0 0
      %823 = vmatprep.subr.bf16.mxu0 0
      %824 = vmatpush2.bf16.msra.mxu0 0
      %825 = vmatprep.subr.bf16.mxu0 0
      %826 = vmatpush2.bf16.msra.mxu0 0
      %827 = vmatprep.subr.bf16.mxu0 0
      %828 = vmatpush2.bf16.msra.mxu0 0
      %829 = vmatprep.subr.bf16.mxu0 0
      %830 = vmatpush2.bf16.msra.mxu0 0
      %831 = vmatprep.subr.bf16.mxu0 0
      %832 = vmatpush2.bf16.msra.mxu0 0
      %833 = vmatprep.subr.bf16.mxu0 0
      %834 = vmatpush2.bf16.msra.mxu0 0
      %835 = vmatprep.mubr.bf16.mxu0 0
      %836 = vmatmul.mubr.bf16.gmra.mxu0 %v795
      %v837 = vpop.f32.mrf.mxu0
      %v838 = vadd.f32 0.0, %v837
      %v839 = vpop.f32.mrf.mxu0
      %v840 = vadd.f32 0.0, %v839
      %v841 = vpop.f32.mrf.mxu0
      %v842 = vpop.f32.mrf.mxu0
      %843 = vdwg.mxu0
      %v844 = vadd.f32 %v766, %v838
      %v845 = vadd.f32 %v767, %v840
      %846 = vrot.lane.b32.xlu0 %v307, 96
      %v847 = vpop.permute.xlu0 %846
      %848 = vrot.lane.b32.xlu0 %v308, 96
      %v849 = vpop.permute.xlu0 %848
      %vm850 = vcmp.lt.s32.totalorder %v314, 96
      %v851 = vsel %vm850, %v847, %v849
      %v852 = vsel %vm850, %v849, %v847
      %s853 = scalar_lea.vmem %s5, 7
      %v854 = vld [vmem:[%s853] ss:$8 sm:$0x3]
      %v856 = vlaneseq
      %v857 = vshrl.u32 %v856, 7
      %v858 = vsub.s32 0, %v857
      %v859 = vrot.slane %v854, %v858
      %v860 = vlaneseq
      %v861 = vshrl.u32 %v860, 7
      %v862 = vsub.s32 1, %v861
      %v863 = vrot.slane %v854, %v862
      %v866 = vmul.f32 %v851, %v859
      %v867 = vmul.f32 %v852, %v863
      %v868 = vpack.c.bf16 %v866, %v866
      %v869 = vpack.c.bf16 %v867, %v867
      %s870 = scalar_lea.vmem %s3, 28
      %v871 = vld [vmem:[%s870] sm:$0xf]
      %v873 = vsel %vm361, %v871, 0
      %v876 = vsel %vm365, %v868, 0
      %v879 = vsel %vm365, %v869, 0
      %881 = vmatprep.subr.bf16.mxu0 0
      %882 = vmatpush1.bf16.msra.mxu0 0
      %883 = vmatprep.subr.bf16.mxu0 0
      %884 = vmatpush1.bf16.msra.mxu0 0
      %885 = vmatprep.subr.bf16.mxu0 0
      %886 = vmatpush1.bf16.msra.mxu0 0
      %887 = vmatprep.subr.bf16.mxu0 0
      %888 = vmatpush1.bf16.msra.mxu0 0
      %889 = vmatprep.subr.bf16.mxu0 0
      %890 = vmatpush1.bf16.msra.mxu0 0
      %891 = vmatprep.subr.bf16.mxu0 0
      %892 = vmatpush1.bf16.msra.mxu0 0
      %893 = vmatprep.subr.bf16.mxu0 0
      %894 = vmatpush1.bf16.msra.mxu0 0
      %895 = vmatprep.subr.bf16.mxu0 %v879
      %896 = vmatpush1.bf16.msra.mxu0 %v876
      %897 = vmatprep.subr.bf16.mxu0 0
      %898 = vmatpush2.bf16.msra.mxu0 0
      %899 = vmatprep.subr.bf16.mxu0 0
      %900 = vmatpush2.bf16.msra.mxu0 0
      %901 = vmatprep.subr.bf16.mxu0 0
      %902 = vmatpush2.bf16.msra.mxu0 0
      %903 = vmatprep.subr.bf16.mxu0 0
      %904 = vmatpush2.bf16.msra.mxu0 0
      %905 = vmatprep.subr.bf16.mxu0 0
      %906 = vmatpush2.bf16.msra.mxu0 0
      %907 = vmatprep.subr.bf16.mxu0 0
      %908 = vmatpush2.bf16.msra.mxu0 0
      %909 = vmatprep.subr.bf16.mxu0 0
      %910 = vmatpush2.bf16.msra.mxu0 0
      %911 = vmatprep.subr.bf16.mxu0 0
      %912 = vmatpush2.bf16.msra.mxu0 0
      %913 = vmatprep.mubr.bf16.mxu0 0
      %914 = vmatmul.mubr.bf16.gmra.mxu0 %v873
      %v915 = vpop.f32.mrf.mxu0
      %v916 = vadd.f32 0.0, %v915
      %v917 = vpop.f32.mrf.mxu0
      %v918 = vadd.f32 0.0, %v917
      %v919 = vpop.f32.mrf.mxu0
      %v920 = vpop.f32.mrf.mxu0
      %921 = vdwg.mxu0
      %v922 = vadd.f32 %v844, %v916
      %v923 = vadd.f32 %v845, %v918
      %924 = vrot.lane.b32.xlu0 %v307, 94
      %v925 = vpop.permute.xlu0 %924
      %926 = vrot.lane.b32.xlu0 %v308, 94
      %v927 = vpop.permute.xlu0 %926
      %vm928 = vcmp.lt.s32.totalorder %v314, 94
      %v929 = vsel %vm928, %v925, %v927
      %v930 = vsel %vm928, %v927, %v925
      %s931 = scalar_lea.vmem %s5, 16
      %v932 = vld [vmem:[%s931] ss:$8 sm:$0x3]
      %v934 = vlaneseq
      %v935 = vshrl.u32 %v934, 7
      %v936 = vsub.s32 0, %v935
      %v937 = vrot.slane %v932, %v936
      %v938 = vlaneseq
      %v939 = vshrl.u32 %v938, 7
      %v940 = vsub.s32 1, %v939
      %v941 = vrot.slane %v932, %v940
      %v944 = vmul.f32 %v929, %v937
      %v945 = vmul.f32 %v930, %v941
      %v946 = vpack.c.bf16 %v944, %v944
      %v947 = vpack.c.bf16 %v945, %v945
      %s948 = scalar_lea.vmem %s3, 32
      %v949 = vld [vmem:[%s948] sm:$0xf]
      %v951 = vsel %vm361, %v949, 0
      %v954 = vsel %vm365, %v946, 0
      %v957 = vsel %vm365, %v947, 0
      %959 = vmatprep.subr.bf16.mxu0 0
      %960 = vmatpush1.bf16.msra.mxu0 0
      %961 = vmatprep.subr.bf16.mxu0 0
      %962 = vmatpush1.bf16.msra.mxu0 0
      %963 = vmatprep.subr.bf16.mxu0 0
      %964 = vmatpush1.bf16.msra.mxu0 0
      %965 = vmatprep.subr.bf16.mxu0 0
      %966 = vmatpush1.bf16.msra.mxu0 0
      %967 = vmatprep.subr.bf16.mxu0 0
      %968 = vmatpush1.bf16.msra.mxu0 0
      %969 = vmatprep.subr.bf16.mxu0 0
      %970 = vmatpush1.bf16.msra.mxu0 0
      %971 = vmatprep.subr.bf16.mxu0 0
      %972 = vmatpush1.bf16.msra.mxu0 0
      %973 = vmatprep.subr.bf16.mxu0 %v957
      %974 = vmatpush1.bf16.msra.mxu0 %v954
      %975 = vmatprep.subr.bf16.mxu0 0
      %976 = vmatpush2.bf16.msra.mxu0 0
      %977 = vmatprep.subr.bf16.mxu0 0
      %978 = vmatpush2.bf16.msra.mxu0 0
      %979 = vmatprep.subr.bf16.mxu0 0
      %980 = vmatpush2.bf16.msra.mxu0 0
      %981 = vmatprep.subr.bf16.mxu0 0
      %982 = vmatpush2.bf16.msra.mxu0 0
      %983 = vmatprep.subr.bf16.mxu0 0
      %984 = vmatpush2.bf16.msra.mxu0 0
      %985 = vmatprep.subr.bf16.mxu0 0
      %986 = vmatpush2.bf16.msra.mxu0 0
      %987 = vmatprep.subr.bf16.mxu0 0
      %988 = vmatpush2.bf16.msra.mxu0 0
      %989 = vmatprep.subr.bf16.mxu0 0
      %990 = vmatpush2.bf16.msra.mxu0 0
      %991 = vmatprep.mubr.bf16.mxu0 0
      %992 = vmatmul.mubr.bf16.gmra.mxu0 %v951
      %v993 = vpop.f32.mrf.mxu0
      %v994 = vadd.f32 0.0, %v993
      %v995 = vpop.f32.mrf.mxu0
      %v996 = vadd.f32 0.0, %v995
      %v997 = vpop.f32.mrf.mxu0
      %v998 = vpop.f32.mrf.mxu0
      %999 = vdwg.mxu0
      %v1000 = vadd.f32 %v922, %v994
      %v1001 = vadd.f32 %v923, %v996
      %v1002 = vld [vmem:[%s4] sm:$0xff]
      %1004 = vset.pattern.permute.xlu0 0
      %1005 = vperm.xlu0 %1004, %v1002
      %v1006 = vpop.permute.xlu0 %1005
      %v1008 = vadd.f32 %v1000, %v1006
      %v1009 = vadd.f32 %v1001, %v1006
      %vm1010 = vcmp.gt.f32.partialorder %v1008, 0.0
      %vm1011 = vcmp.gt.f32.partialorder %v1009, 0.0
      %v1012 = vmul.f32 %v1008, 0.01
      %v1013 = vmul.f32 %v1009, 0.01
      %v1014 = vsel %vm1010, %v1008, %v1012
      %v1015 = vsel %vm1011, %v1009, %v1013
      %1016 = vst [vmem:[%s285] sm:$0xff] %v1014
      %1017 = vst [vmem:[%s285 + $0x8] sm:$0xff] %v1015
      %v1018 = vadd.f32 %v1014, %v1015
      %1019 = vadd.xlane.f32.xlu0 %v1018
      %v1020 = vpop.xlane.xlu0 %1019
      %v1021 = vmul.f32 %v1014, %v1014
      %v1022 = vmul.f32 %v1015, %v1015
      %v1023 = vadd.f32 %v1021, %v1022
      %1024 = vadd.xlane.f32.xlu0 %v1023
      %v1025 = vpop.xlane.xlu0 %1024
      %vm1026 = vcmask 7168
      %v1027 = vsel %vm1026, %v1020, %v1025
      %vm1028 = vcmask 15360
      %1029 = vst.msk [vmem:[%s289] sm:$0xff] %vm1028, %v1027
      %p1030 = scmp.lt.s32.totalorder %s19, 1
      %s1031 = scalar_select %p1030, %s19, 1
      %s1032 = smul.addr %s1031, 2
      %s1033 = smul.addr %s1032, 8
      %s1034 = scalar_lea.vmem %s6, %s1033
      %p1035 = scmp.lt.s32.totalorder %s19, 1
      %s1036 = scalar_select %p1035, %s19, 1
      %s1037 = smul.addr %s1036, 8
      %s1038 = scalar_lea.vmem %s7, %s1037
      // Predicated region
      $region45: #{res_context_block.4} parent=43 // pred_check
        %p1039 = pneg %p168
      $region46: #{res_context_block.4} parent=43 // pred_check_branch
        %1041 = sbr.rel (%p1039) target = $region48
      $region47: #{res_context_block.4} parent=43 // pred_region
        _
      $region48: #{res_context_block.4} parent=43 // pred_fallthru
        _
      // Predicated region
      $region49: #{res_context_block.4} parent=43 // pred_check
        %p1042 = pneg %p194
      $region50: #{res_context_block.4} parent=43 // pred_check_branch
        %1044 = sbr.rel (%p1042) target = $region52
      $region51: #{res_context_block.4} parent=43 // pred_region
        _
      $region52: #{res_context_block.4} parent=43 // pred_fallthru
        _
    $region44: #{res_context_block.4} parent=5 // pred_fallthru
      _
    %p1045 = scmp.le.s32.totalorder 2, %s14
    // Predicated region
    $region53: #{res_context_block.4} parent=5 // pred_check
      %p1046 = pneg %p1045
    $region54: #{res_context_block.4} parent=5 // pred_check_branch
      %1048 = sbr.rel (%p1046) target = $region56
    $region55: #{res_context_block.4} parent=5 // pred_region
      %s1049 = ssub.s32 %s14, 2
      // Predicated region
      $region57: #{res_context_block.4} parent=55 // pred_check
        %p1050 = pneg %p174
      $region58: #{res_context_block.4} parent=55 // pred_check_branch
        %1052 = sbr.rel (%p1050) target = $region60
      $region59: #{res_context_block.4} parent=55 // pred_region
        %p1053 = scmp.lt.s32.totalorder %s20, 1
        %s1054 = scalar_select %p1053, %s20, 1
        %s1055 = smul.addr %s1054, 2
        %s1056 = smul.addr %s1055, 8
        %s1057 = scalar_lea.vmem %s6, %s1056
      $region60: #{res_context_block.4} parent=55 // pred_fallthru
        _
      // Predicated region
      $region61: #{res_context_block.4} parent=55 // pred_check
        %p1058 = pneg %p200
      $region62: #{res_context_block.4} parent=55 // pred_check_branch
        %1060 = sbr.rel (%p1058) target = $region64
      $region63: #{res_context_block.4} parent=55 // pred_region
        %p1061 = scmp.lt.s32.totalorder %s20, 1
        %s1062 = scalar_select %p1061, %s20, 1
        %s1063 = smul.addr %s1062, 8
        %s1064 = scalar_lea.vmem %s7, %s1063
      $region64: #{res_context_block.4} parent=55 // pred_fallthru
        _
    $region56: #{res_context_block.4} parent=5 // pred_fallthru
      _
  $region6: #{res_context_block.4} parent=0 // loop_footer
    %s18 = sadd.s32 1, %s14
  $region7: #{res_context_block.4} parent=0 // loop_footer_branch
    %13 = sbr.rel target = $region3
  $region8: #{res_context_block.4} parent=0 // loop_exit
    _

// kernel: res_context_block.3
$region0: #{res_context_block.3}
  #allocation0 [shape = 'u32[]', space=smem, size = 0x4, offset = 0x4, fixed_abs, tag = 'smem constant byte address 0x4 - core index']
  #allocation1 [shape = 'u32[144,128]{1,0:T(1,128)}', space=vmem, size = 0x12000, scoped, tag = 'internal scratch']
  %s0 = inlined_call_operand.vmem [shape: f32[2,4,256], index: 0, kind: input, shape index: {}]
  %s1 = inlined_call_operand.vmem [shape: bf16[8,4], index: 1, kind: input, shape index: {}]
  %s2 = inlined_call_operand.vmem [shape: f32[8,1], index: 2, kind: input, shape index: {}]
  %s3 = inlined_call_operand.vmem [shape: bf16[9,8,8], index: 3, kind: input, shape index: {}]
  %s4 = inlined_call_operand.vmem [shape: f32[8,1], index: 4, kind: input, shape index: {}]
  %s5 = inlined_call_operand.vmem [shape: f32[9,256], index: 5, kind: input, shape index: {}]
  %s6 = inlined_call_operand.vmem [shape: f32[2,8,256], index: 6, kind: output, shape index: {0}]
  %s7 = inlined_call_operand.vmem [shape: f32[2,8,256], index: 7, kind: output, shape index: {1}]
  %s8 = inlined_call_operand.vmem [shape: f32[2,8,2], index: 8, kind: output, shape index: {2}]
  %9 = xla_tuple %s6, %s7, %s8
  %s10 = sld [smem:[#allocation0]]
  $region73: #{res_context_block.3} parent=0
    _
  %s12 = ssub.s32 1, %s10
  %s13 = scalar_select 0, %s12, %s10
  loop: start=0, step=1, limit=4
  $region2: #{res_context_block.3} parent=0 // loop_pre_header
    _
  $region3: #{res_context_block.3} parent=0 // loop_header
    %s15 = sphi 0, %s19
    %p16 = scmp.ge.s32.totalorder %s15, 4
    %s25 = sphi 0, %s27
    %s28 = sphi 0, %s25
    %s29 = sphi 0, %s28
    %s45 = sphi 0, %s29
    %s49 = sphi 0, %s49
    %s51 = sphi 0, %s49
    %s52 = sphi 0, %s51
    %s66 = sphi 0, %s52
    %s70 = sphi 0, %s70
    %s72 = sphi 0, %s70
    %s73 = sphi 0, %s72
    %s87 = sphi 0, %s73
    %s91 = sphi 0, %s91
    %s93 = sphi 0, %s91
    %s94 = sphi 0, %s93
    %s108 = sphi 0, %s94
    %s112 = sphi 0, %s112
    %s114 = sphi 0, %s112
    %s115 = sphi 0, %s114
    %s129 = sphi 0, %s115
    %s133 = sphi 0, %s133
    %s135 = sphi 0, %s133
    %s136 = sphi 0, %s135
    %s150 = sphi 0, %s136
    %s156 = sphi 0, %s158
    %s159 = sphi 0, %s156
    %s160 = sphi 0, %s159
    %s176 = sphi 0, %s160
    %s182 = sphi 0, %s184
    %s185 = sphi 0, %s182
    %s186 = sphi 0, %s185
    %s202 = sphi 0, %s186
    %s208 = sphi 0, %s210
    %s211 = sphi 0, %s208
    %s212 = sphi 0, %s211
    %s228 = sphi 0, %s212
  $region4: #{res_context_block.3} parent=0 // loop_header_branch
    %18 = sbr.rel (%p16) target = $region8
  $region5: #{res_context_block.3} parent=0 // loop_body
    %s20 = ssub.s32 %s15, 1
    %s21 = ssub.s32 %s15, 2
    %s22 = sadd.s32 %s15, 1
    %s23 = ssub.s32 %s15, %s22
    %p24 = scmp.eq.s32.totalorder %s23, 0
    %s26 = sadd.s32 %s25, 1
    %s27 = scalar_select %p24, %s25, %s26
    %p30 = pneg %p24
    %p31 = scmp.eq.s32.totalorder %s15, 1
    %p32 = por %p30, %p31
    %p33 = scmp.ne.s32.totalorder %s25, %s28
    %p34 = scmp.eq.s32.totalorder %s15, 0
    %p35 = por %p33, %p34
    %p36 = scmp.ne.s32.totalorder %s25, %s28
    %p37 = scmp.eq.s32.totalorder %s20, 1
    %p38 = por %p36, %p37
    %p39 = scmp.ne.s32.totalorder %s28, %s29
    %p40 = scmp.eq.s32.totalorder %s20, 0
    %p41 = por %p39, %p40
    %p42 = scmp.ne.s32.totalorder %s28, %s29
    %p43 = scmp.eq.s32.totalorder %s21, 1
    %p44 = por %p42, %p43
    %p46 = scmp.ne.s32.totalorder %s29, %s45
    %p47 = scmp.eq.s32.totalorder %s21, 0
    %p48 = por %p46, %p47
    %s50 = sadd.s32 %s49, 1
    %p53 = scmp.eq.s32.totalorder %s15, 1
    %p54 = scmp.ne.s32.totalorder %s49, %s51
    %p55 = scmp.eq.s32.totalorder %s15, 0
    %p56 = por %p54, %p55
    %p57 = scmp.ne.s32.totalorder %s49, %s51
    %p58 = scmp.eq.s32.totalorder %s20, 1
    %p59 = por %p57, %p58
    %p60 = scmp.ne.s32.totalorder %s51, %s52
    %p61 = scmp.eq.s32.totalorder %s20, 0
    %p62 = por %p60, %p61
    %p63 = scmp.ne.s32.totalorder %s51, %s52
    %p64 = scmp.eq.s32.totalorder %s21, 1
    %p65 = por %p63, %p64
    %p67 = scmp.ne.s32.totalorder %s52, %s66
    %p68 = scmp.eq.s32.totalorder %s21, 0
    %p69 = por %p67, %p68
    %s71 = sadd.s32 %s70, 1
    %p74 = scmp.eq.s32.totalorder %s15, 1
    %p75 = scmp.ne.s32.totalorder %s70, %s72
    %p76 = scmp.eq.s32.totalorder %s15, 0
    %p77 = por %p75, %p76
    %p78 = scmp.ne.s32.totalorder %s70, %s72
    %p79 = scmp.eq.s32.totalorder %s20, 1
    %p80 = por %p78, %p79
    %p81 = scmp.ne.s32.totalorder %s72, %s73
    %p82 = scmp.eq.s32.totalorder %s20, 0
    %p83 = por %p81, %p82
    %p84 = scmp.ne.s32.totalorder %s72, %s73
    %p85 = scmp.eq.s32.totalorder %s21, 1
    %p86 = por %p84, %p85
    %p88 = scmp.ne.s32.totalorder %s73, %s87
    %p89 = scmp.eq.s32.totalorder %s21, 0
    %p90 = por %p88, %p89
    %s92 = sadd.s32 %s91, 1
    %p95 = scmp.eq.s32.totalorder %s15, 1
    %p96 = scmp.ne.s32.totalorder %s91, %s93
    %p97 = scmp.eq.s32.totalorder %s15, 0
    %p98 = por %p96, %p97
    %p99 = scmp.ne.s32.totalorder %s91, %s93
    %p100 = scmp.eq.s32.totalorder %s20, 1
    %p101 = por %p99, %p100
    %p102 = scmp.ne.s32.totalorder %s93, %s94
    %p103 = scmp.eq.s32.totalorder %s20, 0
    %p104 = por %p102, %p103
    %p105 = scmp.ne.s32.totalorder %s93, %s94
    %p106 = scmp.eq.s32.totalorder %s21, 1
    %p107 = por %p105, %p106
    %p109 = scmp.ne.s32.totalorder %s94, %s108
    %p110 = scmp.eq.s32.totalorder %s21, 0
    %p111 = por %p109, %p110
    %s113 = sadd.s32 %s112, 1
    %p116 = scmp.eq.s32.totalorder %s15, 1
    %p117 = scmp.ne.s32.totalorder %s112, %s114
    %p118 = scmp.eq.s32.totalorder %s15, 0
    %p119 = por %p117, %p118
    %p120 = scmp.ne.s32.totalorder %s112, %s114
    %p121 = scmp.eq.s32.totalorder %s20, 1
    %p122 = por %p120, %p121
    %p123 = scmp.ne.s32.totalorder %s114, %s115
    %p124 = scmp.eq.s32.totalorder %s20, 0
    %p125 = por %p123, %p124
    %p126 = scmp.ne.s32.totalorder %s114, %s115
    %p127 = scmp.eq.s32.totalorder %s21, 1
    %p128 = por %p126, %p127
    %p130 = scmp.ne.s32.totalorder %s115, %s129
    %p131 = scmp.eq.s32.totalorder %s21, 0
    %p132 = por %p130, %p131
    %s134 = sadd.s32 %s133, 1
    %p137 = scmp.eq.s32.totalorder %s15, 1
    %p138 = scmp.ne.s32.totalorder %s133, %s135
    %p139 = scmp.eq.s32.totalorder %s15, 0
    %p140 = por %p138, %p139
    %p141 = scmp.ne.s32.totalorder %s133, %s135
    %p142 = scmp.eq.s32.totalorder %s20, 1
    %p143 = por %p141, %p142
    %p144 = scmp.ne.s32.totalorder %s135, %s136
    %p145 = scmp.eq.s32.totalorder %s20, 0
    %p146 = por %p144, %p145
    %p147 = scmp.ne.s32.totalorder %s135, %s136
    %p148 = scmp.eq.s32.totalorder %s21, 1
    %p149 = por %p147, %p148
    %p151 = scmp.ne.s32.totalorder %s136, %s150
    %p152 = scmp.eq.s32.totalorder %s21, 0
    %p153 = por %p151, %p152
    %s154 = ssub.s32 %s15, %s22
    %p155 = scmp.eq.s32.totalorder %s154, 0
    %s157 = sadd.s32 %s156, 1
    %s158 = scalar_select %p155, %s156, %s157
    %p161 = pneg %p155
    %p162 = scmp.eq.s32.totalorder %s15, 1
    %p163 = por %p161, %p162
    %p164 = scmp.ne.s32.totalorder %s156, %s159
    %p165 = scmp.eq.s32.totalorder %s15, 0
    %p166 = por %p164, %p165
    %p167 = scmp.ne.s32.totalorder %s156, %s159
    %p168 = scmp.eq.s32.totalorder %s20, 1
    %p169 = por %p167, %p168
    %p170 = scmp.ne.s32.totalorder %s159, %s160
    %p171 = scmp.eq.s32.totalorder %s20, 0
    %p172 = por %p170, %p171
    %p173 = scmp.ne.s32.totalorder %s159, %s160
    %p174 = scmp.eq.s32.totalorder %s21, 1
    %p175 = por %p173, %p174
    %p177 = scmp.ne.s32.totalorder %s160, %s176
    %p178 = scmp.eq.s32.totalorder %s21, 0
    %p179 = por %p177, %p178
    %s180 = ssub.s32 %s15, %s22
    %p181 = scmp.eq.s32.totalorder %s180, 0
    %s183 = sadd.s32 %s182, 1
    %s184 = scalar_select %p181, %s182, %s183
    %p187 = pneg %p181
    %p188 = scmp.eq.s32.totalorder %s15, 1
    %p189 = por %p187, %p188
    %p190 = scmp.ne.s32.totalorder %s182, %s185
    %p191 = scmp.eq.s32.totalorder %s15, 0
    %p192 = por %p190, %p191
    %p193 = scmp.ne.s32.totalorder %s182, %s185
    %p194 = scmp.eq.s32.totalorder %s20, 1
    %p195 = por %p193, %p194
    %p196 = scmp.ne.s32.totalorder %s185, %s186
    %p197 = scmp.eq.s32.totalorder %s20, 0
    %p198 = por %p196, %p197
    %p199 = scmp.ne.s32.totalorder %s185, %s186
    %p200 = scmp.eq.s32.totalorder %s21, 1
    %p201 = por %p199, %p200
    %p203 = scmp.ne.s32.totalorder %s186, %s202
    %p204 = scmp.eq.s32.totalorder %s21, 0
    %p205 = por %p203, %p204
    %s206 = ssub.s32 %s15, %s22
    %p207 = scmp.eq.s32.totalorder %s206, 0
    %s209 = sadd.s32 %s208, 1
    %s210 = scalar_select %p207, %s208, %s209
    %p213 = pneg %p207
    %p214 = scmp.eq.s32.totalorder %s15, 1
    %p215 = por %p213, %p214
    %p216 = scmp.ne.s32.totalorder %s208, %s211
    %p217 = scmp.eq.s32.totalorder %s15, 0
    %p218 = por %p216, %p217
    %p219 = scmp.ne.s32.totalorder %s208, %s211
    %p220 = scmp.eq.s32.totalorder %s20, 1
    %p221 = por %p219, %p220
    %p222 = scmp.ne.s32.totalorder %s211, %s212
    %p223 = scmp.eq.s32.totalorder %s20, 0
    %p224 = por %p222, %p223
    %p225 = scmp.ne.s32.totalorder %s211, %s212
    %p226 = scmp.eq.s32.totalorder %s21, 1
    %p227 = por %p225, %p226
    %p229 = scmp.ne.s32.totalorder %s212, %s228
    %p230 = scmp.eq.s32.totalorder %s21, 0
    %p231 = por %p229, %p230
    %p232 = scmp.le.s32.totalorder 1, %s15
    %p233 = scmp.lt.s32.totalorder %s15, 3
    %p234 = pnand %p232, %p233
    %p235 = pneg %p234
    // Predicated region
    $region9: #{res_context_block.3} parent=5 // pred_check
      _
    $region10: #{res_context_block.3} parent=5 // pred_check_branch
      %237 = sbr.rel (%p234) target = $region12
    $region11: #{res_context_block.3} parent=5 // pred_region
      %s238 = ssub.s32 %s15, 1
      // Predicated region
      $region13: #{res_context_block.3} parent=11 // pred_check
        %p239 = pneg %p62
      $region14: #{res_context_block.3} parent=11 // pred_check_branch
        %241 = sbr.rel (%p239) target = $region16
      $region15: #{res_context_block.3} parent=11 // pred_region
        _
      $region16: #{res_context_block.3} parent=11 // pred_fallthru
        _
      // Predicated region
      $region17: #{res_context_block.3} parent=11 // pred_check
        %p242 = pneg %p83
      $region18: #{res_context_block.3} parent=11 // pred_check_branch
        %244 = sbr.rel (%p242) target = $region20
      $region19: #{res_context_block.3} parent=11 // pred_region
        _
      $region20: #{res_context_block.3} parent=11 // pred_fallthru
        _
      // Predicated region
      $region21: #{res_context_block.3} parent=11 // pred_check
        %p245 = pneg %p104
      $region22: #{res_context_block.3} parent=11 // pred_check_branch
        %247 = sbr.rel (%p245) target = $region24
      $region23: #{res_context_block.3} parent=11 // pred_region
        _
      $region24: #{res_context_block.3} parent=11 // pred_fallthru
        _
      // Predicated region
      $region25: #{res_context_block.3} parent=11 // pred_check
        %p248 = pneg %p125
      $region26: #{res_context_block.3} parent=11 // pred_check_branch
        %250 = sbr.rel (%p248) target = $region28
      $region27: #{res_context_block.3} parent=11 // pred_region
        _
      $region28: #{res_context_block.3} parent=11 // pred_fallthru
        _
      // Predicated region
      $region29: #{res_context_block.3} parent=11 // pred_check
        %p251 = pneg %p146
      $region30: #{res_context_block.3} parent=11 // pred_check_branch
        %253 = sbr.rel (%p251) target = $region32
      $region31: #{res_context_block.3} parent=11 // pred_region
        _
      $region32: #{res_context_block.3} parent=11 // pred_fallthru
        _
    $region12: #{res_context_block.3} parent=5 // pred_fallthru
      _
    %p254 = scmp.lt.s32.totalorder %s15, 2
    // Predicated region
    $region33: #{res_context_block.3} parent=5 // pred_check
      %p255 = pneg %p254
    $region34: #{res_context_block.3} parent=5 // pred_check_branch
      %257 = sbr.rel (%p255) target = $region36
    $region35: #{res_context_block.3} parent=5 // pred_region
      // Predicated region
      $region37: #{res_context_block.3} parent=35 // pred_check
        %p258 = pneg %p35
      $region38: #{res_context_block.3} parent=35 // pred_check_branch
        %260 = sbr.rel (%p258) target = $region40
      $region39: #{res_context_block.3} parent=35 // pred_region
        %p261 = scmp.lt.s32.totalorder %s15, 1
        %s262 = scalar_select %p261, %s15, 1
        %s263 = smul.addr %s262, 2
        %s264 = smul.addr %s263, 4
        %s265 = scalar_lea.vmem %s0, %s264
      $region40: #{res_context_block.3} parent=35 // pred_fallthru
        _
    $region36: #{res_context_block.3} parent=5 // pred_fallthru
      _
    %p266 = scmp.le.s32.totalorder 1, %s15
    %p267 = scmp.lt.s32.totalorder %s15, 3
    %p268 = pnand %p266, %p267
    %p269 = pneg %p268
    // Predicated region
    $region41: #{res_context_block.3} parent=5 // pred_check
      _
    $region42: #{res_context_block.3} parent=5 // pred_check_branch
      %271 = sbr.rel (%p268) target = $region44
    $region43: #{res_context_block.3} parent=5 // pred_region
      %s272 = ssub.s32 %s15, 1
      %p273 = scmp.lt.s32.totalorder %s20, 1
      %s274 = scalar_select %p273, %s20, 1
      %s275 = smul.addr %s274, 2
      %s276 = smul.addr %s275, 4
      %s277 = scalar_lea.vmem %s0, %s276
      %p278 = pneg %p41
      %p279 = pneg %p38
      %p280 = pneg %p62
      %p281 = pneg %p59
      %p282 = pneg %p83
      %p283 = pneg %p80
      %p284 = pneg %p104
      %p285 = pneg %p101
      %p286 = pneg %p125
      %p287 = pneg %p122
      %p288 = pneg %p146
      %p289 = pneg %p143
      %p290 = pneg %p172
      %p291 = pneg %p169
      %p292 = scmp.lt.s32.totalorder %s20, 1
      %s293 = scalar_select %p292, %s20, 1
      %s294 = smul.addr %s293, 2
      %s295 = smul.addr %s294, 8
      %s296 = scalar_lea.vmem %s6, %s295
      %p297 = pneg %p198
      %p298 = pneg %p195
      %p299 = scmp.lt.s32.totalorder %s20, 1
      %s300 = scalar_select %p299, %s20, 1
      %s301 = smul.addr %s300, 2
      %s302 = smul.addr %s301, 8
      %s303 = scalar_lea.vmem %s7, %s302
      %p304 = pneg %p224
      %p305 = pneg %p221
      %p306 = scmp.lt.s32.totalorder %s20, 1
      %s307 = scalar_select %p306, %s20, 1
      %s308 = smul.addr %s307, 8
      %s309 = scalar_lea.vmem %s8, %s308
      %p310 = scmp.lt.s32.totalorder %s20, 1
      %s311 = scalar_select %p310, %s20, 1
      %s312 = smul.addr %s311, 2
      %s313 = smul.addr %s312, 4
      %s314 = scalar_lea.vmem %s0, %s313
      %p315 = scmp.lt.s32.totalorder %s20, 1
      %s316 = scalar_select %p315, %s20, 1
      %s317 = smul.addr %s316, 2
      %s318 = smul.addr %s317, 8
      %s319 = scalar_lea.vmem %s6, %s318
      %p320 = scmp.lt.s32.totalorder %s20, 1
      %s321 = scalar_select %p320, %s20, 1
      %s322 = smul.addr %s321, 2
      %s323 = smul.addr %s322, 8
      %s324 = scalar_lea.vmem %s7, %s323
      %p325 = scmp.lt.s32.totalorder %s20, 1
      %s326 = scalar_select %p325, %s20, 1
      %s327 = smul.addr %s326, 8
      %s328 = scalar_lea.vmem %s8, %s327
      %v330 = vld [vmem:[%s1] sm:$0xf]
      %v331 = vld [vmem:[%s314] sm:$0xff]
      %v333 = vcombine.high %v331, %v331
      %v335 = vpack.c.bf16 %v331, %v331
      %v336 = vpack.c.bf16 %v333, %v333
      %v337 = vld [vmem:[%s2] sm:$0xff]
      %339 = vset.pattern.permute.xlu0 0
      %340 = vperm.xlu0 %339, %v337
      %v341 = vpop.permute.xlu0 %340
      %vm343 = vcmask 31744
      %v345 = vsel %vm343, %v330, 0
      %vm347 = vcmask 1041408
      %v349 = vsel %vm347, %v335, 0
      %v352 = vsel %vm347, %v336, 0
      %354 = vmatprep.subr.bf16.mxu0 0
      %355 = vmatpush1.bf16.msra.mxu0 0
      %356 = vmatprep.subr.bf16.mxu0 0
      %357 = vmatpush1.bf16.msra.mxu0 0
      %358 = vmatprep.subr.bf16.mxu0 0
      %359 = vmatpush1.bf16.msra.mxu0 0
      %360 = vmatprep.subr.bf16.mxu0 0
      %361 = vmatpush1.bf16.msra.mxu0 0
      %362 = vmatprep.subr.bf16.mxu0 0
      %363 = vmatpush1.bf16.msra.mxu0 0
      %364 = vmatprep.subr.bf16.mxu0 0
      %365 = vmatpush1.bf16.msra.mxu0 0
      %366 = vmatprep.subr.bf16.mxu0 0
      %367 = vmatpush1.bf16.msra.mxu0 0
      %368 = vmatprep.subr.bf16.mxu0 %v352
      %369 = vmatpush1.bf16.msra.mxu0 %v349
      %370 = vmatprep.subr.bf16.mxu0 0
      %371 = vmatpush2.bf16.msra.mxu0 0
      %372 = vmatprep.subr.bf16.mxu0 0
      %373 = vmatpush2.bf16.msra.mxu0 0
      %374 = vmatprep.subr.bf16.mxu0 0
      %375 = vmatpush2.bf16.msra.mxu0 0
      %376 = vmatprep.subr.bf16.mxu0 0
      %377 = vmatpush2.bf16.msra.mxu0 0
      %378 = vmatprep.subr.bf16.mxu0 0
      %379 = vmatpush2.bf16.msra.mxu0 0
      %380 = vmatprep.subr.bf16.mxu0 0
      %381 = vmatpush2.bf16.msra.mxu0 0
      %382 = vmatprep.subr.bf16.mxu0 0
      %383 = vmatpush2.bf16.msra.mxu0 0
      %384 = vmatprep.subr.bf16.mxu0 0
      %385 = vmatpush2.bf16.msra.mxu0 0
      %386 = vmatprep.mubr.bf16.mxu0 0
      %387 = vmatmul.mubr.bf16.gmra.mxu0 %v345
      %v388 = vpop.f32.mrf.mxu0
      %v389 = vadd.f32 %v341, %v388
      %v390 = vpop.f32.mrf.mxu0
      %v391 = vadd.f32 %v341, %v390
      %v392 = vpop.f32.mrf.mxu0
      %v393 = vpop.f32.mrf.mxu0
      %394 = vdwg.mxu0
      %vm395 = vcmp.gt.f32.partialorder %v389, 0.0
      %vm396 = vcmp.gt.f32.partialorder %v391, 0.0
      %v397 = vmul.f32 %v389, 0.01
      %v398 = vmul.f32 %v391, 0.01
      %v399 = vsel %vm395, %v389, %v397
      %v400 = vsel %vm396, %v391, %v398
      %401 = vst [vmem:[%s319] sm:$0xff] %v399
      %402 = vst [vmem:[%s319 + $0x8] sm:$0xff] %v400
      %403 = vrot.lane.b32.xlu0 %v399, 17
      %v404 = vpop.permute.xlu0 %403
      %405 = vrot.lane.b32.xlu0 %v400, 17
      %v406 = vpop.permute.xlu0 %405
      %v407 = vlaneseq
      %v408 = vand.u32 %v407, 127
      %vm409 = vcmp.lt.s32.totalorder %v408, 17
      %v410 = vsel %vm409, %v404, %v406
      %v411 = vsel %vm409, %v406, %v404
      %v412 = vld [vmem:[%s5] ss:$8 sm:$0x3]
      %v414 = vlaneseq
      %v415 = vshrl.u32 %v414, 7
      %v416 = vsub.s32 0, %v415
      %v417 = vrot.slane %v412, %v416
      %v418 = vlaneseq
      %v419 = vshrl.u32 %v418, 7
      %v420 = vsub.s32 1, %v419
      %v421 = vrot.slane %v412, %v420
      %v424 = vmul.f32 %v411, %v417
      %v425 = vmul.f32 %v410, %v421
      %v426 = vpack.c.bf16 %v424, %v424
      %v427 = vpack.c.bf16 %v425, %v425
      %v428 = vld [vmem:[%s3] sm:$0xf]
      %429 = vrot.lane.b32.xlu0 %v399, 16
      %v430 = vpop.permute.xlu0 %429
      %431 = vrot.lane.b32.xlu0 %v400, 16
      %v432 = vpop.permute.xlu0 %431
      %vm433 = vcmp.lt.s32.totalorder %v408, 16
      %v434 = vsel %vm433, %v430, %v432
      %v435 = vsel %vm433, %v432, %v430
      %s436 = scalar_lea.vmem %s5, 1
      %v437 = vld [vmem:[%s436] ss:$8 sm:$0x3]
      %v439 = vlaneseq
      %v440 = vshrl.u32 %v439, 7
      %v441 = vsub.s32 0, %v440
      %v442 = vrot.slane %v437, %v441
      %v443 = vlaneseq
      %v444 = vshrl.u32 %v443, 7
      %v445 = vsub.s32 1, %v444
      %v446 = vrot.slane %v437, %v445
      %v449 = vmul.f32 %v435, %v442
      %v450 = vmul.f32 %v434, %v446
      %v451 = vpack.c.bf16 %v449, %v449
      %v452 = vpack.c.bf16 %v450, %v450
      %s453 = scalar_lea.vmem %s3, 4
      %v454 = vld [vmem:[%s453] sm:$0xf]
      %vm455 = vcmask 64512
      %v457 = vsel %vm455, %v454, 0
      %vm459 = vcmask 1043456
      %v461 = vsel %vm459, %v451, 0
      %v464 = vsel %vm459, %v452, 0
      %466 = vmatprep.subr.bf16.mxu0 0
      %467 = vmatpush1.bf16.msra.mxu0 0
      %468 = vmatprep.subr.bf16.mxu0 0
      %469 = vmatpush1.bf16.msra.mxu0 0
      %470 = vmatprep.subr.bf16.mxu0 0
      %471 = vmatpush1.bf16.msra.mxu0 0
      %472 = vmatprep.subr.bf16.mxu0 0
      %473 = vmatpush1.bf16.msra.mxu0 0
      %474 = vmatprep.subr.bf16.mxu0 0
      %475 = vmatpush1.bf16.msra.mxu0 0
      %476 = vmatprep.subr.bf16.mxu0 0
      %477 = vmatpush1.bf16.msra.mxu0 0
      %478 = vmatprep.subr.bf16.mxu0 0
      %479 = vmatpush1.bf16.msra.mxu0 0
      %480 = vmatprep.subr.bf16.mxu0 %v464
      %481 = vmatpush1.bf16.msra.mxu0 %v461
      %482 = vmatprep.subr.bf16.mxu0 0
      %483 = vmatpush2.bf16.msra.mxu0 0
      %484 = vmatprep.subr.bf16.mxu0 0
      %485 = vmatpush2.bf16.msra.mxu0 0
      %486 = vmatprep.subr.bf16.mxu0 0
      %487 = vmatpush2.bf16.msra.mxu0 0
      %488 = vmatprep.subr.bf16.mxu0 0
      %489 = vmatpush2.bf16.msra.mxu0 0
      %490 = vmatprep.subr.bf16.mxu0 0
      %491 = vmatpush2.bf16.msra.mxu0 0
      %492 = vmatprep.subr.bf16.mxu0 0
      %493 = vmatpush2.bf16.msra.mxu0 0
      %494 = vmatprep.subr.bf16.mxu0 0
      %495 = vmatpush2.bf16.msra.mxu0 0
      %496 = vmatprep.subr.bf16.mxu0 0
      %497 = vmatpush2.bf16.msra.mxu0 0
      %498 = vmatprep.mubr.bf16.mxu0 0
      %499 = vmatmul.mubr.bf16.gmra.mxu0 %v457
      %v500 = vpop.f32.mrf.mxu0
      %v501 = vadd.f32 0.0, %v500
      %v502 = vpop.f32.mrf.mxu0
      %v503 = vadd.f32 0.0, %v502
      %v504 = vpop.f32.mrf.mxu0
      %v505 = vpop.f32.mrf.mxu0
      %506 = vdwg.mxu0
      %v508 = vsel %vm455, %v428, 0
      %v511 = vsel %vm459, %v426, 0
      %v514 = vsel %vm459, %v427, 0
      %516 = vmatprep.subr.bf16.mxu0 0
      %517 = vmatpush1.bf16.msra.mxu0 0
      %518 = vmatprep.subr.bf16.mxu0 0
      %519 = vmatpush1.bf16.msra.mxu0 0
      %520 = vmatprep.subr.bf16.mxu0 0
      %521 = vmatpush1.bf16.msra.mxu0 0
      %522 = vmatprep.subr.bf16.mxu0 0
      %523 = vmatpush1.bf16.msra.mxu0 0
      %524 = vmatprep.subr.bf16.mxu0 0
      %525 = vmatpush1.bf16.msra.mxu0 0
      %526 = vmatprep.subr.bf16.mxu0 0
      %527 = vmatpush1.bf16.msra.mxu0 0
      %528 = vmatprep.subr.bf16.mxu0 0
      %529 = vmatpush1.bf16.msra.mxu0 0
      %530 = vmatprep.subr.bf16.mxu0 %v514
      %531 = vmatpush1.bf16.msra.mxu0 %v511
      %532 = vmatprep.subr.bf16.mxu0 0
      %533 = vmatpush2.bf16.msra.mxu0 0
      %534 = vmatprep.subr.bf16.mxu0 0
      %535 = vmatpush2.bf16.msra.mxu0 0
      %536 = vmatprep.subr.bf16.mxu0 0
      %537 = vmatpush2.bf16.msra.mxu0 0
      %538 = vmatprep.subr.bf16.mxu0 0
      %539 = vmatpush2.bf16.msra.mxu0 0
      %540 = vmatprep.subr.bf16.mxu0 0
      %541 = vmatpush2.bf16.msra.mxu0 0
      %542 = vmatprep.subr.bf16.mxu0 0
      %543 = vmatpush2.bf16.msra.mxu0 0
      %544 = vmatprep.subr.bf16.mxu0 0
      %545 = vmatpush2.bf16.msra.mxu0 0
      %546 = vmatprep.subr.bf16.mxu0 0
      %547 = vmatpush2.bf16.msra.mxu0 0
      %548 = vmatprep.mubr.bf16.mxu0 0
      %549 = vmatmul.mubr.bf16.gmra.mxu0 %v508
      %v550 = vpop.f32.mrf.mxu0
      %v551 = vadd.f32 %v501, %v550
      %v552 = vpop.f32.mrf.mxu0
      %v553 = vadd.f32 %v503, %v552
      %v554 = vpop.f32.mrf.mxu0
      %v555 = vpop.f32.mrf.mxu0
      %556 = vdwg.mxu0
      %557 = vrot.lane.b32.xlu0 %v399, 15
      %v558 = vpop.permute.xlu0 %557
      %559 = vrot.lane.b32.xlu0 %v400, 15
      %v560 = vpop.permute.xlu0 %559
      %vm561 = vcmp.lt.s32.totalorder %v408, 15
      %v562 = vsel %vm561, %v558, %v560
      %v563 = vsel %vm561, %v560, %v558
      %s564 = scalar_lea.vmem %s5, 2
      %v565 = vld [vmem:[%s564] ss:$8 sm:$0x3]
      %v567 = vlaneseq
      %v568 = vshrl.u32 %v567, 7
      %v569 = vsub.s32 0, %v568
      %v570 = vrot.slane %v565, %v569
      %v571 = vlaneseq
      %v572 = vshrl.u32 %v571, 7
      %v573 = vsub.s32 1, %v572
      %v574 = vrot.slane %v565, %v573
      %v577 = vmul.f32 %v563, %v570
      %v578 = vmul.f32 %v562, %v574
      %v579 = vpack.c.bf16 %v577, %v577
      %v580 = vpack.c.bf16 %v578, %v578
      %s581 = scalar_lea.vmem %s3, 8
      %v582 = vld [vmem:[%s581] sm:$0xf]
      %v584 = vsel %vm455, %v582, 0
      %v587 = vsel %vm459, %v579, 0
      %v590 = vsel %vm459, %v580, 0
      %592 = vmatprep.subr.bf16.mxu0 0
      %593 = vmatpush1.bf16.msra.mxu0 0
      %594 = vmatprep.subr.bf16.mxu0 0
      %595 = vmatpush1.bf16.msra.mxu0 0
      %596 = vmatprep.subr.bf16.mxu0 0
      %597 = vmatpush1.bf16.msra.mxu0 0
      %598 = vmatprep.subr.bf16.mxu0 0
      %599 = vmatpush1.bf16.msra.mxu0 0
      %600 = vmatprep.subr.bf16.mxu0 0
      %601 = vmatpush1.bf16.msra.mxu0 0
      %602 = vmatprep.subr.bf16.mxu0 0
      %603 = vmatpush1.bf16.msra.mxu0 0
      %604 = vmatprep.subr.bf16.mxu0 0
      %605 = vmatpush1.bf16.msra.mxu0 0
      %606 = vmatprep.subr.bf16.mxu0 %v590
      %607 = vmatpush1.bf16.msra.mxu0 %v587
      %608 = vmatprep.subr.bf16.mxu0 0
      %609 = vmatpush2.bf16.msra.mxu0 0
      %610 = vmatprep.subr.bf16.mxu0 0
      %611 = vmatpush2.bf16.msra.mxu0 0
      %612 = vmatprep.subr.bf16.mxu0 0
      %613 = vmatpush2.bf16.msra.mxu0 0
      %614 = vmatprep.subr.bf16.mxu0 0
      %615 = vmatpush2.bf16.msra.mxu0 0
      %616 = vmatprep.subr.bf16.mxu0 0
      %617 = vmatpush2.bf16.msra.mxu0 0
      %618 = vmatprep.subr.bf16.mxu0 0
      %619 = vmatpush2.bf16.msra.mxu0 0
      %620 = vmatprep.subr.bf16.mxu0 0
      %621 = vmatpush2.bf16.msra.mxu0 0
      %622 = vmatprep.subr.bf16.mxu0 0
      %623 = vmatpush2.bf16.msra.mxu0 0
      %624 = vmatprep.mubr.bf16.mxu0 0
      %625 = vmatmul.mubr.bf16.gmra.mxu0 %v584
      %v626 = vpop.f32.mrf.mxu0
      %v627 = vadd.f32 0.0, %v626
      %v628 = vpop.f32.mrf.mxu0
      %v629 = vadd.f32 0.0, %v628
      %v630 = vpop.f32.mrf.mxu0
      %v631 = vpop.f32.mrf.mxu0
      %632 = vdwg.mxu0
      %v633 = vadd.f32 %v551, %v627
      %v634 = vadd.f32 %v553, %v629
      %635 = vrot.lane.b32.xlu0 %v399, 1
      %v636 = vpop.permute.xlu0 %635
      %637 = vrot.lane.b32.xlu0 %v400, 1
      %v638 = vpop.permute.xlu0 %637
      %vm639 = vcmp.lt.s32.totalorder %v408, 1
      %v640 = vsel %vm639, %v636, %v638
      %v641 = vsel %vm639, %v638, %v636
      %s642 = scalar_lea.vmem %s5, 3
      %v643 = vld [vmem:[%s642] ss:$8 sm:$0x3]
      %v645 = vlaneseq
      %v646 = vshrl.u32 %v645, 7
      %v647 = vsub.s32 0, %v646
      %v648 = vrot.slane %v643, %v647
      %v649 = vlaneseq
      %v650 = vshrl.u32 %v649, 7
      %v651 = vsub.s32 1, %v650
      %v652 = vrot.slane %v643, %v651
      %v655 = vmul.f32 %v641, %v648
      %v656 = vmul.f32 %v640, %v652
      %v657 = vpack.c.bf16 %v655, %v655
      %v658 = vpack.c.bf16 %v656, %v656
      %s659 = scalar_lea.vmem %s3, 12
      %v660 = vld [vmem:[%s659] sm:$0xf]
      %v662 = vsel %vm455, %v660, 0
      %v665 = vsel %vm459, %v657, 0
      %v668 = vsel %vm459, %v658, 0
      %670 = vmatprep.subr.bf16.mxu0 0
      %671 = vmatpush1.bf16.msra.mxu0 0
      %672 = vmatprep.subr.bf16.mxu0 0
      %673 = vmatpush1.bf16.msra.mxu0 0
      %674 = vmatprep.subr.bf16.mxu0 0
      %675 = vmatpush1.bf16.msra.mxu0 0
      %676 = vmatprep.subr.bf16.mxu0 0
      %677 = vmatpush1.bf16.msra.mxu0 0
      %678 = vmatprep.subr.bf16.mxu0 0
      %679 = vmatpush1.bf16.msra.mxu0 0
      %680 = vmatprep.subr.bf16.mxu0 0
      %681 = vmatpush1.bf16.msra.mxu0 0
      %682 = vmatprep.subr.bf16.mxu0 0
      %683 = vmatpush1.bf16.msra.mxu0 0
      %684 = vmatprep.subr.bf16.mxu0 %v668
      %685 = vmatpush1.bf16.msra.mxu0 %v665
      %686 = vmatprep.subr.bf16.mxu0 0
      %687 = vmatpush2.bf16.msra.mxu0 0
      %688 = vmatprep.subr.bf16.mxu0 0
      %689 = vmatpush2.bf16.msra.mxu0 0
      %690 = vmatprep.subr.bf16.mxu0 0
      %691 = vmatpush2.bf16.msra.mxu0 0
      %692 = vmatprep.subr.bf16.mxu0 0
      %693 = vmatpush2.bf16.msra.mxu0 0
      %694 = vmatprep.subr.bf16.mxu0 0
      %695 = vmatpush2.bf16.msra.mxu0 0
      %696 = vmatprep.subr.bf16.mxu0 0
      %697 = vmatpush2.bf16.msra.mxu0 0
      %698 = vmatprep.subr.bf16.mxu0 0
      %699 = vmatpush2.bf16.msra.mxu0 0
      %700 = vmatprep.subr.bf16.mxu0 0
      %701 = vmatpush2.bf16.msra.mxu0 0
      %702 = vmatprep.mubr.bf16.mxu0 0
      %703 = vmatmul.mubr.bf16.gmra.mxu0 %v662
      %v704 = vpop.f32.mrf.mxu0
      %v705 = vadd.f32 0.0, %v704
      %v706 = vpop.f32.mrf.mxu0
      %v707 = vadd.f32 0.0, %v706
      %v708 = vpop.f32.mrf.mxu0
      %v709 = vpop.f32.mrf.mxu0
      %710 = vdwg.mxu0
      %v711 = vadd.f32 %v633, %v705
      %v712 = vadd.f32 %v634, %v707
      %s713 = scalar_lea.vmem %s5, 4
      %v714 = vld [vmem:[%s713] ss:$8 sm:$0x3]
      %v716 = vlaneseq
      %v717 = vshrl.u32 %v716, 7
      %v718 = vsub.s32 0, %v717
      %v719 = vrot.slane %v714, %v718
      %v720 = vlaneseq
      %v721 = vshrl.u32 %v720, 7
      %v722 = vsub.s32 1, %v721
      %v723 = vrot.slane %v714, %v722
      %v726 = vmul.f32 %v399, %v719
      %v727 = vmul.f32 %v400, %v723
      %v728 = vpack.c.bf16 %v726, %v726
      %v729 = vpack.c.bf16 %v727, %v727
      %s730 = scalar_lea.vmem %s3, 16
      %v731 = vld [vmem:[%s730] sm:$0xf]
      %v733 = vsel %vm455, %v731, 0
      %v736 = vsel %vm459, %v728, 0
      %v739 = vsel %vm459, %v729, 0
      %741 = vmatprep.subr.bf16.mxu0 0
      %742 = vmatpush1.bf16.msra.mxu0 0
      %743 = vmatprep.subr.bf16.mxu0 0
      %744 = vmatpush1.bf16.msra.mxu0 0
      %745 = vmatprep.subr.bf16.mxu0 0
      %746 = vmatpush1.bf16.msra.mxu0 0
      %747 = vmatprep.subr.bf16.mxu0 0
      %748 = vmatpush1.bf16.msra.mxu0 0
      %749 = vmatprep.subr.bf16.mxu0 0
      %750 = vmatpush1.bf16.msra.mxu0 0
      %751 = vmatprep.subr.bf16.mxu0 0
      %752 = vmatpush1.bf16.msra.mxu0 0
      %753 = vmatprep.subr.bf16.mxu0 0
      %754 = vmatpush1.bf16.msra.mxu0 0
      %755 = vmatprep.subr.bf16.mxu0 %v739
      %756 = vmatpush1.bf16.msra.mxu0 %v736
      %757 = vmatprep.subr.bf16.mxu0 0
      %758 = vmatpush2.bf16.msra.mxu0 0
      %759 = vmatprep.subr.bf16.mxu0 0
      %760 = vmatpush2.bf16.msra.mxu0 0
      %761 = vmatprep.subr.bf16.mxu0 0
      %762 = vmatpush2.bf16.msra.mxu0 0
      %763 = vmatprep.subr.bf16.mxu0 0
      %764 = vmatpush2.bf16.msra.mxu0 0
      %765 = vmatprep.subr.bf16.mxu0 0
      %766 = vmatpush2.bf16.msra.mxu0 0
      %767 = vmatprep.subr.bf16.mxu0 0
      %768 = vmatpush2.bf16.msra.mxu0 0
      %769 = vmatprep.subr.bf16.mxu0 0
      %770 = vmatpush2.bf16.msra.mxu0 0
      %771 = vmatprep.subr.bf16.mxu0 0
      %772 = vmatpush2.bf16.msra.mxu0 0
      %773 = vmatprep.mubr.bf16.mxu0 0
      %774 = vmatmul.mubr.bf16.gmra.mxu0 %v733
      %v775 = vpop.f32.mrf.mxu0
      %v776 = vadd.f32 0.0, %v775
      %v777 = vpop.f32.mrf.mxu0
      %v778 = vadd.f32 0.0, %v777
      %v779 = vpop.f32.mrf.mxu0
      %v780 = vpop.f32.mrf.mxu0
      %781 = vdwg.mxu0
      %v782 = vadd.f32 %v711, %v776
      %v783 = vadd.f32 %v712, %v778
      %784 = vrot.lane.b32.xlu0 %v399, 127
      %v785 = vpop.permute.xlu0 %784
      %786 = vrot.lane.b32.xlu0 %v400, 127
      %v787 = vpop.permute.xlu0 %786
      %vm788 = vcmp.lt.s32.totalorder %v408, 127
      %v789 = vsel %vm788, %v785, %v787
      %v790 = vsel %vm788, %v787, %v785
      %s791 = scalar_lea.vmem %s5, 5
      %v792 = vld [vmem:[%s791] ss:$8 sm:$0x3]
      %v794 = vlaneseq
      %v795 = vshrl.u32 %v794, 7
      %v796 = vsub.s32 0, %v795
      %v797 = vrot.slane %v792, %v796
      %v798 = vlaneseq
      %v799 = vshrl.u32 %v798, 7
      %v800 = vsub.s32 1, %v799
      %v801 = vrot.slane %v792, %v800
      %v804 = vmul.f32 %v789, %v797
      %v805 = vmul.f32 %v790, %v801
      %v806 = vpack.c.bf16 %v804, %v804
      %v807 = vpack.c.bf16 %v805, %v805
      %s808 = scalar_lea.vmem %s3, 20
      %v809 = vld [vmem:[%s808] sm:$0xf]
      %v811 = vsel %vm455, %v809, 0
      %v814 = vsel %vm459, %v806, 0
      %v817 = vsel %vm459, %v807, 0
      %819 = vmatprep.subr.bf16.mxu0 0
      %820 = vmatpush1.bf16.msra.mxu0 0
      %821 = vmatprep.subr.bf16.mxu0 0
      %822 = vmatpush1.bf16.msra.mxu0 0
      %823 = vmatprep.subr.bf16.mxu0 0
      %824 = vmatpush1.bf16.msra.mxu0 0
      %825 = vmatprep.subr.bf16.mxu0 0
      %826 = vmatpush1.bf16.msra.mxu0 0
      %827 = vmatprep.subr.bf16.mxu0 0
      %828 = vmatpush1.bf16.msra.mxu0 0
      %829 = vmatprep.subr.bf16.mxu0 0
      %830 = vmatpush1.bf16.msra.mxu0 0
      %831 = vmatprep.subr.bf16.mxu0 0
      %832 = vmatpush1.bf16.msra.mxu0 0
      %833 = vmatprep.subr.bf16.mxu0 %v817
      %834 = vmatpush1.bf16.msra.mxu0 %v814
      %835 = vmatprep.subr.bf16.mxu0 0
      %836 = vmatpush2.bf16.msra.mxu0 0
      %837 = vmatprep.subr.bf16.mxu0 0
      %838 = vmatpush2.bf16.msra.mxu0 0
      %839 = vmatprep.subr.bf16.mxu0 0
      %840 = vmatpush2.bf16.msra.mxu0 0
      %841 = vmatprep.subr.bf16.mxu0 0
      %842 = vmatpush2.bf16.msra.mxu0 0
      %843 = vmatprep.subr.bf16.mxu0 0
      %844 = vmatpush2.bf16.msra.mxu0 0
      %845 = vmatprep.subr.bf16.mxu0 0
      %846 = vmatpush2.bf16.msra.mxu0 0
      %847 = vmatprep.subr.bf16.mxu0 0
      %848 = vmatpush2.bf16.msra.mxu0 0
      %849 = vmatprep.subr.bf16.mxu0 0
      %850 = vmatpush2.bf16.msra.mxu0 0
      %851 = vmatprep.mubr.bf16.mxu0 0
      %852 = vmatmul.mubr.bf16.gmra.mxu0 %v811
      %v853 = vpop.f32.mrf.mxu0
      %v854 = vadd.f32 0.0, %v853
      %v855 = vpop.f32.mrf.mxu0
      %v856 = vadd.f32 0.0, %v855
      %v857 = vpop.f32.mrf.mxu0
      %v858 = vpop.f32.mrf.mxu0
      %859 = vdwg.mxu0
      %v860 = vadd.f32 %v782, %v854
      %v861 = vadd.f32 %v783, %v856
      %862 = vrot.lane.b32.xlu0 %v399, 113
      %v863 = vpop.permute.xlu0 %862
      %864 = vrot.lane.b32.xlu0 %v400, 113
      %v865 = vpop.permute.xlu0 %864
      %vm866 = vcmp.lt.s32.totalorder %v408, 113
      %v867 = vsel %vm866, %v863, %v865
      %v868 = vsel %vm866, %v865, %v863
      %s869 = scalar_lea.vmem %s5, 6
      %v870 = vld [vmem:[%s869] ss:$8 sm:$0x3]
      %v872 = vlaneseq
      %v873 = vshrl.u32 %v872, 7
      %v874 = vsub.s32 0, %v873
      %v875 = vrot.slane %v870, %v874
      %v876 = vlaneseq
      %v877 = vshrl.u32 %v876, 7
      %v878 = vsub.s32 1, %v877
      %v879 = vrot.slane %v870, %v878
      %v882 = vmul.f32 %v867, %v875
      %v883 = vmul.f32 %v868, %v879
      %v884 = vpack.c.bf16 %v882, %v882
      %v885 = vpack.c.bf16 %v883, %v883
      %s886 = scalar_lea.vmem %s3, 24
      %v887 = vld [vmem:[%s886] sm:$0xf]
      %v889 = vsel %vm455, %v887, 0
      %v892 = vsel %vm459, %v884, 0
      %v895 = vsel %vm459, %v885, 0
      %897 = vmatprep.subr.bf16.mxu0 0
      %898 = vmatpush1.bf16.msra.mxu0 0
      %899 = vmatprep.subr.bf16.mxu0 0
      %900 = vmatpush1.bf16.msra.mxu0 0
      %901 = vmatprep.subr.bf16.mxu0 0
      %902 = vmatpush1.bf16.msra.mxu0 0
      %903 = vmatprep.subr.bf16.mxu0 0
      %904 = vmatpush1.bf16.msra.mxu0 0
      %905 = vmatprep.subr.bf16.mxu0 0
      %906 = vmatpush1.bf16.msra.mxu0 0
      %907 = vmatprep.subr.bf16.mxu0 0
      %908 = vmatpush1.bf16.msra.mxu0 0
      %909 = vmatprep.subr.bf16.mxu0 0
      %910 = vmatpush1.bf16.msra.mxu0 0
      %911 = vmatprep.subr.bf16.mxu0 %v895
      %912 = vmatpush1.bf16.msra.mxu0 %v892
      %913 = vmatprep.subr.bf16.mxu0 0
      %914 = vmatpush2.bf16.msra.mxu0 0
      %915 = vmatprep.subr.bf16.mxu0 0
      %916 = vmatpush2.bf16.msra.mxu0 0
      %917 = vmatprep.subr.bf16.mxu0 0
      %918 = vmatpush2.bf16.msra.mxu0 0
      %919 = vmatprep.subr.bf16.mxu0 0
      %920 = vmatpush2.bf16.msra.mxu0 0
      %921 = vmatprep.subr.bf16.mxu0 0
      %922 = vmatpush2.bf16.msra.mxu0 0
      %923 = vmatprep.subr.bf16.mxu0 0
      %924 = vmatpush2.bf16.msra.mxu0 0
      %925 = vmatprep.subr.bf16.mxu0 0
      %926 = vmatpush2.bf16.msra.mxu0 0
      %927 = vmatprep.subr.bf16.mxu0 0
      %928 = vmatpush2.bf16.msra.mxu0 0
      %929 = vmatprep.mubr.bf16.mxu0 0
      %930 = vmatmul.mubr.bf16.gmra.mxu0 %v889
      %v931 = vpop.f32.mrf.mxu0
      %v932 = vadd.f32 0.0, %v931
      %v933 = vpop.f32.mrf.mxu0
      %v934 = vadd.f32 0.0, %v933
      %v935 = vpop.f32.mrf.mxu0
      %v936 = vpop.f32.mrf.mxu0
      %937 = vdwg.mxu0
      %v938 = vadd.f32 %v860, %v932
      %v939 = vadd.f32 %v861, %v934
      %940 = vrot.lane.b32.xlu0 %v399, 112
      %v941 = vpop.permute.xlu0 %940
      %942 = vrot.lane.b32.xlu0 %v400, 112
      %v943 = vpop.permute.xlu0 %942
      %vm944 = vcmp.lt.s32.totalorder %v408, 112
      %v945 = vsel %vm944, %v941, %v943
      %v946 = vsel %vm944, %v943, %v941
      %s947 = scalar_lea.vmem %s5, 7
      %v948 = vld [vmem:[%s947] ss:$8 sm:$0x3]
      %v950 = vlaneseq
      %v951 = vshrl.u32 %v950, 7
      %v952 = vsub.s32 0, %v951
      %v953 = vrot.slane %v948, %v952
      %v954 = vlaneseq
      %v955 = vshrl.u32 %v954, 7
      %v956 = vsub.s32 1, %v955
      %v957 = vrot.slane %v948, %v956
      %v960 = vmul.f32 %v945, %v953
      %v961 = vmul.f32 %v946, %v957
      %v962 = vpack.c.bf16 %v960, %v960
      %v963 = vpack.c.bf16 %v961, %v961
      %s964 = scalar_lea.vmem %s3, 28
      %v965 = vld [vmem:[%s964] sm:$0xf]
      %v967 = vsel %vm455, %v965, 0
      %v970 = vsel %vm459, %v962, 0
      %v973 = vsel %vm459, %v963, 0
      %975 = vmatprep.subr.bf16.mxu0 0
      %976 = vmatpush1.bf16.msra.mxu0 0
      %977 = vmatprep.subr.bf16.mxu0 0
      %978 = vmatpush1.bf16.msra.mxu0 0
      %979 = vmatprep.subr.bf16.mxu0 0
      %980 = vmatpush1.bf16.msra.mxu0 0
      %981 = vmatprep.subr.bf16.mxu0 0
      %982 = vmatpush1.bf16.msra.mxu0 0
      %983 = vmatprep.subr.bf16.mxu0 0
      %984 = vmatpush1.bf16.msra.mxu0 0
      %985 = vmatprep.subr.bf16.mxu0 0
      %986 = vmatpush1.bf16.msra.mxu0 0
      %987 = vmatprep.subr.bf16.mxu0 0
      %988 = vmatpush1.bf16.msra.mxu0 0
      %989 = vmatprep.subr.bf16.mxu0 %v973
      %990 = vmatpush1.bf16.msra.mxu0 %v970
      %991 = vmatprep.subr.bf16.mxu0 0
      %992 = vmatpush2.bf16.msra.mxu0 0
      %993 = vmatprep.subr.bf16.mxu0 0
      %994 = vmatpush2.bf16.msra.mxu0 0
      %995 = vmatprep.subr.bf16.mxu0 0
      %996 = vmatpush2.bf16.msra.mxu0 0
      %997 = vmatprep.subr.bf16.mxu0 0
      %998 = vmatpush2.bf16.msra.mxu0 0
      %999 = vmatprep.subr.bf16.mxu0 0
      %1000 = vmatpush2.bf16.msra.mxu0 0
      %1001 = vmatprep.subr.bf16.mxu0 0
      %1002 = vmatpush2.bf16.msra.mxu0 0
      %1003 = vmatprep.subr.bf16.mxu0 0
      %1004 = vmatpush2.bf16.msra.mxu0 0
      %1005 = vmatprep.subr.bf16.mxu0 0
      %1006 = vmatpush2.bf16.msra.mxu0 0
      %1007 = vmatprep.mubr.bf16.mxu0 0
      %1008 = vmatmul.mubr.bf16.gmra.mxu0 %v967
      %v1009 = vpop.f32.mrf.mxu0
      %v1010 = vadd.f32 0.0, %v1009
      %v1011 = vpop.f32.mrf.mxu0
      %v1012 = vadd.f32 0.0, %v1011
      %v1013 = vpop.f32.mrf.mxu0
      %v1014 = vpop.f32.mrf.mxu0
      %1015 = vdwg.mxu0
      %v1016 = vadd.f32 %v938, %v1010
      %v1017 = vadd.f32 %v939, %v1012
      %1018 = vrot.lane.b32.xlu0 %v399, 111
      %v1019 = vpop.permute.xlu0 %1018
      %1020 = vrot.lane.b32.xlu0 %v400, 111
      %v1021 = vpop.permute.xlu0 %1020
      %vm1022 = vcmp.lt.s32.totalorder %v408, 111
      %v1023 = vsel %vm1022, %v1019, %v1021
      %v1024 = vsel %vm1022, %v1021, %v1019
      %s1025 = scalar_lea.vmem %s5, 16
      %v1026 = vld [vmem:[%s1025] ss:$8 sm:$0x3]
      %v1028 = vlaneseq
      %v1029 = vshrl.u32 %v1028, 7
      %v1030 = vsub.s32 0, %v1029
      %v1031 = vrot.slane %v1026, %v1030
      %v1032 = vlaneseq
      %v1033 = vshrl.u32 %v1032, 7
      %v1034 = vsub.s32 1, %v1033
      %v1035 = vrot.slane %v1026, %v1034
      %v1038 = vmul.f32 %v1023, %v1031
      %v1039 = vmul.f32 %v1024, %v1035
      %v1040 = vpack.c.bf16 %v1038, %v1038
      %v1041 = vpack.c.bf16 %v1039, %v1039
      %s1042 = scalar_lea.vmem %s3, 32
      %v1043 = vld [vmem:[%s1042] sm:$0xf]
      %v1045 = vsel %vm455, %v1043, 0
      %v1048 = vsel %vm459, %v1040, 0
      %v1051 = vsel %vm459, %v1041, 0
      %1053 = vmatprep.subr.bf16.mxu0 0
      %1054 = vmatpush1.bf16.msra.mxu0 0
      %1055 = vmatprep.subr.bf16.mxu0 0
      %1056 = vmatpush1.bf16.msra.mxu0 0
      %1057 = vmatprep.subr.bf16.mxu0 0
      %1058 = vmatpush1.bf16.msra.mxu0 0
      %1059 = vmatprep.subr.bf16.mxu0 0
      %1060 = vmatpush1.bf16.msra.mxu0 0
      %1061 = vmatprep.subr.bf16.mxu0 0
      %1062 = vmatpush1.bf16.msra.mxu0 0
      %1063 = vmatprep.subr.bf16.mxu0 0
      %1064 = vmatpush1.bf16.msra.mxu0 0
      %1065 = vmatprep.subr.bf16.mxu0 0
      %1066 = vmatpush1.bf16.msra.mxu0 0
      %1067 = vmatprep.subr.bf16.mxu0 %v1051
      %1068 = vmatpush1.bf16.msra.mxu0 %v1048
      %1069 = vmatprep.subr.bf16.mxu0 0
      %1070 = vmatpush2.bf16.msra.mxu0 0
      %1071 = vmatprep.subr.bf16.mxu0 0
      %1072 = vmatpush2.bf16.msra.mxu0 0
      %1073 = vmatprep.subr.bf16.mxu0 0
      %1074 = vmatpush2.bf16.msra.mxu0 0
      %1075 = vmatprep.subr.bf16.mxu0 0
      %1076 = vmatpush2.bf16.msra.mxu0 0
      %1077 = vmatprep.subr.bf16.mxu0 0
      %1078 = vmatpush2.bf16.msra.mxu0 0
      %1079 = vmatprep.subr.bf16.mxu0 0
      %1080 = vmatpush2.bf16.msra.mxu0 0
      %1081 = vmatprep.subr.bf16.mxu0 0
      %1082 = vmatpush2.bf16.msra.mxu0 0
      %1083 = vmatprep.subr.bf16.mxu0 0
      %1084 = vmatpush2.bf16.msra.mxu0 0
      %1085 = vmatprep.mubr.bf16.mxu0 0
      %1086 = vmatmul.mubr.bf16.gmra.mxu0 %v1045
      %v1087 = vpop.f32.mrf.mxu0
      %v1088 = vadd.f32 0.0, %v1087
      %v1089 = vpop.f32.mrf.mxu0
      %v1090 = vadd.f32 0.0, %v1089
      %v1091 = vpop.f32.mrf.mxu0
      %v1092 = vpop.f32.mrf.mxu0
      %1093 = vdwg.mxu0
      %v1094 = vadd.f32 %v1016, %v1088
      %v1095 = vadd.f32 %v1017, %v1090
      %v1096 = vld [vmem:[%s4] sm:$0xff]
      %1098 = vset.pattern.permute.xlu0 0
      %1099 = vperm.xlu0 %1098, %v1096
      %v1100 = vpop.permute.xlu0 %1099
      %v1102 = vadd.f32 %v1094, %v1100
      %v1103 = vadd.f32 %v1095, %v1100
      %vm1104 = vcmp.gt.f32.partialorder %v1102, 0.0
      %vm1105 = vcmp.gt.f32.partialorder %v1103, 0.0
      %v1106 = vmul.f32 %v1102, 0.01
      %v1107 = vmul.f32 %v1103, 0.01
      %v1108 = vsel %vm1104, %v1102, %v1106
      %v1109 = vsel %vm1105, %v1103, %v1107
      %1110 = vst [vmem:[%s324] sm:$0xff] %v1108
      %1111 = vst [vmem:[%s324 + $0x8] sm:$0xff] %v1109
      %v1112 = vadd.f32 %v1108, %v1109
      %1113 = vadd.xlane.f32.xlu0 %v1112
      %v1114 = vpop.xlane.xlu0 %1113
      %v1115 = vmul.f32 %v1108, %v1108
      %v1116 = vmul.f32 %v1109, %v1109
      %v1117 = vadd.f32 %v1115, %v1116
      %1118 = vadd.xlane.f32.xlu0 %v1117
      %v1119 = vpop.xlane.xlu0 %1118
      %vm1120 = vcmask 7168
      %v1121 = vsel %vm1120, %v1114, %v1119
      %vm1122 = vcmask 15360
      %1123 = vst.msk [vmem:[%s328] sm:$0xff] %vm1122, %v1121
      %p1124 = scmp.lt.s32.totalorder %s20, 1
      %s1125 = scalar_select %p1124, %s20, 1
      %s1126 = smul.addr %s1125, 2
      %s1127 = smul.addr %s1126, 8
      %s1128 = scalar_lea.vmem %s6, %s1127
      %p1129 = scmp.lt.s32.totalorder %s20, 1
      %s1130 = scalar_select %p1129, %s20, 1
      %s1131 = smul.addr %s1130, 2
      %s1132 = smul.addr %s1131, 8
      %s1133 = scalar_lea.vmem %s7, %s1132
      %p1134 = scmp.lt.s32.totalorder %s20, 1
      %s1135 = scalar_select %p1134, %s20, 1
      %s1136 = smul.addr %s1135, 8
      %s1137 = scalar_lea.vmem %s8, %s1136
      // Predicated region
      $region45: #{res_context_block.3} parent=43 // pred_check
        %p1138 = pneg %p169
      $region46: #{res_context_block.3} parent=43 // pred_check_branch
        %1140 = sbr.rel (%p1138) target = $region48
      $region47: #{res_context_block.3} parent=43 // pred_region
        _
      $region48: #{res_context_block.3} parent=43 // pred_fallthru
        _
      // Predicated region
      $region49: #{res_context_block.3} parent=43 // pred_check
        %p1141 = pneg %p195
      $region50: #{res_context_block.3} parent=43 // pred_check_branch
        %1143 = sbr.rel (%p1141) target = $region52
      $region51: #{res_context_block.3} parent=43 // pred_region
        _
      $region52: #{res_context_block.3} parent=43 // pred_fallthru
        _
      // Predicated region
      $region53: #{res_context_block.3} parent=43 // pred_check
        %p1144 = pneg %p221
      $region54: #{res_context_block.3} parent=43 // pred_check_branch
        %1146 = sbr.rel (%p1144) target = $region56
      $region55: #{res_context_block.3} parent=43 // pred_region
        _
      $region56: #{res_context_block.3} parent=43 // pred_fallthru
        _
    $region44: #{res_context_block.3} parent=5 // pred_fallthru
      _
    %p1147 = scmp.le.s32.totalorder 2, %s15
    // Predicated region
    $region57: #{res_context_block.3} parent=5 // pred_check
      %p1148 = pneg %p1147
    $region58: #{res_context_block.3} parent=5 // pred_check_branch
      %1150 = sbr.rel (%p1148) target = $region60
    $region59: #{res_context_block.3} parent=5 // pred_region
      %s1151 = ssub.s32 %s15, 2
      // Predicated region
      $region61: #{res_context_block.3} parent=59 // pred_check
        %p1152 = pneg %p175
      $region62: #{res_context_block.3} parent=59 // pred_check_branch
        %1154 = sbr.rel (%p1152) target = $region64
      $region63: #{res_context_block.3} parent=59 // pred_region
        %p1155 = scmp.lt.s32.totalorder %s21, 1
        %s1156 = scalar_select %p1155, %s21, 1
        %s1157 = smul.addr %s1156, 2
        %s1158 = smul.addr %s1157, 8
        %s1159 = scalar_lea.vmem %s6, %s1158
      $region64: #{res_context_block.3} parent=59 // pred_fallthru
        _
      // Predicated region
      $region65: #{res_context_block.3} parent=59 // pred_check
        %p1160 = pneg %p201
      $region66: #{res_context_block.3} parent=59 // pred_check_branch
        %1162 = sbr.rel (%p1160) target = $region68
      $region67: #{res_context_block.3} parent=59 // pred_region
        %p1163 = scmp.lt.s32.totalorder %s21, 1
        %s1164 = scalar_select %p1163, %s21, 1
        %s1165 = smul.addr %s1164, 2
        %s1166 = smul.addr %s1165, 8
        %s1167 = scalar_lea.vmem %s7, %s1166
      $region68: #{res_context_block.3} parent=59 // pred_fallthru
        _
      // Predicated region
      $region69: #{res_context_block.3} parent=59 // pred_check
        %p1168 = pneg %p227
      $region70: #{res_context_block.3} parent=59 // pred_check_branch
        %1170 = sbr.rel (%p1168) target = $region72
      $region71: #{res_context_block.3} parent=59 // pred_region
        %p1171 = scmp.lt.s32.totalorder %s21, 1
        %s1172 = scalar_select %p1171, %s21, 1
        %s1173 = smul.addr %s1172, 8
        %s1174 = scalar_lea.vmem %s8, %s1173
      $region72: #{res_context_block.3} parent=59 // pred_fallthru
        _
    $region60: #{res_context_block.3} parent=5 // pred_fallthru
      _
  $region6: #{res_context_block.3} parent=0 // loop_footer
    %s19 = sadd.s32 1, %s15
  $region7: #{res_context_block.3} parent=0 // loop_footer_branch
    %14 = sbr.rel target = $region3
  $region8: #{res_context_block.3} parent=0 // loop_exit
    _

</llo_original>
